<compile_context>
chip_gen: v7x
topology: tpu7x:2x2x1
jax: 0.10.0
libtpu: 0.0.40
codegen_flags: <defaults>
</compile_context>

<pallas_src>
import functools

import jax
import jax.numpy as jnp
from jax import lax
from jax.experimental import pallas as pl
from jax.experimental.pallas import tpu as pltpu

_EPS = 1e-3
_PREC = lax.Precision.HIGHEST            # reference only
_VMEM_LIMIT = 48 * 1024 * 1024           # <= v7x's 64 MiB physical; safe on v5e/v6e


# ----------------------------------- kernels -----------------------------------
def _stage1_kernel(xc_ref, mid_ref, wd_ref, bd_ref, s2_ref, t1_ref, st_ref):
    """Parity-compacted transposed conv (scalar1 folded into weights/bias)
    + mid*scalar2 (scalar2 from SMEM); emits per-tile BN0 partial stats."""
    t1 = jnp.dot(xc_ref[...], wd_ref[...], preferred_element_type=jnp.float32)
    t1 = t1 + bd_ref[...] + mid_ref[...] * s2_ref[0]
    t1_ref[...] = t1.astype(t1_ref.dtype)
    st_ref[0] = jnp.concatenate(
        [jnp.sum(t1, axis=0, keepdims=True),
         jnp.sum(t1 * t1, axis=0, keepdims=True)], axis=0)


def _stage2_kernel(t1_ref, hu_ref, hd_ref, sc_ref, sh_ref,
                   wau_ref, wac_ref, wad_ref, ba_ref,
                   wbl_ref, wbc_ref, wbr_ref, bb_ref,
                   t2_ref, st_ref, *, Ho, C):
    """BN0+ReLU -> conv1a(3,1)+ReLU -> conv1b(1,3) on one row tile (+1-row halos).

    Neighbour taps come from XLU rolls (sublane for H, lane for W) with edge
    masks; each 3-tap conv is three accumulating MXU dots (no wide concat)."""
    TR, WC = t1_ref.shape
    f32, bf16 = jnp.float32, jnp.bfloat16
    sc, sh = sc_ref[...], sh_ref[...]

    # BN0 (global batch stats, precomputed scale/shift) + ReLU on tile + halos.
    y = jnp.maximum(t1_ref[...].astype(f32) * sc + sh, 0.0)
    hu = jnp.maximum(hu_ref[7:8, :].astype(f32) * sc + sh, 0.0)   # row above tile
    hd = jnp.maximum(hd_ref[0:1, :].astype(f32) * sc + sh, 0.0)   # row below tile

    # conv1a (3,1): up/down taps = 1-row sublane rolls, halo rows patched into
    # the wrapped slots, image-boundary rows (h==0 / h==Ho-1) zeroed.
    rit = lax.broadcasted_iota(jnp.int32, (TR, 1), 0)
    h = (pl.program_id(0) * TR + rit) % Ho
    up = pltpu.roll(y, 1, 0)
    up = jnp.where(rit == 0, hu, up)
    up = jnp.where(h == 0, 0.0, up)
    dn = pltpu.roll(y, TR - 1, 0)
    dn = jnp.where(rit == TR - 1, hd, dn)
    dn = jnp.where(h == Ho - 1, 0.0, dn)

    z = jnp.dot(y.astype(bf16), wac_ref[...], preferred_element_type=f32)
    z = z + jnp.dot(up.astype(bf16), wau_ref[...], preferred_element_type=f32)
    z = z + jnp.dot(dn.astype(bf16), wad_ref[...], preferred_element_type=f32)
    z = jnp.maximum(z + ba_ref[...], 0.0)

    # conv1b (1,3): left/right taps = +/-C lane rolls, zeroed at w==0 / w==Wo-1.
    col = lax.broadcasted_iota(jnp.int32, (1, WC), 1)
    lf = jnp.where(col < C, 0.0, pltpu.roll(z, C, 1))
    rt = jnp.where(col >= WC - C, 0.0, pltpu.roll(z, WC - C, 1))

    q = jnp.dot(z.astype(bf16), wbc_ref[...], preferred_element_type=f32)
    q = q + jnp.dot(lf.astype(bf16), wbl_ref[...], preferred_element_type=f32)
    q = q + jnp.dot(rt.astype(bf16), wbr_ref[...], preferred_element_type=f32)
    q = q + bb_ref[...]

    t2_ref[...] = q.astype(t2_ref.dtype)
    st_ref[0] = jnp.concatenate(
        [jnp.sum(q, axis=0, keepdims=True),
         jnp.sum(q * q, axis=0, keepdims=True)], axis=0)


# ----------------------------------- wrapper -----------------------------------
def _pick_row_tile(nrows, cap):
    """Largest multiple of 8 dividing nrows, capped; keep >=2 tiles when possible
    so a 2-TensorCore chip (v7x) gets work on both cores."""
    cap = min(cap, nrows)
    if nrows >= 16:
        cap = min(cap, max(8, ((nrows // 2) // 8) * 8))
    t = max(8, (cap // 8) * 8)
    while nrows % t:
        t -= 8
    return t


def _tile_lanes(v, Wo):
    """(C,) per-channel vector -> (1, Wo*C) row matching the w*C+c column layout."""
    return jnp.tile(v.astype(jnp.float32), (Wo,)).reshape(1, -1)


def _bn_scale_shift(stats, gamma, beta, Wo, C, count):
    """Finalize BatchNorm from accumulated per-(w,c) sum / sum-sq (biased variance)."""
    tot = jnp.sum(stats[:, 0, :], axis=0).reshape(Wo, C).sum(axis=0)
    tot2 = jnp.sum(stats[:, 1, :], axis=0).reshape(Wo, C).sum(axis=0)
    mean = tot / count
    var = jnp.maximum(tot2 / count - mean * mean, 0.0)
    scale = gamma * lax.rsqrt(var + _EPS)
    shift = beta - mean * scale
    return _tile_lanes(scale, Wo), _tile_lanes(shift, Wo)


def upsampler_forward(x_nchw, mid_nchw, p, *, row_tile=256):
    N, Cin, H, W = x_nchw.shape
    C = p["deconv_w"].shape[1]
    Ho, Wo = 2 * H, 2 * W
    NR, WC = N * Ho, Wo * C
    K1 = 3 * W * Cin
    assert NR % 8 == 0, "kernel assumes N*Ho to be a multiple of 8"
    TR = _pick_row_tile(NR, row_tile)
    T = NR // TR
    f32, bf16 = jnp.float32, jnp.bfloat16

    # ---- glue (pure data movement): NCHW -> lane-dense (N*Ho, Wo*C) slabs ----
    mid = jnp.transpose(mid_nchw, (0, 2, 3, 1)).reshape(NR, WC).astype(f32)

    # Parity-compacted deconv input: per output row ho carry only the (<=2) live
    # input rows in ky slots 0/1/2 (even ho -> slot 1; odd ho -> slots 0 and 2).
    # Replaces the former zero-dilated 9-tap im2col (Wo*9*Cin wide, 75% zeros).
    x = jnp.transpose(x_nchw, (0, 2, 3, 1))                         # (N,H,W,Cin)
    zrow = jnp.zeros_like(x)
    x_next = jnp.concatenate([x[:, 1:], jnp.zeros_like(x[:, :1])], axis=1)
    even_rows = jnp.stack([zrow, x, zrow], axis=2)                  # ho = 2h
    odd_rows = jnp.stack([x, zrow, x_next], axis=2)                 # ho = 2h+1
    xcols = jnp.stack([even_rows, odd_rows], axis=2).reshape(NR, K1).astype(bf16)

    # ---- deconv weight: parity slots + W-direction tap offsets folded in ----
    s1 = p["scalar1"][0]
    wflip = jnp.transpose(p["deconv_w"][:, :, ::-1, ::-1], (2, 3, 0, 1))  # (3,3,Cin,C)
    wi = jnp.arange(W)[:, None]
    wo = jnp.arange(Wo)[None, :]
    kx = 2 * wi + 1 - wo                                            # (W, Wo)
    valid = (kx >= 0) & (kx <= 2)
    wd = jnp.where(valid[None, :, :, None, None],
                   wflip[:, jnp.clip(kx, 0, 2)], 0.0)               # (3,W,Wo,Cin,C)
    wd_big = (jnp.transpose(wd, (0, 1, 3, 2, 4)).reshape(K1, WC) * s1).astype(bf16)
    bd_vec = _tile_lanes(p["deconv_b"] * s1, Wo)                    # scalar1 folded in
    s2_arr = p["scalar2"].astype(f32)                               # (1,) SMEM scalar

    # ---- conv weights: per-tap block-diagonal kron(I_Wo, w_k) blocks ----
    eye = jnp.eye(Wo, dtype=f32)
    w1a = jnp.transpose(p["conv1a_w"][:, :, :, 0], (2, 1, 0))       # (3,C,C) up/ctr/down
    w1b = jnp.transpose(p["conv1b_w"][:, :, 0, :], (2, 1, 0))       # (3,C,C) left/ctr/right
    kron = lambda m: jnp.kron(eye, m).astype(bf16)
    wau, wac, wad = kron(w1a[0]), kron(w1a[1]), kron(w1a[2])
    wbl, wbc, wbr = kron(w1b[0]), kron(w1b[1]), kron(w1b[2])
    b1a_vec = _tile_lanes(p["conv1a_b"], Wo)
    b1b_vec = _tile_lanes(p["conv1b_b"], Wo)

    cparams = pltpu.CompilerParams(
        dimension_semantics=("parallel",), vmem_limit_bytes=_VMEM_LIMIT)
    full = lambda shape: pl.BlockSpec(shape, lambda i: (0,) * len(shape))
    rowblk = pl.BlockSpec((TR, WC), lambda i: (i, 0))
    statblk = pl.BlockSpec((1, 2, WC), lambda i: (i, 0, 0))
    smem_scalar = pl.BlockSpec(memory_space=pltpu.MemorySpace.SMEM)

    # ---------------- stage 1: deconv + combine, BN0 partial stats ----------------
    t1, st1 = pl.pallas_call(
        _stage1_kernel,
        grid=(T,),
        in_specs=[pl.BlockSpec((TR, K1), lambda i: (i, 0)),
                  rowblk,
                  full((K1, WC)),
                  full((1, WC)),
                  smem_scalar],
        out_specs=(rowblk, statblk),
        out_shape=(jax.ShapeDtypeStruct((NR, WC), bf16),
                   jax.ShapeDtypeStruct((T, 2, WC), f32)),
        compiler_params=cparams,
    )(xcols, mid, wd_big, bd_vec, s2_arr)

    bn0_sc, bn0_sh = _bn_scale_shift(st1, p["bn_w"], p["bn_b"], Wo, C, N * Ho * Wo)

    # ---------- stage 2: BN0+ReLU, conv1a+ReLU, conv1b, BN1 partial stats ----------
    trb, nb8 = TR // 8, NR // 8
    halo_up = pl.BlockSpec((8, WC), lambda i: (jnp.maximum(i * trb - 1, 0), 0))
    halo_dn = pl.BlockSpec((8, WC), lambda i: (jnp.minimum((i + 1) * trb, nb8 - 1), 0))
    wblk = full((WC, WC))
    t2, st2 = pl.pallas_call(
        functools.partial(_stage2_kernel, Ho=Ho, C=C),
        grid=(T,),
        in_specs=[rowblk, halo_up, halo_dn,
                  full((1, WC)), full((1, WC)),
                  wblk, wblk, wblk, full((1, WC)),
                  wblk, wblk, wblk, full((1, WC))],
        out_specs=(rowblk, statblk),
        out_shape=(jax.ShapeDtypeStruct((NR, WC), bf16),
                   jax.ShapeDtypeStruct((T, 2, WC), f32)),
        compiler_params=cparams,
    )(t1, t1, t1, bn0_sc, bn0_sh, wau, wac, wad, b1a_vec, wbl, wbc, wbr, b1b_vec)

    bn1_sc, bn1_sh = _bn_scale_shift(st2, p["bn1_w"], p["bn1_b"], Wo, C, N * Ho * Wo)

    # ---- epilogue: BN1 + ReLU in plain jnp (XLA fuses it with the transpose) ----
    out = jnp.maximum(t2.astype(f32) * bn1_sc + bn1_sh, 0.0)
    return jnp.transpose(out.reshape(N, Ho, Wo, C), (0, 3, 1, 2))


# ------------------------- pure-JAX reference (for checking) -------------------------
def reference_forward(x_nchw, mid_nchw, p):
    dn = ("NHWC", "HWIO", "NHWC")
    x = jnp.transpose(x_nchw, (0, 2, 3, 1))
    mid = jnp.transpose(mid_nchw, (0, 2, 3, 1))

    wflip = jnp.transpose(p["deconv_w"][:, :, ::-1, ::-1], (2, 3, 0, 1))
    y = lax.conv_general_dilated(x, wflip, (1, 1), ((1, 2), (1, 2)),
                                 lhs_dilation=(2, 2), dimension_numbers=dn,
                                 precision=_PREC) + p["deconv_b"]
    y = y * p["scalar1"][0] + mid * p["scalar2"][0]

    def bn(t, g, b):
        m = jnp.mean(t, axis=(0, 1, 2), keepdims=True)
        v = jnp.mean((t - m) ** 2, axis=(0, 1, 2), keepdims=True)
        return (t - m) * lax.rsqrt(v + _EPS) * g + b

    y = jax.nn.relu(bn(y, p["bn_w"], p["bn_b"]))
    w1a = jnp.transpose(p["conv1a_w"], (2, 3, 1, 0))
    y = lax.conv_general_dilated(y, w1a, (1, 1), ((1, 1), (0, 0)),
                                 dimension_numbers=dn, precision=_PREC) + p["conv1a_b"]
    y = jax.nn.relu(y)
    w1b = jnp.transpose(p["conv1b_w"], (2, 3, 1, 0))
    y = lax.conv_general_dilated(y, w1b, (1, 1), ((0, 0), (1, 1)),
                                 dimension_numbers=dn, precision=_PREC) + p["conv1b_b"]
    y = jax.nn.relu(bn(y, p["bn1_w"], p["bn1_b"]))
    return jnp.transpose(y, (0, 3, 1, 2))


def init_params(key, cin, cout):
    ks = jax.random.split(key, 12)
    u = lambda k, shape, s: jax.random.uniform(k, shape, jnp.float32, -s, s)
    return dict(
        deconv_w=u(ks[0], (cin, cout, 3, 3), 0.3),
        deconv_b=u(ks[1], (cout,), 0.3),
        scalar1=jax.random.uniform(ks[2], (1,), jnp.float32),   # torch.rand(1)
        scalar2=jax.random.uniform(ks[3], (1,), jnp.float32),
        bn_w=1.0 + u(ks[4], (cout,), 0.2),
        bn_b=u(ks[5], (cout,), 0.2),
        conv1a_w=u(ks[6], (cout, cout, 3, 1), 0.3),
        conv1a_b=u(ks[7], (cout,), 0.3),
        conv1b_w=u(ks[8], (cout, cout, 1, 3), 0.3),
        conv1b_b=u(ks[9], (cout,), 0.3),
        bn1_w=1.0 + u(ks[10], (cout,), 0.2),
        bn1_b=u(ks[11], (cout,), 0.2),
    )


if __name__ == "__main__":
    key = jax.random.PRNGKey(0)
    k_x, k_mid, k_p = jax.random.split(key, 3)
    N, Cin, Cout, H, W = 2, 4, 8, 16, 16

    x = jax.random.normal(k_x, (N, Cin, H, W), jnp.float32)               # NCHW
    mid = jax.random.normal(k_mid, (N, Cout, 2 * H, 2 * W), jnp.float32)  # NCHW
    params = init_params(k_p, Cin, Cout)

    # row_tile=16 -> 4 row tiles: exercises the grid, the halo blocks and the
    # accumulate-then-finalize BatchNorm path.
    fwd = jax.jit(functools.partial(upsampler_forward, row_tile=16))
    out = jax.block_until_ready(fwd(x, mid, params))

    ref = reference_forward(x, mid, params)
    assert out.shape == (N, Cout, 2 * H, 2 * W)
    # bf16 MXU operands + bf16 inter-stage slabs (per perf review) vs an
    # f32-HIGHEST reference give few-percent-level differences; layout/mask/
    # weight bugs would be O(1).
    err = float(jnp.max(jnp.abs(out - ref)))
    assert bool(jnp.allclose(out, ref, atol=7.5e-2, rtol=7.5e-2)), err
    print("KERNEL_OK")
</pallas_src>

<mosaic_0001>
module attributes {stable_mosaic.version = 11 : i64} {
  func.func @_stage1_kernel(%arg0: i32, %arg1: memref<16x192xbf16, #tpu.memory_space<vmem>>, %arg2: memref<16x256xf32, #tpu.memory_space<vmem>>, %arg3: memref<192x256xbf16, #tpu.memory_space<vmem>>, %arg4: memref<1x256xf32, #tpu.memory_space<vmem>>, %arg5: memref<1xf32, #tpu.memory_space<smem>>, %arg6: memref<16x256xbf16, #tpu.memory_space<vmem>>, %arg7: memref<1x2x256xf32, #tpu.memory_space<vmem>>) attributes {dimension_semantics = [#tpu.dimension_semantics<parallel>], iteration_bounds = array<i64: 4>, scalar_prefetch = 0 : i64, scratch_operands = 0 : i64, tpu.core_type = #tpu.core_type<tc>, window_params = [{transform_indices = @transform_0, window_bounds = array<i64: 16, 192>}, {transform_indices = @transform_1, window_bounds = array<i64: 16, 256>}, {pipeline_mode = #tpu.pipeline_mode<synchronous>, transform_indices = @transform_2, window_bounds = array<i64: 192, 256>}, {pipeline_mode = #tpu.pipeline_mode<synchronous>, transform_indices = @transform_3, window_bounds = array<i64: 1, 256>}, {transform_indices = @transform_4, window_bounds = array<i64: 1>}, {transform_indices = @transform_5, window_bounds = array<i64: 16, 256>}, {transform_indices = @transform_6, window_bounds = array<i64: 1, 2, 256>}]} {
    %c0 = arith.constant 0 : index
    %c0_0 = arith.constant 0 : index
    %0 = vector.load %arg1[%c0, %c0_0] : memref<16x192xbf16, #tpu.memory_space<vmem>>, vector<16x192xbf16>
    %c0_1 = arith.constant 0 : index
    %c0_2 = arith.constant 0 : index
    %1 = vector.load %arg3[%c0_1, %c0_2] : memref<192x256xbf16, #tpu.memory_space<vmem>>, vector<192x256xbf16>
    %cst = arith.constant dense<0.000000e+00> : vector<16x256xf32>
    %2 = tpu.matmul %0, %1, %cst {dimension_numbers = #tpu.dot_dimension_numbers<[1], [0], [0], [1], [0, 0, 1, 1], [], []>} : vector<16x192xbf16>, vector<192x256xbf16>, vector<16x256xf32> -> vector<16x256xf32>
    %c0_3 = arith.constant 0 : index
    %c0_4 = arith.constant 0 : index
    %3 = vector.load %arg4[%c0_3, %c0_4] : memref<1x256xf32, #tpu.memory_space<vmem>>, vector<1x256xf32>
    %4 = vector.broadcast %3 : vector<1x256xf32> to vector<16x256xf32>
    %5 = arith.addf %2, %4 : vector<16x256xf32>
    %c0_5 = arith.constant 0 : index
    %c0_6 = arith.constant 0 : index
    %6 = vector.load %arg2[%c0_5, %c0_6] : memref<16x256xf32, #tpu.memory_space<vmem>>, vector<16x256xf32>
    %c0_7 = arith.constant 0 : index
    %7 = memref.load %arg5[%c0_7] : memref<1xf32, #tpu.memory_space<smem>>
    %8 = vector.broadcast %7 : f32 to vector<16x256xf32>
    %9 = arith.mulf %6, %8 : vector<16x256xf32>
    %10 = arith.addf %5, %9 : vector<16x256xf32>
    %11 = arith.truncf %10 : vector<16x256xf32> to vector<16x256xbf16>
    %c0_8 = arith.constant 0 : index
    %c0_9 = arith.constant 0 : index
    %12 = vector.load %arg6[%c0_8, %c0_9] : memref<16x256xbf16, #tpu.memory_space<vmem>>, vector<16x256xbf16>
    tpu.vector_store %arg6[%c0_8, %c0_9], %11 {strides = array<i32>} : memref<16x256xbf16, #tpu.memory_space<vmem>>, vector<16x256xbf16>,
    %cst_10 = arith.constant dense<0.000000e+00> : vector<256xf32>
    %13 = vector.multi_reduction <add>, %10, %cst_10 [0] : vector<16x256xf32> to vector<256xf32>
    %14 = vector.shape_cast %13 : vector<256xf32> to vector<1x256xf32>
    %15 = arith.mulf %10, %10 : vector<16x256xf32>
    %cst_11 = arith.constant dense<0.000000e+00> : vector<256xf32>
    %16 = vector.multi_reduction <add>, %15, %cst_11 [0] : vector<16x256xf32> to vector<256xf32>
    %17 = vector.shape_cast %16 : vector<256xf32> to vector<1x256xf32>
    %18 = tpu.concatenate %14, %17 in 0 : vector<1x256xf32>, vector<1x256xf32> -> vector<2x256xf32>
    %c0_12 = arith.constant 0 : index
    %c0_13 = arith.constant 0 : index
    %c0_14 = arith.constant 0 : index
    %19 = vector.load %arg7[%c0_12, %c0_13, %c0_14] : memref<1x2x256xf32, #tpu.memory_space<vmem>>, vector<1x2x256xf32>
    %20 = vector.shape_cast %19 : vector<1x2x256xf32> to vector<2x256xf32>
    %21 = vector.shape_cast %18 : vector<2x256xf32> to vector<1x2x256xf32>
    tpu.vector_store %arg7[%c0_12, %c0_13, %c0_14], %21 {strides = array<i32>} : memref<1x2x256xf32, #tpu.memory_space<vmem>>, vector<1x2x256xf32>,
    return
  }
  func.func @transform_0(%arg0: i32) -> (i32, i32) {
    %c0_i32 = arith.constant 0 : i32
    %c0_i32_0 = arith.constant 0 : i32
    return %arg0, %c0_i32 : i32, i32
  }
  func.func @transform_1(%arg0: i32) -> (i32, i32) {
    %c0_i32 = arith.constant 0 : i32
    %c0_i32_0 = arith.constant 0 : i32
    return %arg0, %c0_i32 : i32, i32
  }
  func.func @transform_2(%arg0: i32) -> (i32, i32) {
    %c0_i32 = arith.constant 0 : i32
    %c0_i32_0 = arith.constant 0 : i32
    %c0_i32_1 = arith.constant 0 : i32
    return %c0_i32, %c0_i32_0 : i32, i32
  }
  func.func @transform_3(%arg0: i32) -> (i32, i32) {
    %c0_i32 = arith.constant 0 : i32
    %c0_i32_0 = arith.constant 0 : i32
    %c0_i32_1 = arith.constant 0 : i32
    return %c0_i32, %c0_i32_0 : i32, i32
  }
  func.func @transform_4(%arg0: i32) -> i32 {
    %c0_i32 = arith.constant 0 : i32
    %c0_i32_0 = arith.constant 0 : i32
    return %c0_i32 : i32
  }
  func.func @transform_5(%arg0: i32) -> (i32, i32) {
    %c0_i32 = arith.constant 0 : i32
    %c0_i32_0 = arith.constant 0 : i32
    return %arg0, %c0_i32 : i32, i32
  }
  func.func @transform_6(%arg0: i32) -> (i32, i32, i32) {
    %c0_i32 = arith.constant 0 : i32
    %c0_i32_0 = arith.constant 0 : i32
    %c0_i32_1 = arith.constant 0 : i32
    return %arg0, %c0_i32, %c0_i32_0 : i32, i32, i32
  }
}

module attributes {stable_mosaic.version = 11 : i64} {
  func.func @_stage2_kernel(%arg0: i32, %arg1: memref<16x256xbf16, #tpu.memory_space<vmem>>, %arg2: memref<8x256xbf16, #tpu.memory_space<vmem>>, %arg3: memref<8x256xbf16, #tpu.memory_space<vmem>>, %arg4: memref<1x256xf32, #tpu.memory_space<vmem>>, %arg5: memref<1x256xf32, #tpu.memory_space<vmem>>, %arg6: memref<256x256xbf16, #tpu.memory_space<vmem>>, %arg7: memref<256x256xbf16, #tpu.memory_space<vmem>>, %arg8: memref<256x256xbf16, #tpu.memory_space<vmem>>, %arg9: memref<1x256xf32, #tpu.memory_space<vmem>>, %arg10: memref<256x256xbf16, #tpu.memory_space<vmem>>, %arg11: memref<256x256xbf16, #tpu.memory_space<vmem>>, %arg12: memref<256x256xbf16, #tpu.memory_space<vmem>>, %arg13: memref<1x256xf32, #tpu.memory_space<vmem>>, %arg14: memref<16x256xbf16, #tpu.memory_space<vmem>>, %arg15: memref<1x2x256xf32, #tpu.memory_space<vmem>>) attributes {dimension_semantics = [#tpu.dimension_semantics<parallel>], iteration_bounds = array<i64: 4>, scalar_prefetch = 0 : i64, scratch_operands = 0 : i64, tpu.core_type = #tpu.core_type<tc>, window_params = [{transform_indices = @transform_0, window_bounds = array<i64: 16, 256>}, {transform_indices = @transform_1, window_bounds = array<i64: 8, 256>}, {transform_indices = @transform_2, window_bounds = array<i64: 8, 256>}, {pipeline_mode = #tpu.pipeline_mode<synchronous>, transform_indices = @transform_3, window_bounds = array<i64: 1, 256>}, {pipeline_mode = #tpu.pipeline_mode<synchronous>, transform_indices = @transform_4, window_bounds = array<i64: 1, 256>}, {pipeline_mode = #tpu.pipeline_mode<synchronous>, transform_indices = @transform_5, window_bounds = array<i64: 256, 256>}, {pipeline_mode = #tpu.pipeline_mode<synchronous>, transform_indices = @transform_6, window_bounds = array<i64: 256, 256>}, {pipeline_mode = #tpu.pipeline_mode<synchronous>, transform_indices = @transform_7, window_bounds = array<i64: 256, 256>}, {pipeline_mode = #tpu.pipeline_mode<synchronous>, transform_indices = @transform_8, window_bounds = array<i64: 1, 256>}, {pipeline_mode = #tpu.pipeline_mode<synchronous>, transform_indices = @transform_9, window_bounds = array<i64: 256, 256>}, {pipeline_mode = #tpu.pipeline_mode<synchronous>, transform_indices = @transform_10, window_bounds = array<i64: 256, 256>}, {pipeline_mode = #tpu.pipeline_mode<synchronous>, transform_indices = @transform_11, window_bounds = array<i64: 256, 256>}, {pipeline_mode = #tpu.pipeline_mode<synchronous>, transform_indices = @transform_12, window_bounds = array<i64: 1, 256>}, {transform_indices = @transform_13, window_bounds = array<i64: 16, 256>}, {transform_indices = @transform_14, window_bounds = array<i64: 1, 2, 256>}]} {
    %c0 = arith.constant 0 : index
    %c0_0 = arith.constant 0 : index
    %0 = vector.load %arg4[%c0, %c0_0] : memref<1x256xf32, #tpu.memory_space<vmem>>, vector<1x256xf32>
    %c0_1 = arith.constant 0 : index
    %c0_2 = arith.constant 0 : index
    %1 = vector.load %arg5[%c0_1, %c0_2] : memref<1x256xf32, #tpu.memory_space<vmem>>, vector<1x256xf32>
    %c0_3 = arith.constant 0 : index
    %c0_4 = arith.constant 0 : index
    %2 = vector.load %arg1[%c0_3, %c0_4] : memref<16x256xbf16, #tpu.memory_space<vmem>>, vector<16x256xbf16>
    %3 = arith.extf %2 : vector<16x256xbf16> to vector<16x256xf32>
    %4 = vector.broadcast %0 : vector<1x256xf32> to vector<16x256xf32>
    %5 = arith.mulf %3, %4 : vector<16x256xf32>
    %6 = vector.broadcast %1 : vector<1x256xf32> to vector<16x256xf32>
    %7 = arith.addf %5, %6 : vector<16x256xf32>
    %cst = arith.constant 0.000000e+00 : f32
    %8 = vector.broadcast %cst : f32 to vector<16x256xf32>
    %9 = arith.maximumf %7, %8 : vector<16x256xf32>
    %c7 = arith.constant 7 : index
    %c0_5 = arith.constant 0 : index
    %10 = vector.load %arg2[%c7, %c0_5] : memref<8x256xbf16, #tpu.memory_space<vmem>>, vector<1x256xbf16>
    %11 = arith.extf %10 : vector<1x256xbf16> to vector<1x256xf32>
    %12 = arith.mulf %11, %0 : vector<1x256xf32>
    %13 = arith.addf %12, %1 : vector<1x256xf32>
    %cst_6 = arith.constant 0.000000e+00 : f32
    %14 = vector.broadcast %cst_6 : f32 to vector<1x256xf32>
    %15 = arith.maximumf %13, %14 : vector<1x256xf32>
    %c0_7 = arith.constant 0 : index
    %c0_8 = arith.constant 0 : index
    %16 = vector.load %arg3[%c0_7, %c0_8] : memref<8x256xbf16, #tpu.memory_space<vmem>>, vector<1x256xbf16>
    %17 = arith.extf %16 : vector<1x256xbf16> to vector<1x256xf32>
    %18 = arith.mulf %17, %0 : vector<1x256xf32>
    %19 = arith.addf %18, %1 : vector<1x256xf32>
    %cst_9 = arith.constant 0.000000e+00 : f32
    %20 = vector.broadcast %cst_9 : f32 to vector<1x256xf32>
    %21 = arith.maximumf %19, %20 : vector<1x256xf32>
    %22 = tpu.iota {dimensions = array<i32: 0>} : vector<16x1xi32>
    %c16_i32 = arith.constant 16 : i32
    %23 = arith.muli %arg0, %c16_i32 : i32
    %24 = vector.broadcast %23 : i32 to vector<16x1xi32>
    %25 = arith.addi %24, %22 : vector<16x1xi32>
    %c32_i32 = arith.constant 32 : i32
    %c0_i32 = arith.constant 0 : i32
    %26 = arith.cmpi eq, %c32_i32, %c0_i32 : i32
    %c1_i32 = arith.constant 1 : i32
    %27 = arith.select %26, %c1_i32, %c32_i32 : i32
    %28 = vector.broadcast %27 : i32 to vector<16x1xi32>
    %29 = arith.remsi %25, %28 : vector<16x1xi32>
    %c0_i32_10 = arith.constant 0 : i32
    %30 = vector.broadcast %c0_i32_10 : i32 to vector<16x1xi32>
    %31 = arith.cmpi ne, %29, %30 : vector<16x1xi32>
    %c0_i32_11 = arith.constant 0 : i32
    %32 = vector.broadcast %c0_i32_11 : i32 to vector<16x1xi32>
    %33 = arith.cmpi slt, %29, %32 : vector<16x1xi32>
    %c0_i32_12 = arith.constant 0 : i32
    %34 = arith.cmpi slt, %27, %c0_i32_12 : i32
    %35 = vector.broadcast %34 : i1 to vector<16x1xi1>
    %36 = vector.broadcast %35 : vector<16x1xi1> to vector<16x1xi1>
    %37 = arith.xori %33, %36 : vector<16x1xi1>
    %38 = arith.andi %37, %31 : vector<16x1xi1>
    %39 = vector.broadcast %27 : i32 to vector<16x1xi32>
    %40 = arith.addi %29, %39 : vector<16x1xi32>
    %41 = arith.select %38, %40, %29 : vector<16x1xi1>, vector<16x1xi32>
    %c1_i32_13 = arith.constant 1 : i32
    %42 = tpu.dynamic_rotate %9 by %c1_i32_13 dim 0 : vector<16x256xf32>, i32 -> vector<16x256xf32>
    %c0_i32_14 = arith.constant 0 : i32
    %43 = vector.broadcast %c0_i32_14 : i32 to vector<16x1xi32>
    %44 = arith.cmpi eq, %22, %43 : vector<16x1xi32>
    %45 = vector.shape_cast %44 : vector<16x1xi1> to vector<16x1xi1>
    %46 = vector.broadcast %45 : vector<16x1xi1> to vector<16x256xi1>
    %47 = vector.shape_cast %15 : vector<1x256xf32> to vector<1x256xf32>
    %48 = vector.broadcast %47 : vector<1x256xf32> to vector<16x256xf32>
    %49 = arith.select %46, %48, %42 : vector<16x256xi1>, vector<16x256xf32>
    %c0_i32_15 = arith.constant 0 : i32
    %50 = vector.broadcast %c0_i32_15 : i32 to vector<16x1xi32>
    %51 = arith.cmpi eq, %41, %50 : vector<16x1xi32>
    %cst_16 = arith.constant 0.000000e+00 : f32
    %52 = vector.shape_cast %51 : vector<16x1xi1> to vector<16x1xi1>
    %53 = vector.broadcast %52 : vector<16x1xi1> to vector<16x256xi1>
    %54 = vector.broadcast %cst_16 : f32 to vector<16x256xf32>
    %55 = arith.select %53, %54, %49 : vector<16x256xi1>, vector<16x256xf32>
    %c15_i32 = arith.constant 15 : i32
    %56 = tpu.dynamic_rotate %9 by %c15_i32 dim 0 : vector<16x256xf32>, i32 -> vector<16x256xf32>
    %c15_i32_17 = arith.constant 15 : i32
    %57 = vector.broadcast %c15_i32_17 : i32 to vector<16x1xi32>
    %58 = arith.cmpi eq, %22, %57 : vector<16x1xi32>
    %59 = vector.shape_cast %58 : vector<16x1xi1> to vector<16x1xi1>
    %60 = vector.broadcast %59 : vector<16x1xi1> to vector<16x256xi1>
    %61 = vector.shape_cast %21 : vector<1x256xf32> to vector<1x256xf32>
    %62 = vector.broadcast %61 : vector<1x256xf32> to vector<16x256xf32>
    %63 = arith.select %60, %62, %56 : vector<16x256xi1>, vector<16x256xf32>
    %c31_i32 = arith.constant 31 : i32
    %64 = vector.broadcast %c31_i32 : i32 to vector<16x1xi32>
    %65 = arith.cmpi eq, %41, %64 : vector<16x1xi32>
    %cst_18 = arith.constant 0.000000e+00 : f32
    %66 = vector.shape_cast %65 : vector<16x1xi1> to vector<16x1xi1>
    %67 = vector.broadcast %66 : vector<16x1xi1> to vector<16x256xi1>
    %68 = vector.broadcast %cst_18 : f32 to vector<16x256xf32>
    %69 = arith.select %67, %68, %63 : vector<16x256xi1>, vector<16x256xf32>
    %70 = arith.truncf %9 : vector<16x256xf32> to vector<16x256xbf16>
    %c0_19 = arith.constant 0 : index
    %c0_20 = arith.constant 0 : index
    %71 = vector.load %arg7[%c0_19, %c0_20] : memref<256x256xbf16, #tpu.memory_space<vmem>>, vector<256x256xbf16>
    %cst_21 = arith.constant dense<0.000000e+00> : vector<16x256xf32>
    %72 = tpu.matmul %70, %71, %cst_21 {dimension_numbers = #tpu.dot_dimension_numbers<[1], [0], [0], [1], [0, 0, 1, 1], [], []>} : vector<16x256xbf16>, vector<256x256xbf16>, vector<16x256xf32> -> vector<16x256xf32>
    %73 = arith.truncf %55 : vector<16x256xf32> to vector<16x256xbf16>
    %c0_22 = arith.constant 0 : index
    %c0_23 = arith.constant 0 : index
    %74 = vector.load %arg6[%c0_22, %c0_23] : memref<256x256xbf16, #tpu.memory_space<vmem>>, vector<256x256xbf16>
    %cst_24 = arith.constant dense<0.000000e+00> : vector<16x256xf32>
    %75 = tpu.matmul %73, %74, %cst_24 {dimension_numbers = #tpu.dot_dimension_numbers<[1], [0], [0], [1], [0, 0, 1, 1], [], []>} : vector<16x256xbf16>, vector<256x256xbf16>, vector<16x256xf32> -> vector<16x256xf32>
    %76 = arith.addf %72, %75 : vector<16x256xf32>
    %77 = arith.truncf %69 : vector<16x256xf32> to vector<16x256xbf16>
    %c0_25 = arith.constant 0 : index
    %c0_26 = arith.constant 0 : index
    %78 = vector.load %arg8[%c0_25, %c0_26] : memref<256x256xbf16, #tpu.memory_space<vmem>>, vector<256x256xbf16>
    %cst_27 = arith.constant dense<0.000000e+00> : vector<16x256xf32>
    %79 = tpu.matmul %77, %78, %cst_27 {dimension_numbers = #tpu.dot_dimension_numbers<[1], [0], [0], [1], [0, 0, 1, 1], [], []>} : vector<16x256xbf16>, vector<256x256xbf16>, vector<16x256xf32> -> vector<16x256xf32>
    %80 = arith.addf %76, %79 : vector<16x256xf32>
    %c0_28 = arith.constant 0 : index
    %c0_29 = arith.constant 0 : index
    %81 = vector.load %arg9[%c0_28, %c0_29] : memref<1x256xf32, #tpu.memory_space<vmem>>, vector<1x256xf32>
    %82 = vector.broadcast %81 : vector<1x256xf32> to vector<16x256xf32>
    %83 = arith.addf %80, %82 : vector<16x256xf32>
    %cst_30 = arith.constant 0.000000e+00 : f32
    %84 = vector.broadcast %cst_30 : f32 to vector<16x256xf32>
    %85 = arith.maximumf %83, %84 : vector<16x256xf32>
    %86 = tpu.iota {dimensions = array<i32: 1>} : vector<1x256xi32>
    %c8_i32 = arith.constant 8 : i32
    %87 = vector.broadcast %c8_i32 : i32 to vector<1x256xi32>
    %88 = arith.cmpi slt, %86, %87 : vector<1x256xi32>
    %c8_i32_31 = arith.constant 8 : i32
    %89 = tpu.dynamic_rotate %85 by %c8_i32_31 dim 1 : vector<16x256xf32>, i32 -> vector<16x256xf32>
    %cst_32 = arith.constant 0.000000e+00 : f32
    %90 = vector.shape_cast %88 : vector<1x256xi1> to vector<1x256xi1>
    %91 = vector.broadcast %90 : vector<1x256xi1> to vector<16x256xi1>
    %92 = vector.broadcast %cst_32 : f32 to vector<16x256xf32>
    %93 = arith.select %91, %92, %89 : vector<16x256xi1>, vector<16x256xf32>
    %c248_i32 = arith.constant 248 : i32
    %94 = vector.broadcast %c248_i32 : i32 to vector<1x256xi32>
    %95 = arith.cmpi sge, %86, %94 : vector<1x256xi32>
    %c248_i32_33 = arith.constant 248 : i32
    %96 = tpu.dynamic_rotate %85 by %c248_i32_33 dim 1 : vector<16x256xf32>, i32 -> vector<16x256xf32>
    %cst_34 = arith.constant 0.000000e+00 : f32
    %97 = vector.shape_cast %95 : vector<1x256xi1> to vector<1x256xi1>
    %98 = vector.broadcast %97 : vector<1x256xi1> to vector<16x256xi1>
    %99 = vector.broadcast %cst_34 : f32 to vector<16x256xf32>
    %100 = arith.select %98, %99, %96 : vector<16x256xi1>, vector<16x256xf32>
    %101 = arith.truncf %85 : vector<16x256xf32> to vector<16x256xbf16>
    %c0_35 = arith.constant 0 : index
    %c0_36 = arith.constant 0 : index
    %102 = vector.load %arg11[%c0_35, %c0_36] : memref<256x256xbf16, #tpu.memory_space<vmem>>, vector<256x256xbf16>
    %cst_37 = arith.constant dense<0.000000e+00> : vector<16x256xf32>
    %103 = tpu.matmul %101, %102, %cst_37 {dimension_numbers = #tpu.dot_dimension_numbers<[1], [0], [0], [1], [0, 0, 1, 1], [], []>} : vector<16x256xbf16>, vector<256x256xbf16>, vector<16x256xf32> -> vector<16x256xf32>
    %104 = arith.truncf %93 : vector<16x256xf32> to vector<16x256xbf16>
    %c0_38 = arith.constant 0 : index
    %c0_39 = arith.constant 0 : index
    %105 = vector.load %arg10[%c0_38, %c0_39] : memref<256x256xbf16, #tpu.memory_space<vmem>>, vector<256x256xbf16>
    %cst_40 = arith.constant dense<0.000000e+00> : vector<16x256xf32>
    %106 = tpu.matmul %104, %105, %cst_40 {dimension_numbers = #tpu.dot_dimension_numbers<[1], [0], [0], [1], [0, 0, 1, 1], [], []>} : vector<16x256xbf16>, vector<256x256xbf16>, vector<16x256xf32> -> vector<16x256xf32>
    %107 = arith.addf %103, %106 : vector<16x256xf32>
    %108 = arith.truncf %100 : vector<16x256xf32> to vector<16x256xbf16>
    %c0_41 = arith.constant 0 : index
    %c0_42 = arith.constant 0 : index
    %109 = vector.load %arg12[%c0_41, %c0_42] : memref<256x256xbf16, #tpu.memory_space<vmem>>, vector<256x256xbf16>
    %cst_43 = arith.constant dense<0.000000e+00> : vector<16x256xf32>
    %110 = tpu.matmul %108, %109, %cst_43 {dimension_numbers = #tpu.dot_dimension_numbers<[1], [0], [0], [1], [0, 0, 1, 1], [], []>} : vector<16x256xbf16>, vector<256x256xbf16>, vector<16x256xf32> -> vector<16x256xf32>
    %111 = arith.addf %107, %110 : vector<16x256xf32>
    %c0_44 = arith.constant 0 : index
    %c0_45 = arith.constant 0 : index
    %112 = vector.load %arg13[%c0_44, %c0_45] : memref<1x256xf32, #tpu.memory_space<vmem>>, vector<1x256xf32>
    %113 = vector.broadcast %112 : vector<1x256xf32> to vector<16x256xf32>
    %114 = arith.addf %111, %113 : vector<16x256xf32>
    %115 = arith.truncf %114 : vector<16x256xf32> to vector<16x256xbf16>
    %c0_46 = arith.constant 0 : index
    %c0_47 = arith.constant 0 : index
    %116 = vector.load %arg14[%c0_46, %c0_47] : memref<16x256xbf16, #tpu.memory_space<vmem>>, vector<16x256xbf16>
    tpu.vector_store %arg14[%c0_46, %c0_47], %115 {strides = array<i32>} : memref<16x256xbf16, #tpu.memory_space<vmem>>, vector<16x256xbf16>,
    %cst_48 = arith.constant dense<0.000000e+00> : vector<256xf32>
    %117 = vector.multi_reduction <add>, %114, %cst_48 [0] : vector<16x256xf32> to vector<256xf32>
    %118 = vector.shape_cast %117 : vector<256xf32> to vector<1x256xf32>
    %119 = arith.mulf %114, %114 : vector<16x256xf32>
    %cst_49 = arith.constant dense<0.000000e+00> : vector<256xf32>
    %120 = vector.multi_reduction <add>, %119, %cst_49 [0] : vector<16x256xf32> to vector<256xf32>
    %121 = vector.shape_cast %120 : vector<256xf32> to vector<1x256xf32>
    %122 = tpu.concatenate %118, %121 in 0 : vector<1x256xf32>, vector<1x256xf32> -> vector<2x256xf32>
    %c0_50 = arith.constant 0 : index
    %c0_51 = arith.constant 0 : index
    %c0_52 = arith.constant 0 : index
    %123 = vector.load %arg15[%c0_50, %c0_51, %c0_52] : memref<1x2x256xf32, #tpu.memory_space<vmem>>, vector<1x2x256xf32>
    %124 = vector.shape_cast %123 : vector<1x2x256xf32> to vector<2x256xf32>
    %125 = vector.shape_cast %122 : vector<2x256xf32> to vector<1x2x256xf32>
    tpu.vector_store %arg15[%c0_50, %c0_51, %c0_52], %125 {strides = array<i32>} : memref<1x2x256xf32, #tpu.memory_space<vmem>>, vector<1x2x256xf32>,
    return
  }
  func.func @transform_0(%arg0: i32) -> (i32, i32) {
    %c0_i32 = arith.constant 0 : i32
    %c0_i32_0 = arith.constant 0 : i32
    return %arg0, %c0_i32 : i32, i32
  }
  func.func @transform_1(%arg0: i32) -> (i32, i32) {
    %c2_i32 = arith.constant 2 : i32
    %0 = arith.muli %arg0, %c2_i32 : i32
    %c1_i32 = arith.constant 1 : i32
    %1 = arith.subi %0, %c1_i32 : i32
    %c0_i32 = arith.constant 0 : i32
    %2 = arith.maxsi %1, %c0_i32 : i32
    %c0_i32_0 = arith.constant 0 : i32
    %c0_i32_1 = arith.constant 0 : i32
    return %2, %c0_i32_0 : i32, i32
  }
  func.func @transform_2(%arg0: i32) -> (i32, i32) {
    %c1_i32 = arith.constant 1 : i32
    %0 = arith.addi %arg0, %c1_i32 : i32
    %c2_i32 = arith.constant 2 : i32
    %1 = arith.muli %0, %c2_i32 : i32
    %c7_i32 = arith.constant 7 : i32
    %2 = arith.minsi %1, %c7_i32 : i32
    %c0_i32 = arith.constant 0 : i32
    %c0_i32_0 = arith.constant 0 : i32
    return %2, %c0_i32 : i32, i32
  }
  func.func @transform_3(%arg0: i32) -> (i32, i32) {
    %c0_i32 = arith.constant 0 : i32
    %c0_i32_0 = arith.constant 0 : i32
    %c0_i32_1 = arith.constant 0 : i32
    return %c0_i32, %c0_i32_0 : i32, i32
  }
  func.func @transform_4(%arg0: i32) -> (i32, i32) {
    %c0_i32 = arith.constant 0 : i32
    %c0_i32_0 = arith.constant 0 : i32
    %c0_i32_1 = arith.constant 0 : i32
    return %c0_i32, %c0_i32_0 : i32, i32
  }
  func.func @transform_5(%arg0: i32) -> (i32, i32) {
    %c0_i32 = arith.constant 0 : i32
    %c0_i32_0 = arith.constant 0 : i32
    %c0_i32_1 = arith.constant 0 : i32
    return %c0_i32, %c0_i32_0 : i32, i32
  }
  func.func @transform_6(%arg0: i32) -> (i32, i32) {
    %c0_i32 = arith.constant 0 : i32
    %c0_i32_0 = arith.constant 0 : i32
    %c0_i32_1 = arith.constant 0 : i32
    return %c0_i32, %c0_i32_0 : i32, i32
  }
  func.func @transform_7(%arg0: i32) -> (i32, i32) {
    %c0_i32 = arith.constant 0 : i32
    %c0_i32_0 = arith.constant 0 : i32
    %c0_i32_1 = arith.constant 0 : i32
    return %c0_i32, %c0_i32_0 : i32, i32
  }
  func.func @transform_8(%arg0: i32) -> (i32, i32) {
    %c0_i32 = arith.constant 0 : i32
    %c0_i32_0 = arith.constant 0 : i32
    %c0_i32_1 = arith.constant 0 : i32
    return %c0_i32, %c0_i32_0 : i32, i32
  }
  func.func @transform_9(%arg0: i32) -> (i32, i32) {
    %c0_i32 = arith.constant 0 : i32
    %c0_i32_0 = arith.constant 0 : i32
    %c0_i32_1 = arith.constant 0 : i32
    return %c0_i32, %c0_i32_0 : i32, i32
  }
  func.func @transform_10(%arg0: i32) -> (i32, i32) {
    %c0_i32 = arith.constant 0 : i32
    %c0_i32_0 = arith.constant 0 : i32
    %c0_i32_1 = arith.constant 0 : i32
    return %c0_i32, %c0_i32_0 : i32, i32
  }
  func.func @transform_11(%arg0: i32) -> (i32, i32) {
    %c0_i32 = arith.constant 0 : i32
    %c0_i32_0 = arith.constant 0 : i32
    %c0_i32_1 = arith.constant 0 : i32
    return %c0_i32, %c0_i32_0 : i32, i32
  }
  func.func @transform_12(%arg0: i32) -> (i32, i32) {
    %c0_i32 = arith.constant 0 : i32
    %c0_i32_0 = arith.constant 0 : i32
    %c0_i32_1 = arith.constant 0 : i32
    return %c0_i32, %c0_i32_0 : i32, i32
  }
  func.func @transform_13(%arg0: i32) -> (i32, i32) {
    %c0_i32 = arith.constant 0 : i32
    %c0_i32_0 = arith.constant 0 : i32
    return %arg0, %c0_i32 : i32, i32
  }
  func.func @transform_14(%arg0: i32) -> (i32, i32, i32) {
    %c0_i32 = arith.constant 0 : i32
    %c0_i32_0 = arith.constant 0 : i32
    %c0_i32_1 = arith.constant 0 : i32
    return %arg0, %c0_i32, %c0_i32_0 : i32, i32, i32
  }
}

</mosaic_0001>

<llo_original>
// kernel: tile.38
$region0: #{tile.38}
  #allocation0 [shape = 's32[1]{0}', space=sflag, size = 0x4, scoped, tag = 'scoped memory for tile.38']
  %s0 = inlined_call_operand.vmem [shape: f32[8], index: 0, kind: input, shape index: {}]
  %s1 = inlined_call_operand.vmem [shape: f32[32,8], index: 1, kind: output, shape index: {}]
  // Predicated region
  $region2: #{tile.38} parent=0 // pred_check
    _
  $region3: #{tile.38} parent=0 // pred_check_branch
    %3 = sbr.rel (0) target = $region5
  $region4: #{tile.38} parent=0 // pred_region
    _
  $region5: #{tile.38} parent=0 // pred_fallthru
    _
  %v4 = vld [vmem:[%s0] ss:$0 sm:$0xff]
  %5 = vst [vmem:[%s1] sm:$0xff] %v4
  %s6 = scalar_lea.vmem %s1, 8
  %7 = vst [vmem:[%s6] sm:$0xff] %v4
  %s8 = scalar_lea.vmem %s1, 16
  %9 = vst [vmem:[%s8] sm:$0xff] %v4
  %s10 = scalar_lea.vmem %s1, 24
  %11 = vst [vmem:[%s10] sm:$0xff] %v4

// kernel: tile.39
$region0: #{tile.39}
  %s0 = inlined_call_operand.vmem [shape: f32[32,8], index: 0, kind: input, shape index: {}]
  %s1 = inlined_call_operand.vmem [shape: f32[1,256], index: 1, kind: output, shape index: {}]
  $region1: #{tile.39} parent=0
    #allocation0 [shape = 'u8[8192]{0}', space=vmem, size = 0x2000, scoped, tag = 'scoped mem for output reshape']
    %s2 = smov 3
    %v3 = vld [vmem:[%s0] ss:$16 sm:%s2]
    %vm4 = vcmask 64512
    %5 = vst.msk [vmem:[#allocation0] ss:$8 sm:$0x3] %vm4, %v3
    %s6 = scalar_lea.vmem %s0, 15
    %s7 = smov 3
    %v8 = vld [vmem:[%s6] ss:$16 sm:%s7]
    %9 = vrot.lane.b32.xlu0 %v8, 120
    %v10 = vpop.permute.xlu0 %9
    %vm11 = vcmask 1048512
    %12 = vst.msk [vmem:[#allocation0] ss:$8 sm:$0x3] %vm11, %v10
    %s13 = scalar_lea.vmem %s0, 14
    %s14 = smov 3
    %v15 = vld [vmem:[%s13] ss:$16 sm:%s14]
    %16 = vrot.lane.b32.xlu0 %v15, 112
    %v17 = vpop.permute.xlu0 %16
    %vm18 = vcmask 982912
    %19 = vst.msk [vmem:[#allocation0] ss:$8 sm:$0x3] %vm18, %v17
    %s20 = scalar_lea.vmem %s0, 13
    %s21 = smov 3
    %v22 = vld [vmem:[%s20] ss:$16 sm:%s21]
    %23 = vrot.lane.b32.xlu0 %v22, 104
    %v24 = vpop.permute.xlu0 %23
    %vm25 = vcmask 917312
    %26 = vst.msk [vmem:[#allocation0] ss:$8 sm:$0x3] %vm25, %v24
    %s27 = scalar_lea.vmem %s0, 12
    %s28 = smov 3
    %v29 = vld [vmem:[%s27] ss:$16 sm:%s28]
    %30 = vrot.lane.b32.xlu0 %v29, 96
    %v31 = vpop.permute.xlu0 %30
    %vm32 = vcmask 851712
    %33 = vst.msk [vmem:[#allocation0] ss:$8 sm:$0x3] %vm32, %v31
    %s34 = scalar_lea.vmem %s0, 11
    %s35 = smov 3
    %v36 = vld [vmem:[%s34] ss:$16 sm:%s35]
    %37 = vrot.lane.b32.xlu0 %v36, 88
    %v38 = vpop.permute.xlu0 %37
    %vm39 = vcmask 786112
    %40 = vst.msk [vmem:[#allocation0] ss:$8 sm:$0x3] %vm39, %v38
    %s41 = scalar_lea.vmem %s0, 10
    %s42 = smov 3
    %v43 = vld [vmem:[%s41] ss:$16 sm:%s42]
    %44 = vrot.lane.b32.xlu0 %v43, 80
    %v45 = vpop.permute.xlu0 %44
    %vm46 = vcmask 720512
    %47 = vst.msk [vmem:[#allocation0] ss:$8 sm:$0x3] %vm46, %v45
    %s48 = scalar_lea.vmem %s0, 9
    %s49 = smov 3
    %v50 = vld [vmem:[%s48] ss:$16 sm:%s49]
    %51 = vrot.lane.b32.xlu0 %v50, 72
    %v52 = vpop.permute.xlu0 %51
    %vm53 = vcmask 654912
    %54 = vst.msk [vmem:[#allocation0] ss:$8 sm:$0x3] %vm53, %v52
    %s55 = scalar_lea.vmem %s0, 8
    %s56 = smov 3
    %v57 = vld [vmem:[%s55] ss:$16 sm:%s56]
    %58 = vrot.lane.b32.xlu0 %v57, 64
    %v59 = vpop.permute.xlu0 %58
    %vm60 = vcmask 589312
    %61 = vst.msk [vmem:[#allocation0] ss:$8 sm:$0x3] %vm60, %v59
    %s62 = scalar_lea.vmem %s0, 7
    %s63 = smov 3
    %v64 = vld [vmem:[%s62] ss:$16 sm:%s63]
    %65 = vrot.lane.b32.xlu0 %v64, 56
    %v66 = vpop.permute.xlu0 %65
    %vm67 = vcmask 523712
    %68 = vst.msk [vmem:[#allocation0] ss:$8 sm:$0x3] %vm67, %v66
    %s69 = scalar_lea.vmem %s0, 6
    %s70 = smov 3
    %v71 = vld [vmem:[%s69] ss:$16 sm:%s70]
    %72 = vrot.lane.b32.xlu0 %v71, 48
    %v73 = vpop.permute.xlu0 %72
    %vm74 = vcmask 458112
    %75 = vst.msk [vmem:[#allocation0] ss:$8 sm:$0x3] %vm74, %v73
    %s76 = scalar_lea.vmem %s0, 5
    %s77 = smov 3
    %v78 = vld [vmem:[%s76] ss:$16 sm:%s77]
    %79 = vrot.lane.b32.xlu0 %v78, 40
    %v80 = vpop.permute.xlu0 %79
    %vm81 = vcmask 392512
    %82 = vst.msk [vmem:[#allocation0] ss:$8 sm:$0x3] %vm81, %v80
    %s83 = scalar_lea.vmem %s0, 4
    %s84 = smov 3
    %v85 = vld [vmem:[%s83] ss:$16 sm:%s84]
    %86 = vrot.lane.b32.xlu0 %v85, 32
    %v87 = vpop.permute.xlu0 %86
    %vm88 = vcmask 326912
    %89 = vst.msk [vmem:[#allocation0] ss:$8 sm:$0x3] %vm88, %v87
    %s90 = scalar_lea.vmem %s0, 3
    %s91 = smov 3
    %v92 = vld [vmem:[%s90] ss:$16 sm:%s91]
    %93 = vrot.lane.b32.xlu0 %v92, 24
    %v94 = vpop.permute.xlu0 %93
    %vm95 = vcmask 261312
    %96 = vst.msk [vmem:[#allocation0] ss:$8 sm:$0x3] %vm95, %v94
    %s97 = scalar_lea.vmem %s0, 2
    %s98 = smov 3
    %v99 = vld [vmem:[%s97] ss:$16 sm:%s98]
    %100 = vrot.lane.b32.xlu0 %v99, 16
    %v101 = vpop.permute.xlu0 %100
    %vm102 = vcmask 195712
    %103 = vst.msk [vmem:[#allocation0] ss:$8 sm:$0x3] %vm102, %v101
    %s104 = scalar_lea.vmem %s0, 1
    %s105 = smov 3
    %v106 = vld [vmem:[%s104] ss:$16 sm:%s105]
    %107 = vrot.lane.b32.xlu0 %v106, 8
    %v108 = vpop.permute.xlu0 %107
    %vm109 = vcmask 130112
    %110 = vst.msk [vmem:[#allocation0] ss:$8 sm:$0x3] %vm109, %v108
    %s112 = sshllo.u32 0, 1
    %v114 = vld [vmem:[#allocation0] sm:%s112]
    %s115 = sshllo.u32 0, 1
    %116 = vst [vmem:[%s1] sm:%s115] %v114
    %s117 = scalar_lea.vmem [#allocation0], 8
    %v118 = vld [vmem:[%s117] sm:%s112]
    %s119 = sshllo.u32 0, 1
    %s120 = scalar_lea.vmem %s1, 1
    %121 = vst [vmem:[%s120] sm:%s119] %v118

// kernel: upsampler_forward.2
$region0: #{upsampler_forward.2}
  #allocation0 [shape = 'u32[]', space=smem, size = 0x4, offset = 0x4, fixed_abs, tag = 'smem constant byte address 0x4 - core index']
  #allocation1 [shape = 'u32[144,128]{1,0:T(1,128)}', space=vmem, size = 0x12000, scoped, tag = 'internal scratch']
  #allocation2 [shape = 'f32[1]{0:T(128)S(6)}', space=smem, size = 0x200, scoped, tag = 'scoped memory for upsampler_forward.2']
  %s0 = inlined_call_operand.vmem [shape: bf16[64,192], index: 0, kind: input, shape index: {}]
  %s1 = inlined_call_operand.vmem [shape: f32[64,256], index: 1, kind: input, shape index: {}]
  %s2 = inlined_call_operand.vmem [shape: bf16[192,256], index: 2, kind: input, shape index: {}]
  %s3 = inlined_call_operand.vmem [shape: f32[1,256], index: 3, kind: input, shape index: {}]
  %s4 = inlined_call_operand.<no memory space> [shape: f32[1], index: 4, kind: input, shape index: {}]
  %s5 = inlined_call_operand.vmem [shape: bf16[64,256], index: 5, kind: output, shape index: {0}]
  %s6 = inlined_call_operand.vmem [shape: f32[4,2,256], index: 6, kind: output, shape index: {1}]
  %7 = xla_tuple %s5, %s6
  %s8 = sld [smem:[#allocation0]]
  $region61: #{upsampler_forward.2} parent=0
    _
  %s10 = ssub.s32 1, %s8
  %s11 = scalar_select 0, %s10, %s8
  %12 = sst [smem:[#allocation2]] %s4
  loop: start=0, step=1, limit=6
  $region2: #{upsampler_forward.2} parent=0 // loop_pre_header
    _
  $region3: #{upsampler_forward.2} parent=0 // loop_header
    %s14 = sphi 0, %s18
    %p15 = scmp.ge.s32.totalorder %s14, 6
    %s24 = sphi 0, %s26
    %s27 = sphi 0, %s24
    %s28 = sphi 0, %s27
    %s44 = sphi 0, %s28
    %s50 = sphi 0, %s52
    %s53 = sphi 0, %s50
    %s54 = sphi 0, %s53
    %s70 = sphi 0, %s54
    %s74 = sphi 0, %s74
    %s76 = sphi 0, %s74
    %s77 = sphi 0, %s76
    %s91 = sphi 0, %s77
    %s95 = sphi 0, %s95
    %s97 = sphi 0, %s95
    %s98 = sphi 0, %s97
    %s112 = sphi 0, %s98
    %s116 = sphi 0, %s116
    %s118 = sphi 0, %s116
    %s119 = sphi 0, %s118
    %s133 = sphi 0, %s119
    %s139 = sphi 0, %s141
    %s142 = sphi 0, %s139
    %s143 = sphi 0, %s142
    %s159 = sphi 0, %s143
    %s165 = sphi 0, %s167
    %s168 = sphi 0, %s165
    %s169 = sphi 0, %s168
    %s185 = sphi 0, %s169
  $region4: #{upsampler_forward.2} parent=0 // loop_header_branch
    %17 = sbr.rel (%p15) target = $region8
  $region5: #{upsampler_forward.2} parent=0 // loop_body
    %s19 = ssub.s32 %s14, 1
    %s20 = ssub.s32 %s14, 2
    %s21 = sadd.s32 %s14, 1
    %s22 = ssub.s32 %s14, %s21
    %p23 = scmp.eq.s32.totalorder %s22, 0
    %s25 = sadd.s32 %s24, 1
    %s26 = scalar_select %p23, %s24, %s25
    %p29 = pneg %p23
    %p30 = scmp.eq.s32.totalorder %s14, 3
    %p31 = por %p29, %p30
    %p32 = scmp.ne.s32.totalorder %s24, %s27
    %p33 = scmp.eq.s32.totalorder %s14, 0
    %p34 = por %p32, %p33
    %p35 = scmp.ne.s32.totalorder %s24, %s27
    %p36 = scmp.eq.s32.totalorder %s19, 3
    %p37 = por %p35, %p36
    %p38 = scmp.ne.s32.totalorder %s27, %s28
    %p39 = scmp.eq.s32.totalorder %s19, 0
    %p40 = por %p38, %p39
    %p41 = scmp.ne.s32.totalorder %s27, %s28
    %p42 = scmp.eq.s32.totalorder %s20, 3
    %p43 = por %p41, %p42
    %p45 = scmp.ne.s32.totalorder %s28, %s44
    %p46 = scmp.eq.s32.totalorder %s20, 0
    %p47 = por %p45, %p46
    %s48 = ssub.s32 %s14, %s21
    %p49 = scmp.eq.s32.totalorder %s48, 0
    %s51 = sadd.s32 %s50, 1
    %s52 = scalar_select %p49, %s50, %s51
    %p55 = pneg %p49
    %p56 = scmp.eq.s32.totalorder %s14, 3
    %p57 = por %p55, %p56
    %p58 = scmp.ne.s32.totalorder %s50, %s53
    %p59 = scmp.eq.s32.totalorder %s14, 0
    %p60 = por %p58, %p59
    %p61 = scmp.ne.s32.totalorder %s50, %s53
    %p62 = scmp.eq.s32.totalorder %s19, 3
    %p63 = por %p61, %p62
    %p64 = scmp.ne.s32.totalorder %s53, %s54
    %p65 = scmp.eq.s32.totalorder %s19, 0
    %p66 = por %p64, %p65
    %p67 = scmp.ne.s32.totalorder %s53, %s54
    %p68 = scmp.eq.s32.totalorder %s20, 3
    %p69 = por %p67, %p68
    %p71 = scmp.ne.s32.totalorder %s54, %s70
    %p72 = scmp.eq.s32.totalorder %s20, 0
    %p73 = por %p71, %p72
    %s75 = sadd.s32 %s74, 1
    %p78 = scmp.eq.s32.totalorder %s14, 3
    %p79 = scmp.ne.s32.totalorder %s74, %s76
    %p80 = scmp.eq.s32.totalorder %s14, 0
    %p81 = por %p79, %p80
    %p82 = scmp.ne.s32.totalorder %s74, %s76
    %p83 = scmp.eq.s32.totalorder %s19, 3
    %p84 = por %p82, %p83
    %p85 = scmp.ne.s32.totalorder %s76, %s77
    %p86 = scmp.eq.s32.totalorder %s19, 0
    %p87 = por %p85, %p86
    %p88 = scmp.ne.s32.totalorder %s76, %s77
    %p89 = scmp.eq.s32.totalorder %s20, 3
    %p90 = por %p88, %p89
    %p92 = scmp.ne.s32.totalorder %s77, %s91
    %p93 = scmp.eq.s32.totalorder %s20, 0
    %p94 = por %p92, %p93
    %s96 = sadd.s32 %s95, 1
    %p99 = scmp.eq.s32.totalorder %s14, 3
    %p100 = scmp.ne.s32.totalorder %s95, %s97
    %p101 = scmp.eq.s32.totalorder %s14, 0
    %p102 = por %p100, %p101
    %p103 = scmp.ne.s32.totalorder %s95, %s97
    %p104 = scmp.eq.s32.totalorder %s19, 3
    %p105 = por %p103, %p104
    %p106 = scmp.ne.s32.totalorder %s97, %s98
    %p107 = scmp.eq.s32.totalorder %s19, 0
    %p108 = por %p106, %p107
    %p109 = scmp.ne.s32.totalorder %s97, %s98
    %p110 = scmp.eq.s32.totalorder %s20, 3
    %p111 = por %p109, %p110
    %p113 = scmp.ne.s32.totalorder %s98, %s112
    %p114 = scmp.eq.s32.totalorder %s20, 0
    %p115 = por %p113, %p114
    %s117 = sadd.s32 %s116, 1
    %p120 = scmp.eq.s32.totalorder %s14, 3
    %p121 = scmp.ne.s32.totalorder %s116, %s118
    %p122 = scmp.eq.s32.totalorder %s14, 0
    %p123 = por %p121, %p122
    %p124 = scmp.ne.s32.totalorder %s116, %s118
    %p125 = scmp.eq.s32.totalorder %s19, 3
    %p126 = por %p124, %p125
    %p127 = scmp.ne.s32.totalorder %s118, %s119
    %p128 = scmp.eq.s32.totalorder %s19, 0
    %p129 = por %p127, %p128
    %p130 = scmp.ne.s32.totalorder %s118, %s119
    %p131 = scmp.eq.s32.totalorder %s20, 3
    %p132 = por %p130, %p131
    %p134 = scmp.ne.s32.totalorder %s119, %s133
    %p135 = scmp.eq.s32.totalorder %s20, 0
    %p136 = por %p134, %p135
    %s137 = ssub.s32 %s14, %s21
    %p138 = scmp.eq.s32.totalorder %s137, 0
    %s140 = sadd.s32 %s139, 1
    %s141 = scalar_select %p138, %s139, %s140
    %p144 = pneg %p138
    %p145 = scmp.eq.s32.totalorder %s14, 3
    %p146 = por %p144, %p145
    %p147 = scmp.ne.s32.totalorder %s139, %s142
    %p148 = scmp.eq.s32.totalorder %s14, 0
    %p149 = por %p147, %p148
    %p150 = scmp.ne.s32.totalorder %s139, %s142
    %p151 = scmp.eq.s32.totalorder %s19, 3
    %p152 = por %p150, %p151
    %p153 = scmp.ne.s32.totalorder %s142, %s143
    %p154 = scmp.eq.s32.totalorder %s19, 0
    %p155 = por %p153, %p154
    %p156 = scmp.ne.s32.totalorder %s142, %s143
    %p157 = scmp.eq.s32.totalorder %s20, 3
    %p158 = por %p156, %p157
    %p160 = scmp.ne.s32.totalorder %s143, %s159
    %p161 = scmp.eq.s32.totalorder %s20, 0
    %p162 = por %p160, %p161
    %s163 = ssub.s32 %s14, %s21
    %p164 = scmp.eq.s32.totalorder %s163, 0
    %s166 = sadd.s32 %s165, 1
    %s167 = scalar_select %p164, %s165, %s166
    %p170 = pneg %p164
    %p171 = scmp.eq.s32.totalorder %s14, 3
    %p172 = por %p170, %p171
    %p173 = scmp.ne.s32.totalorder %s165, %s168
    %p174 = scmp.eq.s32.totalorder %s14, 0
    %p175 = por %p173, %p174
    %p176 = scmp.ne.s32.totalorder %s165, %s168
    %p177 = scmp.eq.s32.totalorder %s19, 3
    %p178 = por %p176, %p177
    %p179 = scmp.ne.s32.totalorder %s168, %s169
    %p180 = scmp.eq.s32.totalorder %s19, 0
    %p181 = por %p179, %p180
    %p182 = scmp.ne.s32.totalorder %s168, %s169
    %p183 = scmp.eq.s32.totalorder %s20, 3
    %p184 = por %p182, %p183
    %p186 = scmp.ne.s32.totalorder %s169, %s185
    %p187 = scmp.eq.s32.totalorder %s20, 0
    %p188 = por %p186, %p187
    %p189 = scmp.le.s32.totalorder 1, %s14
    %p190 = scmp.lt.s32.totalorder %s14, 5
    %p191 = pnand %p189, %p190
    %p192 = pneg %p191
    // Predicated region
    $region9: #{upsampler_forward.2} parent=5 // pred_check
      _
    $region10: #{upsampler_forward.2} parent=5 // pred_check_branch
      %194 = sbr.rel (%p191) target = $region12
    $region11: #{upsampler_forward.2} parent=5 // pred_region
      %s195 = ssub.s32 %s14, 1
      // Predicated region
      $region13: #{upsampler_forward.2} parent=11 // pred_check
        %p196 = pneg %p87
      $region14: #{upsampler_forward.2} parent=11 // pred_check_branch
        %198 = sbr.rel (%p196) target = $region16
      $region15: #{upsampler_forward.2} parent=11 // pred_region
        _
      $region16: #{upsampler_forward.2} parent=11 // pred_fallthru
        _
      // Predicated region
      $region17: #{upsampler_forward.2} parent=11 // pred_check
        %p199 = pneg %p108
      $region18: #{upsampler_forward.2} parent=11 // pred_check_branch
        %201 = sbr.rel (%p199) target = $region20
      $region19: #{upsampler_forward.2} parent=11 // pred_region
        _
      $region20: #{upsampler_forward.2} parent=11 // pred_fallthru
        _
      // Predicated region
      $region21: #{upsampler_forward.2} parent=11 // pred_check
        %p202 = pneg %p129
      $region22: #{upsampler_forward.2} parent=11 // pred_check_branch
        %204 = sbr.rel (%p202) target = $region24
      $region23: #{upsampler_forward.2} parent=11 // pred_region
        _
      $region24: #{upsampler_forward.2} parent=11 // pred_fallthru
        _
    $region12: #{upsampler_forward.2} parent=5 // pred_fallthru
      _
    %p205 = scmp.lt.s32.totalorder %s14, 4
    // Predicated region
    $region25: #{upsampler_forward.2} parent=5 // pred_check
      %p206 = pneg %p205
    $region26: #{upsampler_forward.2} parent=5 // pred_check_branch
      %208 = sbr.rel (%p206) target = $region28
    $region27: #{upsampler_forward.2} parent=5 // pred_region
      // Predicated region
      $region29: #{upsampler_forward.2} parent=27 // pred_check
        %p209 = pneg %p34
      $region30: #{upsampler_forward.2} parent=27 // pred_check_branch
        %211 = sbr.rel (%p209) target = $region32
      $region31: #{upsampler_forward.2} parent=27 // pred_region
        %s212 = smul.u32 2, %s14
        %p213 = scmp.lt.s32.totalorder %s212, 7
        %s214 = scalar_select %p213, %s212, 7
        %s215 = smul.addr %s214, 2
        %s216 = smul.addr %s215, 4
        %s217 = scalar_lea.vmem %s0, %s216
        %s218 = smul.u32 2, %s14
      $region32: #{upsampler_forward.2} parent=27 // pred_fallthru
        _
      // Predicated region
      $region33: #{upsampler_forward.2} parent=27 // pred_check
        %p219 = pneg %p60
      $region34: #{upsampler_forward.2} parent=27 // pred_check_branch
        %221 = sbr.rel (%p219) target = $region36
      $region35: #{upsampler_forward.2} parent=27 // pred_region
        %s222 = smul.u32 2, %s14
        %p223 = scmp.lt.s32.totalorder %s222, 7
        %s224 = scalar_select %p223, %s222, 7
        %s225 = smul.addr %s224, 2
        %s226 = smul.addr %s225, 8
        %s227 = scalar_lea.vmem %s1, %s226
        %s228 = smul.u32 2, %s14
      $region36: #{upsampler_forward.2} parent=27 // pred_fallthru
        _
    $region28: #{upsampler_forward.2} parent=5 // pred_fallthru
      _
    %p229 = scmp.le.s32.totalorder 1, %s14
    %p230 = scmp.lt.s32.totalorder %s14, 5
    %p231 = pnand %p229, %p230
    %p232 = pneg %p231
    // Predicated region
    $region37: #{upsampler_forward.2} parent=5 // pred_check
      _
    $region38: #{upsampler_forward.2} parent=5 // pred_check_branch
      %234 = sbr.rel (%p231) target = $region40
    $region39: #{upsampler_forward.2} parent=5 // pred_region
      %s235 = ssub.s32 %s14, 1
      %s236 = smul.u32 2, %s19
      %p237 = scmp.lt.s32.totalorder %s236, 7
      %s238 = scalar_select %p237, %s236, 7
      %s239 = smul.addr %s238, 2
      %s240 = smul.addr %s239, 4
      %s241 = scalar_lea.vmem %s0, %s240
      %p242 = pneg %p40
      %p243 = pneg %p37
      %s244 = smul.u32 2, %s19
      %p245 = scmp.lt.s32.totalorder %s244, 7
      %s246 = scalar_select %p245, %s244, 7
      %s247 = smul.addr %s246, 2
      %s248 = smul.addr %s247, 8
      %s249 = scalar_lea.vmem %s1, %s248
      %p250 = pneg %p66
      %p251 = pneg %p63
      %p252 = pneg %p87
      %p253 = pneg %p84
      %p254 = pneg %p108
      %p255 = pneg %p105
      %p256 = pneg %p129
      %p257 = pneg %p126
      %p258 = pneg %p155
      %p259 = pneg %p152
      %s260 = smul.u32 2, %s19
      %p261 = scmp.lt.s32.totalorder %s260, 7
      %s262 = scalar_select %p261, %s260, 7
      %s263 = smul.addr %s262, 2
      %s264 = smul.addr %s263, 4
      %s265 = scalar_lea.vmem %s5, %s264
      %p266 = pneg %p181
      %p267 = pneg %p178
      %p268 = scmp.lt.s32.totalorder %s19, 3
      %s269 = scalar_select %p268, %s19, 3
      %s270 = smul.addr %s269, 2
      %s271 = smul.addr %s270, 2
      %s272 = scalar_lea.vmem %s6, %s271
      %s273 = smul.u32 2, %s19
      %p274 = scmp.lt.s32.totalorder %s273, 7
      %s275 = scalar_select %p274, %s273, 7
      %s276 = smul.addr %s275, 2
      %s277 = smul.addr %s276, 4
      %s278 = scalar_lea.vmem %s0, %s277
      %s279 = smul.u32 2, %s19
      %s280 = smul.u32 2, %s19
      %p281 = scmp.lt.s32.totalorder %s280, 7
      %s282 = scalar_select %p281, %s280, 7
      %s283 = smul.addr %s282, 2
      %s284 = smul.addr %s283, 8
      %s285 = scalar_lea.vmem %s1, %s284
      %s286 = smul.u32 2, %s19
      %s287 = smul.u32 2, %s19
      %p288 = scmp.lt.s32.totalorder %s287, 7
      %s289 = scalar_select %p288, %s287, 7
      %s290 = smul.addr %s289, 2
      %s291 = smul.addr %s290, 4
      %s292 = scalar_lea.vmem %s5, %s291
      %s293 = smul.u32 2, %s19
      %p294 = scmp.lt.s32.totalorder %s19, 3
      %s295 = scalar_select %p294, %s19, 3
      %s296 = smul.addr %s295, 2
      %s297 = smul.addr %s296, 2
      %s298 = scalar_lea.vmem %s6, %s297
      %v300 = vld [vmem:[%s278] sm:$0xff]
      %v301 = vld [vmem:[%s278 + $0x8] sm:$0xff]
      %v302 = vld [vmem:[%s2] sm:$0xff]
      %v303 = vld [vmem:[%s2 + $0x8] sm:$0xff]
      %v304 = vld [vmem:[%s2 + $0x10] sm:$0xff]
      %v305 = vld [vmem:[%s2 + $0x18] sm:$0xff]
      %v306 = vld [vmem:[%s2 + $0x20] sm:$0xff]
      %v307 = vld [vmem:[%s2 + $0x28] sm:$0xff]
      %v308 = vld [vmem:[%s2 + $0x30] sm:$0xff]
      %v309 = vld [vmem:[%s2 + $0x38] sm:$0xff]
      %v310 = vld [vmem:[%s2 + $0x40] sm:$0xff]
      %v311 = vld [vmem:[%s2 + $0x48] sm:$0xff]
      %v312 = vld [vmem:[%s2 + $0x50] sm:$0xff]
      %v313 = vld [vmem:[%s2 + $0x58] sm:$0xff]
      %v314 = vld [vmem:[%s2 + $0x60] sm:$0xff]
      %v315 = vld [vmem:[%s2 + $0x68] sm:$0xff]
      %v316 = vld [vmem:[%s2 + $0x70] sm:$0xff]
      %v317 = vld [vmem:[%s2 + $0x78] sm:$0xff]
      %v318 = vld [vmem:[%s2 + $0x80] sm:$0xff]
      %v319 = vld [vmem:[%s2 + $0x88] sm:$0xff]
      %v320 = vld [vmem:[%s2 + $0x90] sm:$0xff]
      %v321 = vld [vmem:[%s2 + $0x98] sm:$0xff]
      %v322 = vld [vmem:[%s2 + $0xa0] sm:$0xff]
      %v323 = vld [vmem:[%s2 + $0xa8] sm:$0xff]
      %v324 = vld [vmem:[%s2 + $0xb0] sm:$0xff]
      %v325 = vld [vmem:[%s2 + $0xb8] sm:$0xff]
      %v326 = vld [vmem:[%s3] sm:$0x3]
      %v328 = vlaneseq
      %v329 = vshrl.u32 %v328, 7
      %v330 = vsub.s32 0, %v329
      %v331 = vrot.slane %v326, %v330
      %v332 = vlaneseq
      %v333 = vshrl.u32 %v332, 7
      %v334 = vsub.s32 1, %v333
      %v335 = vrot.slane %v326, %v334
      %v340 = vunpack.c.l.b16 %v300
      %v341 = vunpack.c.h.b16 %v300
      %v342 = vunpack.c.l.b16 %v301
      %v343 = vunpack.c.h.b16 %v301
      %v344 = vpack.c.b16 %v342, %v340
      %v345 = vpack.c.b16 %v343, %v341
      %v371 = vunpack.c.l.b16 %v302
      %v372 = vunpack.c.h.b16 %v302
      %v373 = vunpack.c.l.b16 %v303
      %v374 = vunpack.c.h.b16 %v303
      %v375 = vunpack.c.l.b16 %v304
      %v376 = vunpack.c.h.b16 %v304
      %v377 = vunpack.c.l.b16 %v305
      %v378 = vunpack.c.h.b16 %v305
      %v379 = vunpack.c.l.b16 %v306
      %v380 = vunpack.c.h.b16 %v306
      %v381 = vunpack.c.l.b16 %v307
      %v382 = vunpack.c.h.b16 %v307
      %v383 = vunpack.c.l.b16 %v308
      %v384 = vunpack.c.h.b16 %v308
      %v385 = vunpack.c.l.b16 %v309
      %v386 = vunpack.c.h.b16 %v309
      %v387 = vunpack.c.l.b16 %v310
      %v388 = vunpack.c.h.b16 %v310
      %v389 = vunpack.c.l.b16 %v311
      %v390 = vunpack.c.h.b16 %v311
      %v391 = vunpack.c.l.b16 %v312
      %v392 = vunpack.c.h.b16 %v312
      %v393 = vunpack.c.l.b16 %v313
      %v394 = vunpack.c.h.b16 %v313
      %v395 = vunpack.c.l.b16 %v314
      %v396 = vunpack.c.h.b16 %v314
      %v397 = vunpack.c.l.b16 %v315
      %v398 = vunpack.c.h.b16 %v315
      %v399 = vunpack.c.l.b16 %v316
      %v400 = vunpack.c.h.b16 %v316
      %v401 = vunpack.c.l.b16 %v317
      %v402 = vunpack.c.h.b16 %v317
      %v403 = vunpack.c.l.b16 %v318
      %v404 = vunpack.c.h.b16 %v318
      %v405 = vunpack.c.l.b16 %v319
      %v406 = vunpack.c.h.b16 %v319
      %v407 = vunpack.c.l.b16 %v320
      %v408 = vunpack.c.h.b16 %v320
      %v409 = vunpack.c.l.b16 %v321
      %v410 = vunpack.c.h.b16 %v321
      %v411 = vunpack.c.l.b16 %v322
      %v412 = vunpack.c.h.b16 %v322
      %v413 = vunpack.c.l.b16 %v323
      %v414 = vunpack.c.h.b16 %v323
      %v415 = vunpack.c.l.b16 %v324
      %v416 = vunpack.c.h.b16 %v324
      %v417 = vunpack.c.l.b16 %v325
      %v418 = vunpack.c.h.b16 %v325
      %v419 = vpack.c.b16 %v373, %v371
      %v420 = vpack.c.b16 %v374, %v372
      %v421 = vpack.c.b16 %v377, %v375
      %v422 = vpack.c.b16 %v378, %v376
      %v423 = vpack.c.b16 %v381, %v379
      %v424 = vpack.c.b16 %v382, %v380
      %v425 = vpack.c.b16 %v385, %v383
      %v426 = vpack.c.b16 %v386, %v384
      %v427 = vpack.c.b16 %v389, %v387
      %v428 = vpack.c.b16 %v390, %v388
      %v429 = vpack.c.b16 %v393, %v391
      %v430 = vpack.c.b16 %v394, %v392
      %v431 = vpack.c.b16 %v397, %v395
      %v432 = vpack.c.b16 %v398, %v396
      %v433 = vpack.c.b16 %v401, %v399
      %v434 = vpack.c.b16 %v402, %v400
      %v435 = vpack.c.b16 %v405, %v403
      %v436 = vpack.c.b16 %v406, %v404
      %v437 = vpack.c.b16 %v409, %v407
      %v438 = vpack.c.b16 %v410, %v408
      %v439 = vpack.c.b16 %v413, %v411
      %v440 = vpack.c.b16 %v414, %v412
      %v441 = vpack.c.b16 %v417, %v415
      %v442 = vpack.c.b16 %v418, %v416
      %vm467 = vcmask 523264
      %v469 = vsel %vm467, %v345, 0
      %471 = vmatprep.subr.bf16.mxu0 %v420
      %472 = vmatpush1.bf16.msra.mxu0 %v419
      %473 = vmatprep.subr.bf16.mxu0 %v422
      %474 = vmatpush1.bf16.msra.mxu0 %v421
      %475 = vmatprep.subr.bf16.mxu0 %v424
      %476 = vmatpush1.bf16.msra.mxu0 %v423
      %477 = vmatprep.subr.bf16.mxu0 %v426
      %478 = vmatpush1.bf16.msra.mxu0 %v425
      %479 = vmatprep.subr.bf16.mxu0 %v428
      %480 = vmatpush1.bf16.msra.mxu0 %v427
      %481 = vmatprep.subr.bf16.mxu0 %v430
      %482 = vmatpush1.bf16.msra.mxu0 %v429
      %483 = vmatprep.subr.bf16.mxu0 %v432
      %484 = vmatpush1.bf16.msra.mxu0 %v431
      %485 = vmatprep.subr.bf16.mxu0 %v434
      %486 = vmatpush1.bf16.msra.mxu0 %v433
      %487 = vmatprep.subr.bf16.mxu0 %v436
      %488 = vmatpush1.bf16.msra.mxu0 %v435
      %489 = vmatprep.subr.bf16.mxu0 %v438
      %490 = vmatpush1.bf16.msra.mxu0 %v437
      %491 = vmatprep.subr.bf16.mxu0 %v440
      %492 = vmatpush1.bf16.msra.mxu0 %v439
      %493 = vmatprep.subr.bf16.mxu0 %v442
      %494 = vmatpush1.bf16.msra.mxu0 %v441
      %495 = vmatprep.subr.bf16.mxu0 0
      %496 = vmatpush1.bf16.msra.mxu0 0
      %497 = vmatprep.subr.bf16.mxu0 0
      %498 = vmatpush1.bf16.msra.mxu0 0
      %499 = vmatprep.subr.bf16.mxu0 0
      %500 = vmatpush1.bf16.msra.mxu0 0
      %501 = vmatprep.subr.bf16.mxu0 0
      %502 = vmatpush1.bf16.msra.mxu0 0
      %503 = vmatprep.mubr.bf16.mxu0 %v469
      %504 = vmatmul.mubr.bf16.gmra.mrb[0].mxu0 %v344
      %v505 = vpop.f32.mrb[0].mxu0
      %v506 = vadd.f32 %v331, %v505
      %v507 = vpop.f32.mrb[0].mxu0
      %v508 = vadd.f32 %v335, %v507
      %v509 = vpop.f32.mrb[0].mxu0
      %v510 = vadd.f32 %v331, %v509
      %v511 = vpop.f32.mrb[0].mxu0
      %v512 = vadd.f32 %v335, %v511
      %513 = vdwg.mxu0
      %v514 = vld [vmem:[%s285] sm:$0xff]
      %v515 = vld [vmem:[%s285 + $0x8] sm:$0xff]
      %v516 = vld [vmem:[%s285 + $0x10] sm:$0xff]
      %v517 = vld [vmem:[%s285 + $0x18] sm:$0xff]
      %s518 = sld [smem:[#allocation2]]
      %v519 = vstv %s518
      %v520 = vmul.f32 %v514, %v519
      %v521 = vmul.f32 %v515, %v519
      %v522 = vmul.f32 %v516, %v519
      %v523 = vmul.f32 %v517, %v519
      %v524 = vadd.f32 %v506, %v520
      %v525 = vadd.f32 %v508, %v521
      %v526 = vadd.f32 %v510, %v522
      %v527 = vadd.f32 %v512, %v523
      %v528 = vpack.c.bf16 %v526, %v524
      %v529 = vpack.c.bf16 %v527, %v525
      %v532 = vunpack.c.l.b16 %v528
      %v533 = vunpack.c.l.b16 %v529
      %v534 = vunpack.c.h.b16 %v528
      %v535 = vunpack.c.h.b16 %v529
      %v536 = vpack.c.b16 %v533, %v532
      %v537 = vpack.c.b16 %v535, %v534
      %540 = vst [vmem:[%s292] sm:$0xff] %v536
      %541 = vst [vmem:[%s292 + $0x8] sm:$0xff] %v537
      %v542 = vadd.f32 %v524, %v526
      %v543 = vrot.slane %v542, 4
      %v544 = vadd.f32 %v542, %v543
      %v545 = vrot.slane %v544, 2
      %v546 = vadd.f32 %v544, %v545
      %v547 = vrot.slane %v546, 1
      %v548 = vadd.f32 %v546, %v547
      %v549 = vadd.f32 %v525, %v527
      %v550 = vrot.slane %v549, 4
      %v551 = vadd.f32 %v549, %v550
      %v552 = vrot.slane %v551, 2
      %v553 = vadd.f32 %v551, %v552
      %v554 = vrot.slane %v553, 1
      %v555 = vadd.f32 %v553, %v554
      %v556 = vmul.f32 %v524, %v524
      %v557 = vmul.f32 %v525, %v525
      %v558 = vmul.f32 %v526, %v526
      %v559 = vmul.f32 %v527, %v527
      %v560 = vadd.f32 %v556, %v558
      %v561 = vrot.slane %v560, 4
      %v562 = vadd.f32 %v560, %v561
      %v563 = vrot.slane %v562, 2
      %v564 = vadd.f32 %v562, %v563
      %v565 = vrot.slane %v564, 1
      %v566 = vadd.f32 %v564, %v565
      %v567 = vadd.f32 %v557, %v559
      %v568 = vrot.slane %v567, 4
      %v569 = vadd.f32 %v567, %v568
      %v570 = vrot.slane %v569, 2
      %v571 = vadd.f32 %v569, %v570
      %v572 = vrot.slane %v571, 1
      %v573 = vadd.f32 %v571, %v572
      %vm574 = vcmask 1040384
      %v575 = vsel %vm574, %v548, %v566
      %v576 = vsel %vm574, %v555, %v573
      %v579 = vcombine.low %v575, %v576
      %v581 = vunpack.c.l.s4 1983009808
      %v582 = vunpack.c.0.s8 %v581
      %v583 = vlaneseq
      %v584 = vshrl.u32 %v583, 7
      %v585 = vsub.s32 %v582, %v584
      %v586 = vrot.slane %v579, %v585
      %588 = vst [vmem:[%s298] sm:$0xf] %v586
      %s589 = smul.u32 2, %s19
      %p590 = scmp.lt.s32.totalorder %s589, 7
      %s591 = scalar_select %p590, %s589, 7
      %s592 = smul.addr %s591, 2
      %s593 = smul.addr %s592, 4
      %s594 = scalar_lea.vmem %s5, %s593
      %p595 = scmp.lt.s32.totalorder %s19, 3
      %s596 = scalar_select %p595, %s19, 3
      %s597 = smul.addr %s596, 2
      %s598 = smul.addr %s597, 2
      %s599 = scalar_lea.vmem %s6, %s598
      // Predicated region
      $region41: #{upsampler_forward.2} parent=39 // pred_check
        %p600 = pneg %p152
      $region42: #{upsampler_forward.2} parent=39 // pred_check_branch
        %602 = sbr.rel (%p600) target = $region44
      $region43: #{upsampler_forward.2} parent=39 // pred_region
        %s603 = smul.u32 2, %s19
      $region44: #{upsampler_forward.2} parent=39 // pred_fallthru
        _
      // Predicated region
      $region45: #{upsampler_forward.2} parent=39 // pred_check
        %p604 = pneg %p178
      $region46: #{upsampler_forward.2} parent=39 // pred_check_branch
        %606 = sbr.rel (%p604) target = $region48
      $region47: #{upsampler_forward.2} parent=39 // pred_region
        _
      $region48: #{upsampler_forward.2} parent=39 // pred_fallthru
        _
    $region40: #{upsampler_forward.2} parent=5 // pred_fallthru
      _
    %p607 = scmp.le.s32.totalorder 2, %s14
    // Predicated region
    $region49: #{upsampler_forward.2} parent=5 // pred_check
      %p608 = pneg %p607
    $region50: #{upsampler_forward.2} parent=5 // pred_check_branch
      %610 = sbr.rel (%p608) target = $region52
    $region51: #{upsampler_forward.2} parent=5 // pred_region
      %s611 = ssub.s32 %s14, 2
      // Predicated region
      $region53: #{upsampler_forward.2} parent=51 // pred_check
        %p612 = pneg %p158
      $region54: #{upsampler_forward.2} parent=51 // pred_check_branch
        %614 = sbr.rel (%p612) target = $region56
      $region55: #{upsampler_forward.2} parent=51 // pred_region
        %s615 = smul.u32 2, %s20
        %p616 = scmp.lt.s32.totalorder %s615, 7
        %s617 = scalar_select %p616, %s615, 7
        %s618 = smul.addr %s617, 2
        %s619 = smul.addr %s618, 4
        %s620 = scalar_lea.vmem %s5, %s619
      $region56: #{upsampler_forward.2} parent=51 // pred_fallthru
        _
      // Predicated region
      $region57: #{upsampler_forward.2} parent=51 // pred_check
        %p621 = pneg %p184
      $region58: #{upsampler_forward.2} parent=51 // pred_check_branch
        %623 = sbr.rel (%p621) target = $region60
      $region59: #{upsampler_forward.2} parent=51 // pred_region
        %p624 = scmp.lt.s32.totalorder %s20, 3
        %s625 = scalar_select %p624, %s20, 3
        %s626 = smul.addr %s625, 2
        %s627 = smul.addr %s626, 2
        %s628 = scalar_lea.vmem %s6, %s627
      $region60: #{upsampler_forward.2} parent=51 // pred_fallthru
        _
    $region52: #{upsampler_forward.2} parent=5 // pred_fallthru
      _
  $region6: #{upsampler_forward.2} parent=0 // loop_footer
    %s18 = sadd.s32 1, %s14
  $region7: #{upsampler_forward.2} parent=0 // loop_footer_branch
    %13 = sbr.rel target = $region3
  $region8: #{upsampler_forward.2} parent=0 // loop_exit
    _

// kernel: upsampler_forward.3
$region0: #{upsampler_forward.3}
  #allocation0 [shape = 'u32[]', space=smem, size = 0x4, offset = 0x4, fixed_abs, tag = 'smem constant byte address 0x4 - core index']
  #allocation1 [shape = 'u32[144,128]{1,0:T(1,128)}', space=vmem, size = 0x12000, scoped, tag = 'internal scratch']
  %s0 = inlined_call_operand.vmem [shape: bf16[64,256], index: 0, kind: input, shape index: {}, may-alias: {0,1,2}]
  %s1 = inlined_call_operand.vmem [shape: bf16[64,256], index: 1, kind: input, shape index: {}, may-alias: {0,1,2}]
  %s2 = inlined_call_operand.vmem [shape: bf16[64,256], index: 2, kind: input, shape index: {}, may-alias: {0,1,2}]
  %s3 = inlined_call_operand.vmem [shape: f32[1,256], index: 3, kind: input, shape index: {}]
  %s4 = inlined_call_operand.vmem [shape: f32[1,256], index: 4, kind: input, shape index: {}]
  %s5 = inlined_call_operand.vmem [shape: bf16[256,256], index: 5, kind: input, shape index: {}]
  %s6 = inlined_call_operand.vmem [shape: bf16[256,256], index: 6, kind: input, shape index: {}]
  %s7 = inlined_call_operand.vmem [shape: bf16[256,256], index: 7, kind: input, shape index: {}]
  %s8 = inlined_call_operand.vmem [shape: f32[1,256], index: 8, kind: input, shape index: {}]
  %s9 = inlined_call_operand.vmem [shape: bf16[256,256], index: 9, kind: input, shape index: {}]
  %s10 = inlined_call_operand.vmem [shape: bf16[256,256], index: 10, kind: input, shape index: {}]
  %s11 = inlined_call_operand.vmem [shape: bf16[256,256], index: 11, kind: input, shape index: {}]
  %s12 = inlined_call_operand.vmem [shape: f32[1,256], index: 12, kind: input, shape index: {}]
  %s13 = inlined_call_operand.vmem [shape: bf16[64,256], index: 13, kind: output, shape index: {0}]
  %s14 = inlined_call_operand.vmem [shape: f32[4,2,256], index: 14, kind: output, shape index: {1}]
  %15 = xla_tuple %s13, %s14
  %s16 = sld [smem:[#allocation0]]
  $region93: #{upsampler_forward.3} parent=0
    _
  %s18 = ssub.s32 1, %s16
  %s19 = scalar_select 0, %s18, %s16
  loop: start=0, step=1, limit=6
  $region2: #{upsampler_forward.3} parent=0 // loop_pre_header
    _
  $region3: #{upsampler_forward.3} parent=0 // loop_header
    %s21 = sphi 0, %s25
    %p22 = scmp.ge.s32.totalorder %s21, 6
    %s31 = sphi 0, %s33
    %s34 = sphi 0, %s31
    %s35 = sphi 0, %s34
    %s51 = sphi 0, %s35
    %s65 = sphi 0, %s67
    %s68 = sphi 0, %s65
    %s69 = sphi 0, %s68
    %s85 = sphi 0, %s69
    %s99 = sphi 0, %s101
    %s102 = sphi 0, %s99
    %s103 = sphi 0, %s102
    %s119 = sphi 0, %s103
    %s123 = sphi 0, %s123
    %s125 = sphi 0, %s123
    %s126 = sphi 0, %s125
    %s140 = sphi 0, %s126
    %s144 = sphi 0, %s144
    %s146 = sphi 0, %s144
    %s147 = sphi 0, %s146
    %s161 = sphi 0, %s147
    %s165 = sphi 0, %s165
    %s167 = sphi 0, %s165
    %s168 = sphi 0, %s167
    %s182 = sphi 0, %s168
    %s186 = sphi 0, %s186
    %s188 = sphi 0, %s186
    %s189 = sphi 0, %s188
    %s203 = sphi 0, %s189
    %s207 = sphi 0, %s207
    %s209 = sphi 0, %s207
    %s210 = sphi 0, %s209
    %s224 = sphi 0, %s210
    %s228 = sphi 0, %s228
    %s230 = sphi 0, %s228
    %s231 = sphi 0, %s230
    %s245 = sphi 0, %s231
    %s249 = sphi 0, %s249
    %s251 = sphi 0, %s249
    %s252 = sphi 0, %s251
    %s266 = sphi 0, %s252
    %s270 = sphi 0, %s270
    %s272 = sphi 0, %s270
    %s273 = sphi 0, %s272
    %s287 = sphi 0, %s273
    %s291 = sphi 0, %s291
    %s293 = sphi 0, %s291
    %s294 = sphi 0, %s293
    %s308 = sphi 0, %s294
    %s312 = sphi 0, %s312
    %s314 = sphi 0, %s312
    %s315 = sphi 0, %s314
    %s329 = sphi 0, %s315
    %s335 = sphi 0, %s337
    %s338 = sphi 0, %s335
    %s339 = sphi 0, %s338
    %s355 = sphi 0, %s339
    %s361 = sphi 0, %s363
    %s364 = sphi 0, %s361
    %s365 = sphi 0, %s364
    %s381 = sphi 0, %s365
  $region4: #{upsampler_forward.3} parent=0 // loop_header_branch
    %24 = sbr.rel (%p22) target = $region8
  $region5: #{upsampler_forward.3} parent=0 // loop_body
    %s26 = ssub.s32 %s21, 1
    %s27 = ssub.s32 %s21, 2
    %s28 = sadd.s32 %s21, 1
    %s29 = ssub.s32 %s21, %s28
    %p30 = scmp.eq.s32.totalorder %s29, 0
    %s32 = sadd.s32 %s31, 1
    %s33 = scalar_select %p30, %s31, %s32
    %p36 = pneg %p30
    %p37 = scmp.eq.s32.totalorder %s21, 3
    %p38 = por %p36, %p37
    %p39 = scmp.ne.s32.totalorder %s31, %s34
    %p40 = scmp.eq.s32.totalorder %s21, 0
    %p41 = por %p39, %p40
    %p42 = scmp.ne.s32.totalorder %s31, %s34
    %p43 = scmp.eq.s32.totalorder %s26, 3
    %p44 = por %p42, %p43
    %p45 = scmp.ne.s32.totalorder %s34, %s35
    %p46 = scmp.eq.s32.totalorder %s26, 0
    %p47 = por %p45, %p46
    %p48 = scmp.ne.s32.totalorder %s34, %s35
    %p49 = scmp.eq.s32.totalorder %s27, 3
    %p50 = por %p48, %p49
    %p52 = scmp.ne.s32.totalorder %s35, %s51
    %p53 = scmp.eq.s32.totalorder %s27, 0
    %p54 = por %p52, %p53
    %s55 = smul.u32 %s21, 2
    %s56 = ssub.s32 %s55, 1
    %p57 = scmp.gt.s32.totalorder %s56, 0
    %s58 = scalar_select %p57, %s56, 0
    %s59 = smul.u32 %s28, 2
    %s60 = ssub.s32 %s59, 1
    %p61 = scmp.gt.s32.totalorder %s60, 0
    %s62 = scalar_select %p61, %s60, 0
    %s63 = ssub.s32 %s58, %s62
    %p64 = scmp.eq.s32.totalorder %s63, 0
    %s66 = sadd.s32 %s65, 1
    %s67 = scalar_select %p64, %s65, %s66
    %p70 = pneg %p64
    %p71 = scmp.eq.s32.totalorder %s21, 3
    %p72 = por %p70, %p71
    %p73 = scmp.ne.s32.totalorder %s65, %s68
    %p74 = scmp.eq.s32.totalorder %s21, 0
    %p75 = por %p73, %p74
    %p76 = scmp.ne.s32.totalorder %s65, %s68
    %p77 = scmp.eq.s32.totalorder %s26, 3
    %p78 = por %p76, %p77
    %p79 = scmp.ne.s32.totalorder %s68, %s69
    %p80 = scmp.eq.s32.totalorder %s26, 0
    %p81 = por %p79, %p80
    %p82 = scmp.ne.s32.totalorder %s68, %s69
    %p83 = scmp.eq.s32.totalorder %s27, 3
    %p84 = por %p82, %p83
    %p86 = scmp.ne.s32.totalorder %s69, %s85
    %p87 = scmp.eq.s32.totalorder %s27, 0
    %p88 = por %p86, %p87
    %s89 = sadd.s32 %s21, 1
    %s90 = smul.u32 %s89, 2
    %p91 = scmp.lt.s32.totalorder %s90, 7
    %s92 = scalar_select %p91, %s90, 7
    %s93 = sadd.s32 %s28, 1
    %s94 = smul.u32 %s93, 2
    %p95 = scmp.lt.s32.totalorder %s94, 7
    %s96 = scalar_select %p95, %s94, 7
    %s97 = ssub.s32 %s92, %s96
    %p98 = scmp.eq.s32.totalorder %s97, 0
    %s100 = sadd.s32 %s99, 1
    %s101 = scalar_select %p98, %s99, %s100
    %p104 = pneg %p98
    %p105 = scmp.eq.s32.totalorder %s21, 3
    %p106 = por %p104, %p105
    %p107 = scmp.ne.s32.totalorder %s99, %s102
    %p108 = scmp.eq.s32.totalorder %s21, 0
    %p109 = por %p107, %p108
    %p110 = scmp.ne.s32.totalorder %s99, %s102
    %p111 = scmp.eq.s32.totalorder %s26, 3
    %p112 = por %p110, %p111
    %p113 = scmp.ne.s32.totalorder %s102, %s103
    %p114 = scmp.eq.s32.totalorder %s26, 0
    %p115 = por %p113, %p114
    %p116 = scmp.ne.s32.totalorder %s102, %s103
    %p117 = scmp.eq.s32.totalorder %s27, 3
    %p118 = por %p116, %p117
    %p120 = scmp.ne.s32.totalorder %s103, %s119
    %p121 = scmp.eq.s32.totalorder %s27, 0
    %p122 = por %p120, %p121
    %s124 = sadd.s32 %s123, 1
    %p127 = scmp.eq.s32.totalorder %s21, 3
    %p128 = scmp.ne.s32.totalorder %s123, %s125
    %p129 = scmp.eq.s32.totalorder %s21, 0
    %p130 = por %p128, %p129
    %p131 = scmp.ne.s32.totalorder %s123, %s125
    %p132 = scmp.eq.s32.totalorder %s26, 3
    %p133 = por %p131, %p132
    %p134 = scmp.ne.s32.totalorder %s125, %s126
    %p135 = scmp.eq.s32.totalorder %s26, 0
    %p136 = por %p134, %p135
    %p137 = scmp.ne.s32.totalorder %s125, %s126
    %p138 = scmp.eq.s32.totalorder %s27, 3
    %p139 = por %p137, %p138
    %p141 = scmp.ne.s32.totalorder %s126, %s140
    %p142 = scmp.eq.s32.totalorder %s27, 0
    %p143 = por %p141, %p142
    %s145 = sadd.s32 %s144, 1
    %p148 = scmp.eq.s32.totalorder %s21, 3
    %p149 = scmp.ne.s32.totalorder %s144, %s146
    %p150 = scmp.eq.s32.totalorder %s21, 0
    %p151 = por %p149, %p150
    %p152 = scmp.ne.s32.totalorder %s144, %s146
    %p153 = scmp.eq.s32.totalorder %s26, 3
    %p154 = por %p152, %p153
    %p155 = scmp.ne.s32.totalorder %s146, %s147
    %p156 = scmp.eq.s32.totalorder %s26, 0
    %p157 = por %p155, %p156
    %p158 = scmp.ne.s32.totalorder %s146, %s147
    %p159 = scmp.eq.s32.totalorder %s27, 3
    %p160 = por %p158, %p159
    %p162 = scmp.ne.s32.totalorder %s147, %s161
    %p163 = scmp.eq.s32.totalorder %s27, 0
    %p164 = por %p162, %p163
    %s166 = sadd.s32 %s165, 1
    %p169 = scmp.eq.s32.totalorder %s21, 3
    %p170 = scmp.ne.s32.totalorder %s165, %s167
    %p171 = scmp.eq.s32.totalorder %s21, 0
    %p172 = por %p170, %p171
    %p173 = scmp.ne.s32.totalorder %s165, %s167
    %p174 = scmp.eq.s32.totalorder %s26, 3
    %p175 = por %p173, %p174
    %p176 = scmp.ne.s32.totalorder %s167, %s168
    %p177 = scmp.eq.s32.totalorder %s26, 0
    %p178 = por %p176, %p177
    %p179 = scmp.ne.s32.totalorder %s167, %s168
    %p180 = scmp.eq.s32.totalorder %s27, 3
    %p181 = por %p179, %p180
    %p183 = scmp.ne.s32.totalorder %s168, %s182
    %p184 = scmp.eq.s32.totalorder %s27, 0
    %p185 = por %p183, %p184
    %s187 = sadd.s32 %s186, 1
    %p190 = scmp.eq.s32.totalorder %s21, 3
    %p191 = scmp.ne.s32.totalorder %s186, %s188
    %p192 = scmp.eq.s32.totalorder %s21, 0
    %p193 = por %p191, %p192
    %p194 = scmp.ne.s32.totalorder %s186, %s188
    %p195 = scmp.eq.s32.totalorder %s26, 3
    %p196 = por %p194, %p195
    %p197 = scmp.ne.s32.totalorder %s188, %s189
    %p198 = scmp.eq.s32.totalorder %s26, 0
    %p199 = por %p197, %p198
    %p200 = scmp.ne.s32.totalorder %s188, %s189
    %p201 = scmp.eq.s32.totalorder %s27, 3
    %p202 = por %p200, %p201
    %p204 = scmp.ne.s32.totalorder %s189, %s203
    %p205 = scmp.eq.s32.totalorder %s27, 0
    %p206 = por %p204, %p205
    %s208 = sadd.s32 %s207, 1
    %p211 = scmp.eq.s32.totalorder %s21, 3
    %p212 = scmp.ne.s32.totalorder %s207, %s209
    %p213 = scmp.eq.s32.totalorder %s21, 0
    %p214 = por %p212, %p213
    %p215 = scmp.ne.s32.totalorder %s207, %s209
    %p216 = scmp.eq.s32.totalorder %s26, 3
    %p217 = por %p215, %p216
    %p218 = scmp.ne.s32.totalorder %s209, %s210
    %p219 = scmp.eq.s32.totalorder %s26, 0
    %p220 = por %p218, %p219
    %p221 = scmp.ne.s32.totalorder %s209, %s210
    %p222 = scmp.eq.s32.totalorder %s27, 3
    %p223 = por %p221, %p222
    %p225 = scmp.ne.s32.totalorder %s210, %s224
    %p226 = scmp.eq.s32.totalorder %s27, 0
    %p227 = por %p225, %p226
    %s229 = sadd.s32 %s228, 1
    %p232 = scmp.eq.s32.totalorder %s21, 3
    %p233 = scmp.ne.s32.totalorder %s228, %s230
    %p234 = scmp.eq.s32.totalorder %s21, 0
    %p235 = por %p233, %p234
    %p236 = scmp.ne.s32.totalorder %s228, %s230
    %p237 = scmp.eq.s32.totalorder %s26, 3
    %p238 = por %p236, %p237
    %p239 = scmp.ne.s32.totalorder %s230, %s231
    %p240 = scmp.eq.s32.totalorder %s26, 0
    %p241 = por %p239, %p240
    %p242 = scmp.ne.s32.totalorder %s230, %s231
    %p243 = scmp.eq.s32.totalorder %s27, 3
    %p244 = por %p242, %p243
    %p246 = scmp.ne.s32.totalorder %s231, %s245
    %p247 = scmp.eq.s32.totalorder %s27, 0
    %p248 = por %p246, %p247
    %s250 = sadd.s32 %s249, 1
    %p253 = scmp.eq.s32.totalorder %s21, 3
    %p254 = scmp.ne.s32.totalorder %s249, %s251
    %p255 = scmp.eq.s32.totalorder %s21, 0
    %p256 = por %p254, %p255
    %p257 = scmp.ne.s32.totalorder %s249, %s251
    %p258 = scmp.eq.s32.totalorder %s26, 3
    %p259 = por %p257, %p258
    %p260 = scmp.ne.s32.totalorder %s251, %s252
    %p261 = scmp.eq.s32.totalorder %s26, 0
    %p262 = por %p260, %p261
    %p263 = scmp.ne.s32.totalorder %s251, %s252
    %p264 = scmp.eq.s32.totalorder %s27, 3
    %p265 = por %p263, %p264
    %p267 = scmp.ne.s32.totalorder %s252, %s266
    %p268 = scmp.eq.s32.totalorder %s27, 0
    %p269 = por %p267, %p268
    %s271 = sadd.s32 %s270, 1
    %p274 = scmp.eq.s32.totalorder %s21, 3
    %p275 = scmp.ne.s32.totalorder %s270, %s272
    %p276 = scmp.eq.s32.totalorder %s21, 0
    %p277 = por %p275, %p276
    %p278 = scmp.ne.s32.totalorder %s270, %s272
    %p279 = scmp.eq.s32.totalorder %s26, 3
    %p280 = por %p278, %p279
    %p281 = scmp.ne.s32.totalorder %s272, %s273
    %p282 = scmp.eq.s32.totalorder %s26, 0
    %p283 = por %p281, %p282
    %p284 = scmp.ne.s32.totalorder %s272, %s273
    %p285 = scmp.eq.s32.totalorder %s27, 3
    %p286 = por %p284, %p285
    %p288 = scmp.ne.s32.totalorder %s273, %s287
    %p289 = scmp.eq.s32.totalorder %s27, 0
    %p290 = por %p288, %p289
    %s292 = sadd.s32 %s291, 1
    %p295 = scmp.eq.s32.totalorder %s21, 3
    %p296 = scmp.ne.s32.totalorder %s291, %s293
    %p297 = scmp.eq.s32.totalorder %s21, 0
    %p298 = por %p296, %p297
    %p299 = scmp.ne.s32.totalorder %s291, %s293
    %p300 = scmp.eq.s32.totalorder %s26, 3
    %p301 = por %p299, %p300
    %p302 = scmp.ne.s32.totalorder %s293, %s294
    %p303 = scmp.eq.s32.totalorder %s26, 0
    %p304 = por %p302, %p303
    %p305 = scmp.ne.s32.totalorder %s293, %s294
    %p306 = scmp.eq.s32.totalorder %s27, 3
    %p307 = por %p305, %p306
    %p309 = scmp.ne.s32.totalorder %s294, %s308
    %p310 = scmp.eq.s32.totalorder %s27, 0
    %p311 = por %p309, %p310
    %s313 = sadd.s32 %s312, 1
    %p316 = scmp.eq.s32.totalorder %s21, 3
    %p317 = scmp.ne.s32.totalorder %s312, %s314
    %p318 = scmp.eq.s32.totalorder %s21, 0
    %p319 = por %p317, %p318
    %p320 = scmp.ne.s32.totalorder %s312, %s314
    %p321 = scmp.eq.s32.totalorder %s26, 3
    %p322 = por %p320, %p321
    %p323 = scmp.ne.s32.totalorder %s314, %s315
    %p324 = scmp.eq.s32.totalorder %s26, 0
    %p325 = por %p323, %p324
    %p326 = scmp.ne.s32.totalorder %s314, %s315
    %p327 = scmp.eq.s32.totalorder %s27, 3
    %p328 = por %p326, %p327
    %p330 = scmp.ne.s32.totalorder %s315, %s329
    %p331 = scmp.eq.s32.totalorder %s27, 0
    %p332 = por %p330, %p331
    %s333 = ssub.s32 %s21, %s28
    %p334 = scmp.eq.s32.totalorder %s333, 0
    %s336 = sadd.s32 %s335, 1
    %s337 = scalar_select %p334, %s335, %s336
    %p340 = pneg %p334
    %p341 = scmp.eq.s32.totalorder %s21, 3
    %p342 = por %p340, %p341
    %p343 = scmp.ne.s32.totalorder %s335, %s338
    %p344 = scmp.eq.s32.totalorder %s21, 0
    %p345 = por %p343, %p344
    %p346 = scmp.ne.s32.totalorder %s335, %s338
    %p347 = scmp.eq.s32.totalorder %s26, 3
    %p348 = por %p346, %p347
    %p349 = scmp.ne.s32.totalorder %s338, %s339
    %p350 = scmp.eq.s32.totalorder %s26, 0
    %p351 = por %p349, %p350
    %p352 = scmp.ne.s32.totalorder %s338, %s339
    %p353 = scmp.eq.s32.totalorder %s27, 3
    %p354 = por %p352, %p353
    %p356 = scmp.ne.s32.totalorder %s339, %s355
    %p357 = scmp.eq.s32.totalorder %s27, 0
    %p358 = por %p356, %p357
    %s359 = ssub.s32 %s21, %s28
    %p360 = scmp.eq.s32.totalorder %s359, 0
    %s362 = sadd.s32 %s361, 1
    %s363 = scalar_select %p360, %s361, %s362
    %p366 = pneg %p360
    %p367 = scmp.eq.s32.totalorder %s21, 3
    %p368 = por %p366, %p367
    %p369 = scmp.ne.s32.totalorder %s361, %s364
    %p370 = scmp.eq.s32.totalorder %s21, 0
    %p371 = por %p369, %p370
    %p372 = scmp.ne.s32.totalorder %s361, %s364
    %p373 = scmp.eq.s32.totalorder %s26, 3
    %p374 = por %p372, %p373
    %p375 = scmp.ne.s32.totalorder %s364, %s365
    %p376 = scmp.eq.s32.totalorder %s26, 0
    %p377 = por %p375, %p376
    %p378 = scmp.ne.s32.totalorder %s364, %s365
    %p379 = scmp.eq.s32.totalorder %s27, 3
    %p380 = por %p378, %p379
    %p382 = scmp.ne.s32.totalorder %s365, %s381
    %p383 = scmp.eq.s32.totalorder %s27, 0
    %p384 = por %p382, %p383
    %p385 = scmp.le.s32.totalorder 1, %s21
    %p386 = scmp.lt.s32.totalorder %s21, 5
    %p387 = pnand %p385, %p386
    %p388 = pneg %p387
    // Predicated region
    $region9: #{upsampler_forward.3} parent=5 // pred_check
      _
    $region10: #{upsampler_forward.3} parent=5 // pred_check_branch
      %390 = sbr.rel (%p387) target = $region12
    $region11: #{upsampler_forward.3} parent=5 // pred_region
      %s391 = ssub.s32 %s21, 1
      // Predicated region
      $region13: #{upsampler_forward.3} parent=11 // pred_check
        %p392 = pneg %p136
      $region14: #{upsampler_forward.3} parent=11 // pred_check_branch
        %394 = sbr.rel (%p392) target = $region16
      $region15: #{upsampler_forward.3} parent=11 // pred_region
        _
      $region16: #{upsampler_forward.3} parent=11 // pred_fallthru
        _
      // Predicated region
      $region17: #{upsampler_forward.3} parent=11 // pred_check
        %p395 = pneg %p157
      $region18: #{upsampler_forward.3} parent=11 // pred_check_branch
        %397 = sbr.rel (%p395) target = $region20
      $region19: #{upsampler_forward.3} parent=11 // pred_region
        _
      $region20: #{upsampler_forward.3} parent=11 // pred_fallthru
        _
      // Predicated region
      $region21: #{upsampler_forward.3} parent=11 // pred_check
        %p398 = pneg %p178
      $region22: #{upsampler_forward.3} parent=11 // pred_check_branch
        %400 = sbr.rel (%p398) target = $region24
      $region23: #{upsampler_forward.3} parent=11 // pred_region
        _
      $region24: #{upsampler_forward.3} parent=11 // pred_fallthru
        _
      // Predicated region
      $region25: #{upsampler_forward.3} parent=11 // pred_check
        %p401 = pneg %p199
      $region26: #{upsampler_forward.3} parent=11 // pred_check_branch
        %403 = sbr.rel (%p401) target = $region28
      $region27: #{upsampler_forward.3} parent=11 // pred_region
        _
      $region28: #{upsampler_forward.3} parent=11 // pred_fallthru
        _
      // Predicated region
      $region29: #{upsampler_forward.3} parent=11 // pred_check
        %p404 = pneg %p220
      $region30: #{upsampler_forward.3} parent=11 // pred_check_branch
        %406 = sbr.rel (%p404) target = $region32
      $region31: #{upsampler_forward.3} parent=11 // pred_region
        _
      $region32: #{upsampler_forward.3} parent=11 // pred_fallthru
        _
      // Predicated region
      $region33: #{upsampler_forward.3} parent=11 // pred_check
        %p407 = pneg %p241
      $region34: #{upsampler_forward.3} parent=11 // pred_check_branch
        %409 = sbr.rel (%p407) target = $region36
      $region35: #{upsampler_forward.3} parent=11 // pred_region
        _
      $region36: #{upsampler_forward.3} parent=11 // pred_fallthru
        _
      // Predicated region
      $region37: #{upsampler_forward.3} parent=11 // pred_check
        %p410 = pneg %p262
      $region38: #{upsampler_forward.3} parent=11 // pred_check_branch
        %412 = sbr.rel (%p410) target = $region40
      $region39: #{upsampler_forward.3} parent=11 // pred_region
        _
      $region40: #{upsampler_forward.3} parent=11 // pred_fallthru
        _
      // Predicated region
      $region41: #{upsampler_forward.3} parent=11 // pred_check
        %p413 = pneg %p283
      $region42: #{upsampler_forward.3} parent=11 // pred_check_branch
        %415 = sbr.rel (%p413) target = $region44
      $region43: #{upsampler_forward.3} parent=11 // pred_region
        _
      $region44: #{upsampler_forward.3} parent=11 // pred_fallthru
        _
      // Predicated region
      $region45: #{upsampler_forward.3} parent=11 // pred_check
        %p416 = pneg %p304
      $region46: #{upsampler_forward.3} parent=11 // pred_check_branch
        %418 = sbr.rel (%p416) target = $region48
      $region47: #{upsampler_forward.3} parent=11 // pred_region
        _
      $region48: #{upsampler_forward.3} parent=11 // pred_fallthru
        _
      // Predicated region
      $region49: #{upsampler_forward.3} parent=11 // pred_check
        %p419 = pneg %p325
      $region50: #{upsampler_forward.3} parent=11 // pred_check_branch
        %421 = sbr.rel (%p419) target = $region52
      $region51: #{upsampler_forward.3} parent=11 // pred_region
        _
      $region52: #{upsampler_forward.3} parent=11 // pred_fallthru
        _
    $region12: #{upsampler_forward.3} parent=5 // pred_fallthru
      _
    %p422 = scmp.lt.s32.totalorder %s21, 4
    // Predicated region
    $region53: #{upsampler_forward.3} parent=5 // pred_check
      %p423 = pneg %p422
    $region54: #{upsampler_forward.3} parent=5 // pred_check_branch
      %425 = sbr.rel (%p423) target = $region56
    $region55: #{upsampler_forward.3} parent=5 // pred_region
      // Predicated region
      $region57: #{upsampler_forward.3} parent=55 // pred_check
        %p426 = pneg %p41
      $region58: #{upsampler_forward.3} parent=55 // pred_check_branch
        %428 = sbr.rel (%p426) target = $region60
      $region59: #{upsampler_forward.3} parent=55 // pred_region
        %s429 = smul.u32 2, %s21
        %p430 = scmp.lt.s32.totalorder %s429, 7
        %s431 = scalar_select %p430, %s429, 7
        %s432 = smul.addr %s431, 2
        %s433 = smul.addr %s432, 4
        %s434 = scalar_lea.vmem %s0, %s433
        %s435 = smul.u32 2, %s21
      $region60: #{upsampler_forward.3} parent=55 // pred_fallthru
        _
      // Predicated region
      $region61: #{upsampler_forward.3} parent=55 // pred_check
        %p436 = pneg %p75
      $region62: #{upsampler_forward.3} parent=55 // pred_check_branch
        %438 = sbr.rel (%p436) target = $region64
      $region63: #{upsampler_forward.3} parent=55 // pred_region
        %s439 = smul.u32 %s21, 2
        %s440 = ssub.s32 %s439, 1
        %p441 = scmp.gt.s32.totalorder %s440, 0
        %s442 = scalar_select %p441, %s440, 0
        %p443 = scmp.lt.s32.totalorder %s442, 7
        %s444 = scalar_select %p443, %s442, 7
        %s445 = smul.addr %s444, 2
        %s446 = smul.addr %s445, 4
        %s447 = scalar_lea.vmem %s1, %s446
        %s448 = smul.u32 %s21, 2
        %s449 = ssub.s32 %s448, 1
        %p450 = scmp.gt.s32.totalorder %s449, 0
        %s451 = scalar_select %p450, %s449, 0
      $region64: #{upsampler_forward.3} parent=55 // pred_fallthru
        _
      // Predicated region
      $region65: #{upsampler_forward.3} parent=55 // pred_check
        %p452 = pneg %p109
      $region66: #{upsampler_forward.3} parent=55 // pred_check_branch
        %454 = sbr.rel (%p452) target = $region68
      $region67: #{upsampler_forward.3} parent=55 // pred_region
        %s455 = sadd.s32 %s21, 1
        %s456 = smul.u32 %s455, 2
        %p457 = scmp.lt.s32.totalorder %s456, 7
        %s458 = scalar_select %p457, %s456, 7
        %p459 = scmp.lt.s32.totalorder %s458, 7
        %s460 = scalar_select %p459, %s458, 7
        %s461 = smul.addr %s460, 2
        %s462 = smul.addr %s461, 4
        %s463 = scalar_lea.vmem %s2, %s462
        %s464 = sadd.s32 %s21, 1
        %s465 = smul.u32 %s464, 2
        %p466 = scmp.lt.s32.totalorder %s465, 7
        %s467 = scalar_select %p466, %s465, 7
      $region68: #{upsampler_forward.3} parent=55 // pred_fallthru
        _
    $region56: #{upsampler_forward.3} parent=5 // pred_fallthru
      _
    %p468 = scmp.le.s32.totalorder 1, %s21
    %p469 = scmp.lt.s32.totalorder %s21, 5
    %p470 = pnand %p468, %p469
    %p471 = pneg %p470
    // Predicated region
    $region69: #{upsampler_forward.3} parent=5 // pred_check
      _
    $region70: #{upsampler_forward.3} parent=5 // pred_check_branch
      %473 = sbr.rel (%p470) target = $region72
    $region71: #{upsampler_forward.3} parent=5 // pred_region
      %s474 = ssub.s32 %s21, 1
      %s475 = smul.u32 2, %s26
      %p476 = scmp.lt.s32.totalorder %s475, 7
      %s477 = scalar_select %p476, %s475, 7
      %s478 = smul.addr %s477, 2
      %s479 = smul.addr %s478, 4
      %s480 = scalar_lea.vmem %s0, %s479
      %p481 = pneg %p47
      %p482 = pneg %p44
      %s483 = smul.u32 %s26, 2
      %s484 = ssub.s32 %s483, 1
      %p485 = scmp.gt.s32.totalorder %s484, 0
      %s486 = scalar_select %p485, %s484, 0
      %p487 = scmp.lt.s32.totalorder %s486, 7
      %s488 = scalar_select %p487, %s486, 7
      %s489 = smul.addr %s488, 2
      %s490 = smul.addr %s489, 4
      %s491 = scalar_lea.vmem %s1, %s490
      %p492 = pneg %p81
      %p493 = pneg %p78
      %s494 = sadd.s32 %s26, 1
      %s495 = smul.u32 %s494, 2
      %p496 = scmp.lt.s32.totalorder %s495, 7
      %s497 = scalar_select %p496, %s495, 7
      %p498 = scmp.lt.s32.totalorder %s497, 7
      %s499 = scalar_select %p498, %s497, 7
      %s500 = smul.addr %s499, 2
      %s501 = smul.addr %s500, 4
      %s502 = scalar_lea.vmem %s2, %s501
      %p503 = pneg %p115
      %p504 = pneg %p112
      %p505 = pneg %p136
      %p506 = pneg %p133
      %p507 = pneg %p157
      %p508 = pneg %p154
      %p509 = pneg %p178
      %p510 = pneg %p175
      %p511 = pneg %p199
      %p512 = pneg %p196
      %p513 = pneg %p220
      %p514 = pneg %p217
      %p515 = pneg %p241
      %p516 = pneg %p238
      %p517 = pneg %p262
      %p518 = pneg %p259
      %p519 = pneg %p283
      %p520 = pneg %p280
      %p521 = pneg %p304
      %p522 = pneg %p301
      %p523 = pneg %p325
      %p524 = pneg %p322
      %p525 = pneg %p351
      %p526 = pneg %p348
      %s527 = smul.u32 2, %s26
      %p528 = scmp.lt.s32.totalorder %s527, 7
      %s529 = scalar_select %p528, %s527, 7
      %s530 = smul.addr %s529, 2
      %s531 = smul.addr %s530, 4
      %s532 = scalar_lea.vmem %s13, %s531
      %p533 = pneg %p377
      %p534 = pneg %p374
      %p535 = scmp.lt.s32.totalorder %s26, 3
      %s536 = scalar_select %p535, %s26, 3
      %s537 = smul.addr %s536, 2
      %s538 = smul.addr %s537, 2
      %s539 = scalar_lea.vmem %s14, %s538
      %s540 = smul.u32 2, %s26
      %p541 = scmp.lt.s32.totalorder %s540, 7
      %s542 = scalar_select %p541, %s540, 7
      %s543 = smul.addr %s542, 2
      %s544 = smul.addr %s543, 4
      %s545 = scalar_lea.vmem %s0, %s544
      %s546 = smul.u32 2, %s26
      %s547 = smul.u32 %s26, 2
      %s548 = ssub.s32 %s547, 1
      %p549 = scmp.gt.s32.totalorder %s548, 0
      %s550 = scalar_select %p549, %s548, 0
      %p551 = scmp.lt.s32.totalorder %s550, 7
      %s552 = scalar_select %p551, %s550, 7
      %s553 = smul.addr %s552, 2
      %s554 = smul.addr %s553, 4
      %s555 = scalar_lea.vmem %s1, %s554
      %s556 = smul.u32 %s26, 2
      %s557 = ssub.s32 %s556, 1
      %p558 = scmp.gt.s32.totalorder %s557, 0
      %s559 = scalar_select %p558, %s557, 0
      %s560 = sadd.s32 %s26, 1
      %s561 = smul.u32 %s560, 2
      %p562 = scmp.lt.s32.totalorder %s561, 7
      %s563 = scalar_select %p562, %s561, 7
      %p564 = scmp.lt.s32.totalorder %s563, 7
      %s565 = scalar_select %p564, %s563, 7
      %s566 = smul.addr %s565, 2
      %s567 = smul.addr %s566, 4
      %s568 = scalar_lea.vmem %s2, %s567
      %s569 = sadd.s32 %s26, 1
      %s570 = smul.u32 %s569, 2
      %p571 = scmp.lt.s32.totalorder %s570, 7
      %s572 = scalar_select %p571, %s570, 7
      %s573 = smul.u32 2, %s26
      %p574 = scmp.lt.s32.totalorder %s573, 7
      %s575 = scalar_select %p574, %s573, 7
      %s576 = smul.addr %s575, 2
      %s577 = smul.addr %s576, 4
      %s578 = scalar_lea.vmem %s13, %s577
      %s579 = smul.u32 2, %s26
      %p580 = scmp.lt.s32.totalorder %s26, 3
      %s581 = scalar_select %p580, %s26, 3
      %s582 = smul.addr %s581, 2
      %s583 = smul.addr %s582, 2
      %s584 = scalar_lea.vmem %s14, %s583
      %v585 = vld [vmem:[%s3] sm:$0x3]
      %v586 = vld [vmem:[%s4] sm:$0x3]
      %v587 = vld [vmem:[%s545] sm:$0xff]
      %v588 = vld [vmem:[%s545 + $0x8] sm:$0xff]
      %v589 = vunpack.c.l.bf16 %v587
      %v590 = vunpack.c.h.bf16 %v587
      %v591 = vunpack.c.l.bf16 %v588
      %v592 = vunpack.c.h.bf16 %v588
      %v594 = vlaneseq
      %v595 = vshrl.u32 %v594, 7
      %v596 = vsub.s32 0, %v595
      %v597 = vrot.slane %v585, %v596
      %v598 = vlaneseq
      %v599 = vshrl.u32 %v598, 7
      %v600 = vsub.s32 1, %v599
      %v601 = vrot.slane %v585, %v600
      %v604 = vmul.f32 %v589, %v597
      %v605 = vmul.f32 %v590, %v601
      %v606 = vmul.f32 %v591, %v597
      %v607 = vmul.f32 %v592, %v601
      %v609 = vlaneseq
      %v610 = vshrl.u32 %v609, 7
      %v611 = vsub.s32 0, %v610
      %v612 = vrot.slane %v586, %v611
      %v613 = vlaneseq
      %v614 = vshrl.u32 %v613, 7
      %v615 = vsub.s32 1, %v614
      %v616 = vrot.slane %v586, %v615
      %v619 = vadd.f32 %v604, %v612
      %v620 = vadd.f32 %v605, %v616
      %v621 = vadd.f32 %v606, %v612
      %v622 = vadd.f32 %v607, %v616
      %v623 = vmax.f32 %v619, 0.0
      %v624 = vmax.f32 %v620, 0.0
      %v625 = vmax.f32 %v621, 0.0
      %v626 = vmax.f32 %v622, 0.0
      %v627 = vld [vmem:[%s555] sm:$0x88]
      %v628 = vunpack.c.l.bf16 %v627
      %v629 = vunpack.c.h.bf16 %v627
      %v630 = vmul.f32 %v628, %v597
      %v631 = vmul.f32 %v629, %v601
      %v632 = vadd.f32 %v630, %v612
      %v633 = vadd.f32 %v631, %v616
      %v634 = vmax.f32 %v632, 0.0
      %v635 = vmax.f32 %v633, 0.0
      %v636 = vld [vmem:[%s568] sm:$0x11]
      %v637 = vunpack.c.l.bf16 %v636
      %v638 = vunpack.c.h.bf16 %v636
      %v639 = vmul.f32 %v637, %v597
      %v640 = vmul.f32 %v638, %v601
      %v641 = vadd.f32 %v639, %v612
      %v642 = vadd.f32 %v640, %v616
      %v643 = vmax.f32 %v641, 0.0
      %v644 = vmax.f32 %v642, 0.0
      %v645 = vlaneseq
      %v646 = vshrl.u32 %v645, 7
      %v647 = vadd.s32 %v646, 8
      %s648 = smul.u32 %s26, 16
      %v649 = vstv %s648
      %v650 = vadd.s32 %v649, %v646
      %v651 = vadd.s32 %v649, %v647
      %vm652 = vcmp.lt.s32.totalorder %v650, 0
      %v653 = vsub.s32 0, %v650
      %v654 = vsel %vm652, %v653, %v650
      %v655 = vshrl.u32 %v654, 5
      %v656 = vand.u32 %v654, 31
      %v657 = vsub.s32 0, %v656
      %v658 = vsel %vm652, %v657, %v656
      %vm659 = vcmp.lt.s32.totalorder %v651, 0
      %v660 = vsub.s32 0, %v651
      %v661 = vsel %vm659, %v660, %v651
      %v662 = vshrl.u32 %v661, 5
      %v663 = vand.u32 %v661, 31
      %v664 = vsub.s32 0, %v663
      %v665 = vsel %vm659, %v664, %v663
      %vm666 = vcmp.ne.s32.totalorder %v658, 0
      %vm667 = vcmp.ne.s32.totalorder %v665, 0
      %vm668 = vcmp.lt.s32.totalorder %v658, 0
      %vm669 = vcmp.lt.s32.totalorder %v665, 0
      %vm670 = vmand %vm668, %vm666
      %vm671 = vmand %vm669, %vm667
      %v672 = vadd.s32 %v658, 32
      %v673 = vadd.s32 %v665, 32
      %v674 = vsel %vm670, %v672, %v658
      %v675 = vsel %vm671, %v673, %v665
      %v676 = vrot.slane %v623, 7
      %v677 = vrot.slane %v624, 7
      %v678 = vrot.slane %v625, 7
      %v679 = vrot.slane %v626, 7
      %vm680 = vcmp.lt.s32.totalorder %v646, 1
      %v681 = vsel %vm680, %v676, %v678
      %v682 = vsel %vm680, %v677, %v679
      %v683 = vsel %vm680, %v678, %v676
      %v684 = vsel %vm680, %v679, %v677
      %vm685 = vcmp.eq.s32.totalorder %v646, 0
      %vm686 = vcmp.eq.s32.totalorder %v647, 0
      %v687 = vsel %vm685, 1, 0
      %v688 = vsel %vm686, 1, 0
      %vm689 = vcmp.eq.s32.totalorder %v687, 1
      %vm690 = vcmp.eq.s32.totalorder %v688, 1
      %v691 = vlaneseq
      %v692 = vshrl.u32 %v691, 7
      %v693 = vsub.s32 7, %v692
      %v694 = vrot.slane %v634, %v693
      %v695 = vlaneseq
      %v696 = vshrl.u32 %v695, 7
      %v697 = vsub.s32 7, %v696
      %v698 = vrot.slane %v635, %v697
      %v699 = vsel %vm689, %v694, %v683
      %v700 = vsel %vm689, %v698, %v684
      %v701 = vsel %vm690, %v694, %v681
      %v702 = vsel %vm690, %v698, %v682
      %vm703 = vcmp.eq.s32.totalorder %v674, 0
      %vm704 = vcmp.eq.s32.totalorder %v675, 0
      %v705 = vsel %vm703, 1, 0
      %v706 = vsel %vm704, 1, 0
      %vm707 = vcmp.eq.s32.totalorder %v705, 1
      %vm708 = vcmp.eq.s32.totalorder %v706, 1
      %v709 = vsel %vm707, 0.0, %v699
      %v710 = vsel %vm707, 0.0, %v700
      %v711 = vsel %vm708, 0.0, %v701
      %v712 = vsel %vm708, 0.0, %v702
      %v713 = vrot.slane %v623, 1
      %v714 = vrot.slane %v624, 1
      %v715 = vrot.slane %v625, 1
      %v716 = vrot.slane %v626, 1
      %vm717 = vcmp.lt.s32.totalorder %v646, 7
      %v718 = vsel %vm717, %v713, %v715
      %v719 = vsel %vm717, %v714, %v716
      %v720 = vsel %vm717, %v715, %v713
      %v721 = vsel %vm717, %v716, %v714
      %vm722 = vcmp.eq.s32.totalorder %v646, 15
      %vm723 = vcmp.eq.s32.totalorder %v647, 15
      %v724 = vsel %vm722, 1, 0
      %v725 = vsel %vm723, 1, 0
      %vm726 = vcmp.eq.s32.totalorder %v724, 1
      %vm727 = vcmp.eq.s32.totalorder %v725, 1
      %v728 = vlaneseq
      %v729 = vshrl.u32 %v728, 7
      %v730 = vsub.s32 0, %v729
      %v731 = vrot.slane %v643, %v730
      %v732 = vlaneseq
      %v733 = vshrl.u32 %v732, 7
      %v734 = vsub.s32 0, %v733
      %v735 = vrot.slane %v644, %v734
      %v736 = vsel %vm726, %v731, %v718
      %v737 = vsel %vm726, %v735, %v719
      %v738 = vsel %vm727, %v731, %v720
      %v739 = vsel %vm727, %v735, %v721
      %vm740 = vcmp.eq.s32.totalorder %v674, 31
      %vm741 = vcmp.eq.s32.totalorder %v675, 31
      %v742 = vsel %vm740, 1, 0
      %v743 = vsel %vm741, 1, 0
      %vm744 = vcmp.eq.s32.totalorder %v742, 1
      %vm745 = vcmp.eq.s32.totalorder %v743, 1
      %v746 = vsel %vm744, 0.0, %v736
      %v747 = vsel %vm744, 0.0, %v737
      %v748 = vsel %vm745, 0.0, %v738
      %v749 = vsel %vm745, 0.0, %v739
      %v750 = vpack.c.bf16 %v625, %v623
      %v751 = vpack.c.bf16 %v626, %v624
      %v752 = vld [vmem:[%s6] sm:$0xff]
      %v753 = vld [vmem:[%s6 + $0x8] sm:$0xff]
      %v754 = vld [vmem:[%s6 + $0x10] sm:$0xff]
      %v755 = vld [vmem:[%s6 + $0x18] sm:$0xff]
      %v756 = vld [vmem:[%s6 + $0x20] sm:$0xff]
      %v757 = vld [vmem:[%s6 + $0x28] sm:$0xff]
      %v758 = vld [vmem:[%s6 + $0x30] sm:$0xff]
      %v759 = vld [vmem:[%s6 + $0x38] sm:$0xff]
      %v760 = vld [vmem:[%s6 + $0x40] sm:$0xff]
      %v761 = vld [vmem:[%s6 + $0x48] sm:$0xff]
      %v762 = vld [vmem:[%s6 + $0x50] sm:$0xff]
      %v763 = vld [vmem:[%s6 + $0x58] sm:$0xff]
      %v764 = vld [vmem:[%s6 + $0x60] sm:$0xff]
      %v765 = vld [vmem:[%s6 + $0x68] sm:$0xff]
      %v766 = vld [vmem:[%s6 + $0x70] sm:$0xff]
      %v767 = vld [vmem:[%s6 + $0x78] sm:$0xff]
      %v768 = vld [vmem:[%s6 + $0x80] sm:$0xff]
      %v769 = vld [vmem:[%s6 + $0x88] sm:$0xff]
      %v770 = vld [vmem:[%s6 + $0x90] sm:$0xff]
      %v771 = vld [vmem:[%s6 + $0x98] sm:$0xff]
      %v772 = vld [vmem:[%s6 + $0xa0] sm:$0xff]
      %v773 = vld [vmem:[%s6 + $0xa8] sm:$0xff]
      %v774 = vld [vmem:[%s6 + $0xb0] sm:$0xff]
      %v775 = vld [vmem:[%s6 + $0xb8] sm:$0xff]
      %v776 = vld [vmem:[%s6 + $0xc0] sm:$0xff]
      %v777 = vld [vmem:[%s6 + $0xc8] sm:$0xff]
      %v778 = vld [vmem:[%s6 + $0xd0] sm:$0xff]
      %v779 = vld [vmem:[%s6 + $0xd8] sm:$0xff]
      %v780 = vld [vmem:[%s6 + $0xe0] sm:$0xff]
      %v781 = vld [vmem:[%s6 + $0xe8] sm:$0xff]
      %v782 = vld [vmem:[%s6 + $0xf0] sm:$0xff]
      %v783 = vld [vmem:[%s6 + $0xf8] sm:$0xff]
      %v784 = vpack.c.bf16 %v711, %v709
      %v785 = vpack.c.bf16 %v712, %v710
      %v786 = vld [vmem:[%s5] sm:$0xff]
      %v787 = vld [vmem:[%s5 + $0x8] sm:$0xff]
      %v788 = vld [vmem:[%s5 + $0x10] sm:$0xff]
      %v789 = vld [vmem:[%s5 + $0x18] sm:$0xff]
      %v790 = vld [vmem:[%s5 + $0x20] sm:$0xff]
      %v791 = vld [vmem:[%s5 + $0x28] sm:$0xff]
      %v792 = vld [vmem:[%s5 + $0x30] sm:$0xff]
      %v793 = vld [vmem:[%s5 + $0x38] sm:$0xff]
      %v794 = vld [vmem:[%s5 + $0x40] sm:$0xff]
      %v795 = vld [vmem:[%s5 + $0x48] sm:$0xff]
      %v796 = vld [vmem:[%s5 + $0x50] sm:$0xff]
      %v797 = vld [vmem:[%s5 + $0x58] sm:$0xff]
      %v798 = vld [vmem:[%s5 + $0x60] sm:$0xff]
      %v799 = vld [vmem:[%s5 + $0x68] sm:$0xff]
      %v800 = vld [vmem:[%s5 + $0x70] sm:$0xff]
      %v801 = vld [vmem:[%s5 + $0x78] sm:$0xff]
      %v802 = vld [vmem:[%s5 + $0x80] sm:$0xff]
      %v803 = vld [vmem:[%s5 + $0x88] sm:$0xff]
      %v804 = vld [vmem:[%s5 + $0x90] sm:$0xff]
      %v805 = vld [vmem:[%s5 + $0x98] sm:$0xff]
      %v806 = vld [vmem:[%s5 + $0xa0] sm:$0xff]
      %v807 = vld [vmem:[%s5 + $0xa8] sm:$0xff]
      %v808 = vld [vmem:[%s5 + $0xb0] sm:$0xff]
      %v809 = vld [vmem:[%s5 + $0xb8] sm:$0xff]
      %v810 = vld [vmem:[%s5 + $0xc0] sm:$0xff]
      %v811 = vld [vmem:[%s5 + $0xc8] sm:$0xff]
      %v812 = vld [vmem:[%s5 + $0xd0] sm:$0xff]
      %v813 = vld [vmem:[%s5 + $0xd8] sm:$0xff]
      %v814 = vld [vmem:[%s5 + $0xe0] sm:$0xff]
      %v815 = vld [vmem:[%s5 + $0xe8] sm:$0xff]
      %v816 = vld [vmem:[%s5 + $0xf0] sm:$0xff]
      %v817 = vld [vmem:[%s5 + $0xf8] sm:$0xff]
      %v850 = vunpack.c.l.b16 %v786
      %v851 = vunpack.c.h.b16 %v786
      %v852 = vunpack.c.l.b16 %v787
      %v853 = vunpack.c.h.b16 %v787
      %v854 = vunpack.c.l.b16 %v788
      %v855 = vunpack.c.h.b16 %v788
      %v856 = vunpack.c.l.b16 %v789
      %v857 = vunpack.c.h.b16 %v789
      %v858 = vunpack.c.l.b16 %v790
      %v859 = vunpack.c.h.b16 %v790
      %v860 = vunpack.c.l.b16 %v791
      %v861 = vunpack.c.h.b16 %v791
      %v862 = vunpack.c.l.b16 %v792
      %v863 = vunpack.c.h.b16 %v792
      %v864 = vunpack.c.l.b16 %v793
      %v865 = vunpack.c.h.b16 %v793
      %v866 = vunpack.c.l.b16 %v794
      %v867 = vunpack.c.h.b16 %v794
      %v868 = vunpack.c.l.b16 %v795
      %v869 = vunpack.c.h.b16 %v795
      %v870 = vunpack.c.l.b16 %v796
      %v871 = vunpack.c.h.b16 %v796
      %v872 = vunpack.c.l.b16 %v797
      %v873 = vunpack.c.h.b16 %v797
      %v874 = vunpack.c.l.b16 %v798
      %v875 = vunpack.c.h.b16 %v798
      %v876 = vunpack.c.l.b16 %v799
      %v877 = vunpack.c.h.b16 %v799
      %v878 = vunpack.c.l.b16 %v800
      %v879 = vunpack.c.h.b16 %v800
      %v880 = vunpack.c.l.b16 %v801
      %v881 = vunpack.c.h.b16 %v801
      %v882 = vunpack.c.l.b16 %v802
      %v883 = vunpack.c.h.b16 %v802
      %v884 = vunpack.c.l.b16 %v803
      %v885 = vunpack.c.h.b16 %v803
      %v886 = vunpack.c.l.b16 %v804
      %v887 = vunpack.c.h.b16 %v804
      %v888 = vunpack.c.l.b16 %v805
      %v889 = vunpack.c.h.b16 %v805
      %v890 = vunpack.c.l.b16 %v806
      %v891 = vunpack.c.h.b16 %v806
      %v892 = vunpack.c.l.b16 %v807
      %v893 = vunpack.c.h.b16 %v807
      %v894 = vunpack.c.l.b16 %v808
      %v895 = vunpack.c.h.b16 %v808
      %v896 = vunpack.c.l.b16 %v809
      %v897 = vunpack.c.h.b16 %v809
      %v898 = vunpack.c.l.b16 %v810
      %v899 = vunpack.c.h.b16 %v810
      %v900 = vunpack.c.l.b16 %v811
      %v901 = vunpack.c.h.b16 %v811
      %v902 = vunpack.c.l.b16 %v812
      %v903 = vunpack.c.h.b16 %v812
      %v904 = vunpack.c.l.b16 %v813
      %v905 = vunpack.c.h.b16 %v813
      %v906 = vunpack.c.l.b16 %v814
      %v907 = vunpack.c.h.b16 %v814
      %v908 = vunpack.c.l.b16 %v815
      %v909 = vunpack.c.h.b16 %v815
      %v910 = vunpack.c.l.b16 %v816
      %v911 = vunpack.c.h.b16 %v816
      %v912 = vunpack.c.l.b16 %v817
      %v913 = vunpack.c.h.b16 %v817
      %v914 = vpack.c.b16 %v852, %v850
      %v915 = vpack.c.b16 %v853, %v851
      %v916 = vpack.c.b16 %v856, %v854
      %v917 = vpack.c.b16 %v857, %v855
      %v918 = vpack.c.b16 %v860, %v858
      %v919 = vpack.c.b16 %v861, %v859
      %v920 = vpack.c.b16 %v864, %v862
      %v921 = vpack.c.b16 %v865, %v863
      %v922 = vpack.c.b16 %v868, %v866
      %v923 = vpack.c.b16 %v869, %v867
      %v924 = vpack.c.b16 %v872, %v870
      %v925 = vpack.c.b16 %v873, %v871
      %v926 = vpack.c.b16 %v876, %v874
      %v927 = vpack.c.b16 %v877, %v875
      %v928 = vpack.c.b16 %v880, %v878
      %v929 = vpack.c.b16 %v881, %v879
      %v930 = vpack.c.b16 %v884, %v882
      %v931 = vpack.c.b16 %v885, %v883
      %v932 = vpack.c.b16 %v888, %v886
      %v933 = vpack.c.b16 %v889, %v887
      %v934 = vpack.c.b16 %v892, %v890
      %v935 = vpack.c.b16 %v893, %v891
      %v936 = vpack.c.b16 %v896, %v894
      %v937 = vpack.c.b16 %v897, %v895
      %v938 = vpack.c.b16 %v900, %v898
      %v939 = vpack.c.b16 %v901, %v899
      %v940 = vpack.c.b16 %v904, %v902
      %v941 = vpack.c.b16 %v905, %v903
      %v942 = vpack.c.b16 %v908, %v906
      %v943 = vpack.c.b16 %v909, %v907
      %v944 = vpack.c.b16 %v912, %v910
      %v945 = vpack.c.b16 %v913, %v911
      %978 = vmatprep.subr.bf16.mxu0 %v915
      %979 = vmatpush1.bf16.msra.mxu0 %v914
      %980 = vmatprep.subr.bf16.mxu0 %v917
      %981 = vmatpush1.bf16.msra.mxu0 %v916
      %982 = vmatprep.subr.bf16.mxu0 %v919
      %983 = vmatpush1.bf16.msra.mxu0 %v918
      %984 = vmatprep.subr.bf16.mxu0 %v921
      %985 = vmatpush1.bf16.msra.mxu0 %v920
      %986 = vmatprep.subr.bf16.mxu0 %v923
      %987 = vmatpush1.bf16.msra.mxu0 %v922
      %988 = vmatprep.subr.bf16.mxu0 %v925
      %989 = vmatpush1.bf16.msra.mxu0 %v924
      %990 = vmatprep.subr.bf16.mxu0 %v927
      %991 = vmatpush1.bf16.msra.mxu0 %v926
      %992 = vmatprep.subr.bf16.mxu0 %v929
      %993 = vmatpush1.bf16.msra.mxu0 %v928
      %994 = vmatprep.subr.bf16.mxu0 %v931
      %995 = vmatpush1.bf16.msra.mxu0 %v930
      %996 = vmatprep.subr.bf16.mxu0 %v933
      %997 = vmatpush1.bf16.msra.mxu0 %v932
      %998 = vmatprep.subr.bf16.mxu0 %v935
      %999 = vmatpush1.bf16.msra.mxu0 %v934
      %1000 = vmatprep.subr.bf16.mxu0 %v937
      %1001 = vmatpush1.bf16.msra.mxu0 %v936
      %1002 = vmatprep.subr.bf16.mxu0 %v939
      %1003 = vmatpush1.bf16.msra.mxu0 %v938
      %1004 = vmatprep.subr.bf16.mxu0 %v941
      %1005 = vmatpush1.bf16.msra.mxu0 %v940
      %1006 = vmatprep.subr.bf16.mxu0 %v943
      %1007 = vmatpush1.bf16.msra.mxu0 %v942
      %1008 = vmatprep.subr.bf16.mxu0 %v945
      %1009 = vmatpush1.bf16.msra.mxu0 %v944
      %1010 = vmatprep.mubr.bf16.mxu0 %v785
      %1011 = vmatmul.mubr.bf16.gmra.mrb[0].mxu0 %v784
      %v1012 = vpop.f32.mrb[0].mxu0
      %v1013 = vadd.f32 0.0, %v1012
      %v1014 = vpop.f32.mrb[0].mxu0
      %v1015 = vadd.f32 0.0, %v1014
      %v1016 = vpop.f32.mrb[0].mxu0
      %v1017 = vadd.f32 0.0, %v1016
      %v1018 = vpop.f32.mrb[0].mxu0
      %v1019 = vadd.f32 0.0, %v1018
      %1020 = vdwg.mxu0
      %v1053 = vunpack.c.l.b16 %v752
      %v1054 = vunpack.c.h.b16 %v752
      %v1055 = vunpack.c.l.b16 %v753
      %v1056 = vunpack.c.h.b16 %v753
      %v1057 = vunpack.c.l.b16 %v754
      %v1058 = vunpack.c.h.b16 %v754
      %v1059 = vunpack.c.l.b16 %v755
      %v1060 = vunpack.c.h.b16 %v755
      %v1061 = vunpack.c.l.b16 %v756
      %v1062 = vunpack.c.h.b16 %v756
      %v1063 = vunpack.c.l.b16 %v757
      %v1064 = vunpack.c.h.b16 %v757
      %v1065 = vunpack.c.l.b16 %v758
      %v1066 = vunpack.c.h.b16 %v758
      %v1067 = vunpack.c.l.b16 %v759
      %v1068 = vunpack.c.h.b16 %v759
      %v1069 = vunpack.c.l.b16 %v760
      %v1070 = vunpack.c.h.b16 %v760
      %v1071 = vunpack.c.l.b16 %v761
      %v1072 = vunpack.c.h.b16 %v761
      %v1073 = vunpack.c.l.b16 %v762
      %v1074 = vunpack.c.h.b16 %v762
      %v1075 = vunpack.c.l.b16 %v763
      %v1076 = vunpack.c.h.b16 %v763
      %v1077 = vunpack.c.l.b16 %v764
      %v1078 = vunpack.c.h.b16 %v764
      %v1079 = vunpack.c.l.b16 %v765
      %v1080 = vunpack.c.h.b16 %v765
      %v1081 = vunpack.c.l.b16 %v766
      %v1082 = vunpack.c.h.b16 %v766
      %v1083 = vunpack.c.l.b16 %v767
      %v1084 = vunpack.c.h.b16 %v767
      %v1085 = vunpack.c.l.b16 %v768
      %v1086 = vunpack.c.h.b16 %v768
      %v1087 = vunpack.c.l.b16 %v769
      %v1088 = vunpack.c.h.b16 %v769
      %v1089 = vunpack.c.l.b16 %v770
      %v1090 = vunpack.c.h.b16 %v770
      %v1091 = vunpack.c.l.b16 %v771
      %v1092 = vunpack.c.h.b16 %v771
      %v1093 = vunpack.c.l.b16 %v772
      %v1094 = vunpack.c.h.b16 %v772
      %v1095 = vunpack.c.l.b16 %v773
      %v1096 = vunpack.c.h.b16 %v773
      %v1097 = vunpack.c.l.b16 %v774
      %v1098 = vunpack.c.h.b16 %v774
      %v1099 = vunpack.c.l.b16 %v775
      %v1100 = vunpack.c.h.b16 %v775
      %v1101 = vunpack.c.l.b16 %v776
      %v1102 = vunpack.c.h.b16 %v776
      %v1103 = vunpack.c.l.b16 %v777
      %v1104 = vunpack.c.h.b16 %v777
      %v1105 = vunpack.c.l.b16 %v778
      %v1106 = vunpack.c.h.b16 %v778
      %v1107 = vunpack.c.l.b16 %v779
      %v1108 = vunpack.c.h.b16 %v779
      %v1109 = vunpack.c.l.b16 %v780
      %v1110 = vunpack.c.h.b16 %v780
      %v1111 = vunpack.c.l.b16 %v781
      %v1112 = vunpack.c.h.b16 %v781
      %v1113 = vunpack.c.l.b16 %v782
      %v1114 = vunpack.c.h.b16 %v782
      %v1115 = vunpack.c.l.b16 %v783
      %v1116 = vunpack.c.h.b16 %v783
      %v1117 = vpack.c.b16 %v1055, %v1053
      %v1118 = vpack.c.b16 %v1056, %v1054
      %v1119 = vpack.c.b16 %v1059, %v1057
      %v1120 = vpack.c.b16 %v1060, %v1058
      %v1121 = vpack.c.b16 %v1063, %v1061
      %v1122 = vpack.c.b16 %v1064, %v1062
      %v1123 = vpack.c.b16 %v1067, %v1065
      %v1124 = vpack.c.b16 %v1068, %v1066
      %v1125 = vpack.c.b16 %v1071, %v1069
      %v1126 = vpack.c.b16 %v1072, %v1070
      %v1127 = vpack.c.b16 %v1075, %v1073
      %v1128 = vpack.c.b16 %v1076, %v1074
      %v1129 = vpack.c.b16 %v1079, %v1077
      %v1130 = vpack.c.b16 %v1080, %v1078
      %v1131 = vpack.c.b16 %v1083, %v1081
      %v1132 = vpack.c.b16 %v1084, %v1082
      %v1133 = vpack.c.b16 %v1087, %v1085
      %v1134 = vpack.c.b16 %v1088, %v1086
      %v1135 = vpack.c.b16 %v1091, %v1089
      %v1136 = vpack.c.b16 %v1092, %v1090
      %v1137 = vpack.c.b16 %v1095, %v1093
      %v1138 = vpack.c.b16 %v1096, %v1094
      %v1139 = vpack.c.b16 %v1099, %v1097
      %v1140 = vpack.c.b16 %v1100, %v1098
      %v1141 = vpack.c.b16 %v1103, %v1101
      %v1142 = vpack.c.b16 %v1104, %v1102
      %v1143 = vpack.c.b16 %v1107, %v1105
      %v1144 = vpack.c.b16 %v1108, %v1106
      %v1145 = vpack.c.b16 %v1111, %v1109
      %v1146 = vpack.c.b16 %v1112, %v1110
      %v1147 = vpack.c.b16 %v1115, %v1113
      %v1148 = vpack.c.b16 %v1116, %v1114
      %1181 = vmatprep.subr.bf16.mxu0 %v1118
      %1182 = vmatpush1.bf16.msra.mxu0 %v1117
      %1183 = vmatprep.subr.bf16.mxu0 %v1120
      %1184 = vmatpush1.bf16.msra.mxu0 %v1119
      %1185 = vmatprep.subr.bf16.mxu0 %v1122
      %1186 = vmatpush1.bf16.msra.mxu0 %v1121
      %1187 = vmatprep.subr.bf16.mxu0 %v1124
      %1188 = vmatpush1.bf16.msra.mxu0 %v1123
      %1189 = vmatprep.subr.bf16.mxu0 %v1126
      %1190 = vmatpush1.bf16.msra.mxu0 %v1125
      %1191 = vmatprep.subr.bf16.mxu0 %v1128
      %1192 = vmatpush1.bf16.msra.mxu0 %v1127
      %1193 = vmatprep.subr.bf16.mxu0 %v1130
      %1194 = vmatpush1.bf16.msra.mxu0 %v1129
      %1195 = vmatprep.subr.bf16.mxu0 %v1132
      %1196 = vmatpush1.bf16.msra.mxu0 %v1131
      %1197 = vmatprep.subr.bf16.mxu0 %v1134
      %1198 = vmatpush1.bf16.msra.mxu0 %v1133
      %1199 = vmatprep.subr.bf16.mxu0 %v1136
      %1200 = vmatpush1.bf16.msra.mxu0 %v1135
      %1201 = vmatprep.subr.bf16.mxu0 %v1138
      %1202 = vmatpush1.bf16.msra.mxu0 %v1137
      %1203 = vmatprep.subr.bf16.mxu0 %v1140
      %1204 = vmatpush1.bf16.msra.mxu0 %v1139
      %1205 = vmatprep.subr.bf16.mxu0 %v1142
      %1206 = vmatpush1.bf16.msra.mxu0 %v1141
      %1207 = vmatprep.subr.bf16.mxu0 %v1144
      %1208 = vmatpush1.bf16.msra.mxu0 %v1143
      %1209 = vmatprep.subr.bf16.mxu0 %v1146
      %1210 = vmatpush1.bf16.msra.mxu0 %v1145
      %1211 = vmatprep.subr.bf16.mxu0 %v1148
      %1212 = vmatpush1.bf16.msra.mxu0 %v1147
      %1213 = vmatprep.mubr.bf16.mxu0 %v751
      %1214 = vmatmul.mubr.bf16.gmra.mrb[0].mxu0 %v750
      %v1215 = vpop.f32.mrb[0].mxu0
      %v1216 = vadd.f32 %v1013, %v1215
      %v1217 = vpop.f32.mrb[0].mxu0
      %v1218 = vadd.f32 %v1015, %v1217
      %v1219 = vpop.f32.mrb[0].mxu0
      %v1220 = vadd.f32 %v1017, %v1219
      %v1221 = vpop.f32.mrb[0].mxu0
      %v1222 = vadd.f32 %v1019, %v1221
      %1223 = vdwg.mxu0
      %v1224 = vpack.c.bf16 %v748, %v746
      %v1225 = vpack.c.bf16 %v749, %v747
      %v1226 = vld [vmem:[%s7] sm:$0xff]
      %v1227 = vld [vmem:[%s7 + $0x8] sm:$0xff]
      %v1228 = vld [vmem:[%s7 + $0x10] sm:$0xff]
      %v1229 = vld [vmem:[%s7 + $0x18] sm:$0xff]
      %v1230 = vld [vmem:[%s7 + $0x20] sm:$0xff]
      %v1231 = vld [vmem:[%s7 + $0x28] sm:$0xff]
      %v1232 = vld [vmem:[%s7 + $0x30] sm:$0xff]
      %v1233 = vld [vmem:[%s7 + $0x38] sm:$0xff]
      %v1234 = vld [vmem:[%s7 + $0x40] sm:$0xff]
      %v1235 = vld [vmem:[%s7 + $0x48] sm:$0xff]
      %v1236 = vld [vmem:[%s7 + $0x50] sm:$0xff]
      %v1237 = vld [vmem:[%s7 + $0x58] sm:$0xff]
      %v1238 = vld [vmem:[%s7 + $0x60] sm:$0xff]
      %v1239 = vld [vmem:[%s7 + $0x68] sm:$0xff]
      %v1240 = vld [vmem:[%s7 + $0x70] sm:$0xff]
      %v1241 = vld [vmem:[%s7 + $0x78] sm:$0xff]
      %v1242 = vld [vmem:[%s7 + $0x80] sm:$0xff]
      %v1243 = vld [vmem:[%s7 + $0x88] sm:$0xff]
      %v1244 = vld [vmem:[%s7 + $0x90] sm:$0xff]
      %v1245 = vld [vmem:[%s7 + $0x98] sm:$0xff]
      %v1246 = vld [vmem:[%s7 + $0xa0] sm:$0xff]
      %v1247 = vld [vmem:[%s7 + $0xa8] sm:$0xff]
      %v1248 = vld [vmem:[%s7 + $0xb0] sm:$0xff]
      %v1249 = vld [vmem:[%s7 + $0xb8] sm:$0xff]
      %v1250 = vld [vmem:[%s7 + $0xc0] sm:$0xff]
      %v1251 = vld [vmem:[%s7 + $0xc8] sm:$0xff]
      %v1252 = vld [vmem:[%s7 + $0xd0] sm:$0xff]
      %v1253 = vld [vmem:[%s7 + $0xd8] sm:$0xff]
      %v1254 = vld [vmem:[%s7 + $0xe0] sm:$0xff]
      %v1255 = vld [vmem:[%s7 + $0xe8] sm:$0xff]
      %v1256 = vld [vmem:[%s7 + $0xf0] sm:$0xff]
      %v1257 = vld [vmem:[%s7 + $0xf8] sm:$0xff]
      %v1290 = vunpack.c.l.b16 %v1226
      %v1291 = vunpack.c.h.b16 %v1226
      %v1292 = vunpack.c.l.b16 %v1227
      %v1293 = vunpack.c.h.b16 %v1227
      %v1294 = vunpack.c.l.b16 %v1228
      %v1295 = vunpack.c.h.b16 %v1228
      %v1296 = vunpack.c.l.b16 %v1229
      %v1297 = vunpack.c.h.b16 %v1229
      %v1298 = vunpack.c.l.b16 %v1230
      %v1299 = vunpack.c.h.b16 %v1230
      %v1300 = vunpack.c.l.b16 %v1231
      %v1301 = vunpack.c.h.b16 %v1231
      %v1302 = vunpack.c.l.b16 %v1232
      %v1303 = vunpack.c.h.b16 %v1232
      %v1304 = vunpack.c.l.b16 %v1233
      %v1305 = vunpack.c.h.b16 %v1233
      %v1306 = vunpack.c.l.b16 %v1234
      %v1307 = vunpack.c.h.b16 %v1234
      %v1308 = vunpack.c.l.b16 %v1235
      %v1309 = vunpack.c.h.b16 %v1235
      %v1310 = vunpack.c.l.b16 %v1236
      %v1311 = vunpack.c.h.b16 %v1236
      %v1312 = vunpack.c.l.b16 %v1237
      %v1313 = vunpack.c.h.b16 %v1237
      %v1314 = vunpack.c.l.b16 %v1238
      %v1315 = vunpack.c.h.b16 %v1238
      %v1316 = vunpack.c.l.b16 %v1239
      %v1317 = vunpack.c.h.b16 %v1239
      %v1318 = vunpack.c.l.b16 %v1240
      %v1319 = vunpack.c.h.b16 %v1240
      %v1320 = vunpack.c.l.b16 %v1241
      %v1321 = vunpack.c.h.b16 %v1241
      %v1322 = vunpack.c.l.b16 %v1242
      %v1323 = vunpack.c.h.b16 %v1242
      %v1324 = vunpack.c.l.b16 %v1243
      %v1325 = vunpack.c.h.b16 %v1243
      %v1326 = vunpack.c.l.b16 %v1244
      %v1327 = vunpack.c.h.b16 %v1244
      %v1328 = vunpack.c.l.b16 %v1245
      %v1329 = vunpack.c.h.b16 %v1245
      %v1330 = vunpack.c.l.b16 %v1246
      %v1331 = vunpack.c.h.b16 %v1246
      %v1332 = vunpack.c.l.b16 %v1247
      %v1333 = vunpack.c.h.b16 %v1247
      %v1334 = vunpack.c.l.b16 %v1248
      %v1335 = vunpack.c.h.b16 %v1248
      %v1336 = vunpack.c.l.b16 %v1249
      %v1337 = vunpack.c.h.b16 %v1249
      %v1338 = vunpack.c.l.b16 %v1250
      %v1339 = vunpack.c.h.b16 %v1250
      %v1340 = vunpack.c.l.b16 %v1251
      %v1341 = vunpack.c.h.b16 %v1251
      %v1342 = vunpack.c.l.b16 %v1252
      %v1343 = vunpack.c.h.b16 %v1252
      %v1344 = vunpack.c.l.b16 %v1253
      %v1345 = vunpack.c.h.b16 %v1253
      %v1346 = vunpack.c.l.b16 %v1254
      %v1347 = vunpack.c.h.b16 %v1254
      %v1348 = vunpack.c.l.b16 %v1255
      %v1349 = vunpack.c.h.b16 %v1255
      %v1350 = vunpack.c.l.b16 %v1256
      %v1351 = vunpack.c.h.b16 %v1256
      %v1352 = vunpack.c.l.b16 %v1257
      %v1353 = vunpack.c.h.b16 %v1257
      %v1354 = vpack.c.b16 %v1292, %v1290
      %v1355 = vpack.c.b16 %v1293, %v1291
      %v1356 = vpack.c.b16 %v1296, %v1294
      %v1357 = vpack.c.b16 %v1297, %v1295
      %v1358 = vpack.c.b16 %v1300, %v1298
      %v1359 = vpack.c.b16 %v1301, %v1299
      %v1360 = vpack.c.b16 %v1304, %v1302
      %v1361 = vpack.c.b16 %v1305, %v1303
      %v1362 = vpack.c.b16 %v1308, %v1306
      %v1363 = vpack.c.b16 %v1309, %v1307
      %v1364 = vpack.c.b16 %v1312, %v1310
      %v1365 = vpack.c.b16 %v1313, %v1311
      %v1366 = vpack.c.b16 %v1316, %v1314
      %v1367 = vpack.c.b16 %v1317, %v1315
      %v1368 = vpack.c.b16 %v1320, %v1318
      %v1369 = vpack.c.b16 %v1321, %v1319
      %v1370 = vpack.c.b16 %v1324, %v1322
      %v1371 = vpack.c.b16 %v1325, %v1323
      %v1372 = vpack.c.b16 %v1328, %v1326
      %v1373 = vpack.c.b16 %v1329, %v1327
      %v1374 = vpack.c.b16 %v1332, %v1330
      %v1375 = vpack.c.b16 %v1333, %v1331
      %v1376 = vpack.c.b16 %v1336, %v1334
      %v1377 = vpack.c.b16 %v1337, %v1335
      %v1378 = vpack.c.b16 %v1340, %v1338
      %v1379 = vpack.c.b16 %v1341, %v1339
      %v1380 = vpack.c.b16 %v1344, %v1342
      %v1381 = vpack.c.b16 %v1345, %v1343
      %v1382 = vpack.c.b16 %v1348, %v1346
      %v1383 = vpack.c.b16 %v1349, %v1347
      %v1384 = vpack.c.b16 %v1352, %v1350
      %v1385 = vpack.c.b16 %v1353, %v1351
      %1418 = vmatprep.subr.bf16.mxu0 %v1355
      %1419 = vmatpush1.bf16.msra.mxu0 %v1354
      %1420 = vmatprep.subr.bf16.mxu0 %v1357
      %1421 = vmatpush1.bf16.msra.mxu0 %v1356
      %1422 = vmatprep.subr.bf16.mxu0 %v1359
      %1423 = vmatpush1.bf16.msra.mxu0 %v1358
      %1424 = vmatprep.subr.bf16.mxu0 %v1361
      %1425 = vmatpush1.bf16.msra.mxu0 %v1360
      %1426 = vmatprep.subr.bf16.mxu0 %v1363
      %1427 = vmatpush1.bf16.msra.mxu0 %v1362
      %1428 = vmatprep.subr.bf16.mxu0 %v1365
      %1429 = vmatpush1.bf16.msra.mxu0 %v1364
      %1430 = vmatprep.subr.bf16.mxu0 %v1367
      %1431 = vmatpush1.bf16.msra.mxu0 %v1366
      %1432 = vmatprep.subr.bf16.mxu0 %v1369
      %1433 = vmatpush1.bf16.msra.mxu0 %v1368
      %1434 = vmatprep.subr.bf16.mxu0 %v1371
      %1435 = vmatpush1.bf16.msra.mxu0 %v1370
      %1436 = vmatprep.subr.bf16.mxu0 %v1373
      %1437 = vmatpush1.bf16.msra.mxu0 %v1372
      %1438 = vmatprep.subr.bf16.mxu0 %v1375
      %1439 = vmatpush1.bf16.msra.mxu0 %v1374
      %1440 = vmatprep.subr.bf16.mxu0 %v1377
      %1441 = vmatpush1.bf16.msra.mxu0 %v1376
      %1442 = vmatprep.subr.bf16.mxu0 %v1379
      %1443 = vmatpush1.bf16.msra.mxu0 %v1378
      %1444 = vmatprep.subr.bf16.mxu0 %v1381
      %1445 = vmatpush1.bf16.msra.mxu0 %v1380
      %1446 = vmatprep.subr.bf16.mxu0 %v1383
      %1447 = vmatpush1.bf16.msra.mxu0 %v1382
      %1448 = vmatprep.subr.bf16.mxu0 %v1385
      %1449 = vmatpush1.bf16.msra.mxu0 %v1384
      %1450 = vmatprep.mubr.bf16.mxu0 %v1225
      %1451 = vmatmul.mubr.bf16.gmra.mrb[0].mxu0 %v1224
      %v1452 = vpop.f32.mrb[0].mxu0
      %v1453 = vadd.f32 0.0, %v1452
      %v1454 = vpop.f32.mrb[0].mxu0
      %v1455 = vadd.f32 0.0, %v1454
      %v1456 = vpop.f32.mrb[0].mxu0
      %v1457 = vadd.f32 0.0, %v1456
      %v1458 = vpop.f32.mrb[0].mxu0
      %v1459 = vadd.f32 0.0, %v1458
      %1460 = vdwg.mxu0
      %v1461 = vadd.f32 %v1216, %v1453
      %v1462 = vadd.f32 %v1218, %v1455
      %v1463 = vadd.f32 %v1220, %v1457
      %v1464 = vadd.f32 %v1222, %v1459
      %v1465 = vld [vmem:[%s8] sm:$0x3]
      %v1467 = vlaneseq
      %v1468 = vshrl.u32 %v1467, 7
      %v1469 = vsub.s32 0, %v1468
      %v1470 = vrot.slane %v1465, %v1469
      %v1471 = vlaneseq
      %v1472 = vshrl.u32 %v1471, 7
      %v1473 = vsub.s32 1, %v1472
      %v1474 = vrot.slane %v1465, %v1473
      %v1477 = vadd.f32 %v1461, %v1470
      %v1478 = vadd.f32 %v1462, %v1474
      %v1479 = vadd.f32 %v1463, %v1470
      %v1480 = vadd.f32 %v1464, %v1474
      %v1481 = vmax.f32 %v1477, 0.0
      %v1482 = vmax.f32 %v1478, 0.0
      %v1483 = vmax.f32 %v1479, 0.0
      %v1484 = vmax.f32 %v1480, 0.0
      %v1485 = vlaneseq
      %v1486 = vand.u32 %v1485, 127
      %v1487 = vadd.s32 %v1486, 128
      %vm1488 = vcmp.lt.s32.totalorder %v1486, 8
      %vm1489 = vcmp.lt.s32.totalorder %v1487, 8
      %1490 = vrot.lane.b32.xlu0 %v1481, 8
      %v1491 = vpop.permute.xlu0 %1490
      %1492 = vrot.lane.b32.xlu0 %v1483, 8
      %v1493 = vpop.permute.xlu0 %1492
      %1494 = vrot.lane.b32.xlu0 %v1482, 8
      %v1495 = vpop.permute.xlu0 %1494
      %1496 = vrot.lane.b32.xlu0 %v1484, 8
      %v1497 = vpop.permute.xlu0 %1496
      %v1498 = vsel %vm1488, %v1491, %v1495
      %v1499 = vsel %vm1488, %v1493, %v1497
      %v1500 = vsel %vm1488, %v1495, %v1491
      %v1501 = vsel %vm1488, %v1497, %v1493
      %v1502 = vsel %vm1488, 1, 0
      %v1503 = vsel %vm1489, 1, 0
      %vm1504 = vcmp.eq.s32.totalorder %v1502, 1
      %vm1505 = vcmp.eq.s32.totalorder %v1503, 1
      %v1506 = vsel %vm1504, 0.0, %v1500
      %v1507 = vsel %vm1505, 0.0, %v1498
      %v1508 = vsel %vm1504, 0.0, %v1501
      %v1509 = vsel %vm1505, 0.0, %v1499
      %vm1510 = vcmp.ge.s32.totalorder %v1486, 248
      %vm1511 = vcmp.ge.s32.totalorder %v1487, 248
      %1512 = vrot.lane.b32.xlu0 %v1481, 120
      %v1513 = vpop.permute.xlu0 %1512
      %1514 = vrot.lane.b32.xlu0 %v1483, 120
      %v1515 = vpop.permute.xlu0 %1514
      %1516 = vrot.lane.b32.xlu0 %v1482, 120
      %v1517 = vpop.permute.xlu0 %1516
      %1518 = vrot.lane.b32.xlu0 %v1484, 120
      %v1519 = vpop.permute.xlu0 %1518
      %vm1520 = vcmp.lt.s32.totalorder %v1486, 120
      %v1521 = vsel %vm1520, %v1513, %v1517
      %v1522 = vsel %vm1520, %v1515, %v1519
      %v1523 = vsel %vm1520, %v1517, %v1513
      %v1524 = vsel %vm1520, %v1519, %v1515
      %v1525 = vsel %vm1510, 1, 0
      %v1526 = vsel %vm1511, 1, 0
      %vm1527 = vcmp.eq.s32.totalorder %v1525, 1
      %vm1528 = vcmp.eq.s32.totalorder %v1526, 1
      %v1529 = vsel %vm1527, 0.0, %v1521
      %v1530 = vsel %vm1528, 0.0, %v1523
      %v1531 = vsel %vm1527, 0.0, %v1522
      %v1532 = vsel %vm1528, 0.0, %v1524
      %v1533 = vpack.c.bf16 %v1483, %v1481
      %v1534 = vpack.c.bf16 %v1484, %v1482
      %v1535 = vld [vmem:[%s10] sm:$0xff]
      %v1536 = vld [vmem:[%s10 + $0x8] sm:$0xff]
      %v1537 = vld [vmem:[%s10 + $0x10] sm:$0xff]
      %v1538 = vld [vmem:[%s10 + $0x18] sm:$0xff]
      %v1539 = vld [vmem:[%s10 + $0x20] sm:$0xff]
      %v1540 = vld [vmem:[%s10 + $0x28] sm:$0xff]
      %v1541 = vld [vmem:[%s10 + $0x30] sm:$0xff]
      %v1542 = vld [vmem:[%s10 + $0x38] sm:$0xff]
      %v1543 = vld [vmem:[%s10 + $0x40] sm:$0xff]
      %v1544 = vld [vmem:[%s10 + $0x48] sm:$0xff]
      %v1545 = vld [vmem:[%s10 + $0x50] sm:$0xff]
      %v1546 = vld [vmem:[%s10 + $0x58] sm:$0xff]
      %v1547 = vld [vmem:[%s10 + $0x60] sm:$0xff]
      %v1548 = vld [vmem:[%s10 + $0x68] sm:$0xff]
      %v1549 = vld [vmem:[%s10 + $0x70] sm:$0xff]
      %v1550 = vld [vmem:[%s10 + $0x78] sm:$0xff]
      %v1551 = vld [vmem:[%s10 + $0x80] sm:$0xff]
      %v1552 = vld [vmem:[%s10 + $0x88] sm:$0xff]
      %v1553 = vld [vmem:[%s10 + $0x90] sm:$0xff]
      %v1554 = vld [vmem:[%s10 + $0x98] sm:$0xff]
      %v1555 = vld [vmem:[%s10 + $0xa0] sm:$0xff]
      %v1556 = vld [vmem:[%s10 + $0xa8] sm:$0xff]
      %v1557 = vld [vmem:[%s10 + $0xb0] sm:$0xff]
      %v1558 = vld [vmem:[%s10 + $0xb8] sm:$0xff]
      %v1559 = vld [vmem:[%s10 + $0xc0] sm:$0xff]
      %v1560 = vld [vmem:[%s10 + $0xc8] sm:$0xff]
      %v1561 = vld [vmem:[%s10 + $0xd0] sm:$0xff]
      %v1562 = vld [vmem:[%s10 + $0xd8] sm:$0xff]
      %v1563 = vld [vmem:[%s10 + $0xe0] sm:$0xff]
      %v1564 = vld [vmem:[%s10 + $0xe8] sm:$0xff]
      %v1565 = vld [vmem:[%s10 + $0xf0] sm:$0xff]
      %v1566 = vld [vmem:[%s10 + $0xf8] sm:$0xff]
      %v1567 = vpack.c.bf16 %v1508, %v1506
      %v1568 = vpack.c.bf16 %v1509, %v1507
      %v1569 = vld [vmem:[%s9] sm:$0xff]
      %v1570 = vld [vmem:[%s9 + $0x8] sm:$0xff]
      %v1571 = vld [vmem:[%s9 + $0x10] sm:$0xff]
      %v1572 = vld [vmem:[%s9 + $0x18] sm:$0xff]
      %v1573 = vld [vmem:[%s9 + $0x20] sm:$0xff]
      %v1574 = vld [vmem:[%s9 + $0x28] sm:$0xff]
      %v1575 = vld [vmem:[%s9 + $0x30] sm:$0xff]
      %v1576 = vld [vmem:[%s9 + $0x38] sm:$0xff]
      %v1577 = vld [vmem:[%s9 + $0x40] sm:$0xff]
      %v1578 = vld [vmem:[%s9 + $0x48] sm:$0xff]
      %v1579 = vld [vmem:[%s9 + $0x50] sm:$0xff]
      %v1580 = vld [vmem:[%s9 + $0x58] sm:$0xff]
      %v1581 = vld [vmem:[%s9 + $0x60] sm:$0xff]
      %v1582 = vld [vmem:[%s9 + $0x68] sm:$0xff]
      %v1583 = vld [vmem:[%s9 + $0x70] sm:$0xff]
      %v1584 = vld [vmem:[%s9 + $0x78] sm:$0xff]
      %v1585 = vld [vmem:[%s9 + $0x80] sm:$0xff]
      %v1586 = vld [vmem:[%s9 + $0x88] sm:$0xff]
      %v1587 = vld [vmem:[%s9 + $0x90] sm:$0xff]
      %v1588 = vld [vmem:[%s9 + $0x98] sm:$0xff]
      %v1589 = vld [vmem:[%s9 + $0xa0] sm:$0xff]
      %v1590 = vld [vmem:[%s9 + $0xa8] sm:$0xff]
      %v1591 = vld [vmem:[%s9 + $0xb0] sm:$0xff]
      %v1592 = vld [vmem:[%s9 + $0xb8] sm:$0xff]
      %v1593 = vld [vmem:[%s9 + $0xc0] sm:$0xff]
      %v1594 = vld [vmem:[%s9 + $0xc8] sm:$0xff]
      %v1595 = vld [vmem:[%s9 + $0xd0] sm:$0xff]
      %v1596 = vld [vmem:[%s9 + $0xd8] sm:$0xff]
      %v1597 = vld [vmem:[%s9 + $0xe0] sm:$0xff]
      %v1598 = vld [vmem:[%s9 + $0xe8] sm:$0xff]
      %v1599 = vld [vmem:[%s9 + $0xf0] sm:$0xff]
      %v1600 = vld [vmem:[%s9 + $0xf8] sm:$0xff]
      %v1633 = vunpack.c.l.b16 %v1569
      %v1634 = vunpack.c.h.b16 %v1569
      %v1635 = vunpack.c.l.b16 %v1570
      %v1636 = vunpack.c.h.b16 %v1570
      %v1637 = vunpack.c.l.b16 %v1571
      %v1638 = vunpack.c.h.b16 %v1571
      %v1639 = vunpack.c.l.b16 %v1572
      %v1640 = vunpack.c.h.b16 %v1572
      %v1641 = vunpack.c.l.b16 %v1573
      %v1642 = vunpack.c.h.b16 %v1573
      %v1643 = vunpack.c.l.b16 %v1574
      %v1644 = vunpack.c.h.b16 %v1574
      %v1645 = vunpack.c.l.b16 %v1575
      %v1646 = vunpack.c.h.b16 %v1575
      %v1647 = vunpack.c.l.b16 %v1576
      %v1648 = vunpack.c.h.b16 %v1576
      %v1649 = vunpack.c.l.b16 %v1577
      %v1650 = vunpack.c.h.b16 %v1577
      %v1651 = vunpack.c.l.b16 %v1578
      %v1652 = vunpack.c.h.b16 %v1578
      %v1653 = vunpack.c.l.b16 %v1579
      %v1654 = vunpack.c.h.b16 %v1579
      %v1655 = vunpack.c.l.b16 %v1580
      %v1656 = vunpack.c.h.b16 %v1580
      %v1657 = vunpack.c.l.b16 %v1581
      %v1658 = vunpack.c.h.b16 %v1581
      %v1659 = vunpack.c.l.b16 %v1582
      %v1660 = vunpack.c.h.b16 %v1582
      %v1661 = vunpack.c.l.b16 %v1583
      %v1662 = vunpack.c.h.b16 %v1583
      %v1663 = vunpack.c.l.b16 %v1584
      %v1664 = vunpack.c.h.b16 %v1584
      %v1665 = vunpack.c.l.b16 %v1585
      %v1666 = vunpack.c.h.b16 %v1585
      %v1667 = vunpack.c.l.b16 %v1586
      %v1668 = vunpack.c.h.b16 %v1586
      %v1669 = vunpack.c.l.b16 %v1587
      %v1670 = vunpack.c.h.b16 %v1587
      %v1671 = vunpack.c.l.b16 %v1588
      %v1672 = vunpack.c.h.b16 %v1588
      %v1673 = vunpack.c.l.b16 %v1589
      %v1674 = vunpack.c.h.b16 %v1589
      %v1675 = vunpack.c.l.b16 %v1590
      %v1676 = vunpack.c.h.b16 %v1590
      %v1677 = vunpack.c.l.b16 %v1591
      %v1678 = vunpack.c.h.b16 %v1591
      %v1679 = vunpack.c.l.b16 %v1592
      %v1680 = vunpack.c.h.b16 %v1592
      %v1681 = vunpack.c.l.b16 %v1593
      %v1682 = vunpack.c.h.b16 %v1593
      %v1683 = vunpack.c.l.b16 %v1594
      %v1684 = vunpack.c.h.b16 %v1594
      %v1685 = vunpack.c.l.b16 %v1595
      %v1686 = vunpack.c.h.b16 %v1595
      %v1687 = vunpack.c.l.b16 %v1596
      %v1688 = vunpack.c.h.b16 %v1596
      %v1689 = vunpack.c.l.b16 %v1597
      %v1690 = vunpack.c.h.b16 %v1597
      %v1691 = vunpack.c.l.b16 %v1598
      %v1692 = vunpack.c.h.b16 %v1598
      %v1693 = vunpack.c.l.b16 %v1599
      %v1694 = vunpack.c.h.b16 %v1599
      %v1695 = vunpack.c.l.b16 %v1600
      %v1696 = vunpack.c.h.b16 %v1600
      %v1697 = vpack.c.b16 %v1635, %v1633
      %v1698 = vpack.c.b16 %v1636, %v1634
      %v1699 = vpack.c.b16 %v1639, %v1637
      %v1700 = vpack.c.b16 %v1640, %v1638
      %v1701 = vpack.c.b16 %v1643, %v1641
      %v1702 = vpack.c.b16 %v1644, %v1642
      %v1703 = vpack.c.b16 %v1647, %v1645
      %v1704 = vpack.c.b16 %v1648, %v1646
      %v1705 = vpack.c.b16 %v1651, %v1649
      %v1706 = vpack.c.b16 %v1652, %v1650
      %v1707 = vpack.c.b16 %v1655, %v1653
      %v1708 = vpack.c.b16 %v1656, %v1654
      %v1709 = vpack.c.b16 %v1659, %v1657
      %v1710 = vpack.c.b16 %v1660, %v1658
      %v1711 = vpack.c.b16 %v1663, %v1661
      %v1712 = vpack.c.b16 %v1664, %v1662
      %v1713 = vpack.c.b16 %v1667, %v1665
      %v1714 = vpack.c.b16 %v1668, %v1666
      %v1715 = vpack.c.b16 %v1671, %v1669
      %v1716 = vpack.c.b16 %v1672, %v1670
      %v1717 = vpack.c.b16 %v1675, %v1673
      %v1718 = vpack.c.b16 %v1676, %v1674
      %v1719 = vpack.c.b16 %v1679, %v1677
      %v1720 = vpack.c.b16 %v1680, %v1678
      %v1721 = vpack.c.b16 %v1683, %v1681
      %v1722 = vpack.c.b16 %v1684, %v1682
      %v1723 = vpack.c.b16 %v1687, %v1685
      %v1724 = vpack.c.b16 %v1688, %v1686
      %v1725 = vpack.c.b16 %v1691, %v1689
      %v1726 = vpack.c.b16 %v1692, %v1690
      %v1727 = vpack.c.b16 %v1695, %v1693
      %v1728 = vpack.c.b16 %v1696, %v1694
      %1761 = vmatprep.subr.bf16.mxu0 %v1698
      %1762 = vmatpush1.bf16.msra.mxu0 %v1697
      %1763 = vmatprep.subr.bf16.mxu0 %v1700
      %1764 = vmatpush1.bf16.msra.mxu0 %v1699
      %1765 = vmatprep.subr.bf16.mxu0 %v1702
      %1766 = vmatpush1.bf16.msra.mxu0 %v1701
      %1767 = vmatprep.subr.bf16.mxu0 %v1704
      %1768 = vmatpush1.bf16.msra.mxu0 %v1703
      %1769 = vmatprep.subr.bf16.mxu0 %v1706
      %1770 = vmatpush1.bf16.msra.mxu0 %v1705
      %1771 = vmatprep.subr.bf16.mxu0 %v1708
      %1772 = vmatpush1.bf16.msra.mxu0 %v1707
      %1773 = vmatprep.subr.bf16.mxu0 %v1710
      %1774 = vmatpush1.bf16.msra.mxu0 %v1709
      %1775 = vmatprep.subr.bf16.mxu0 %v1712
      %1776 = vmatpush1.bf16.msra.mxu0 %v1711
      %1777 = vmatprep.subr.bf16.mxu0 %v1714
      %1778 = vmatpush1.bf16.msra.mxu0 %v1713
      %1779 = vmatprep.subr.bf16.mxu0 %v1716
      %1780 = vmatpush1.bf16.msra.mxu0 %v1715
      %1781 = vmatprep.subr.bf16.mxu0 %v1718
      %1782 = vmatpush1.bf16.msra.mxu0 %v1717
      %1783 = vmatprep.subr.bf16.mxu0 %v1720
      %1784 = vmatpush1.bf16.msra.mxu0 %v1719
      %1785 = vmatprep.subr.bf16.mxu0 %v1722
      %1786 = vmatpush1.bf16.msra.mxu0 %v1721
      %1787 = vmatprep.subr.bf16.mxu0 %v1724
      %1788 = vmatpush1.bf16.msra.mxu0 %v1723
      %1789 = vmatprep.subr.bf16.mxu0 %v1726
      %1790 = vmatpush1.bf16.msra.mxu0 %v1725
      %1791 = vmatprep.subr.bf16.mxu0 %v1728
      %1792 = vmatpush1.bf16.msra.mxu0 %v1727
      %1793 = vmatprep.mubr.bf16.mxu0 %v1568
      %1794 = vmatmul.mubr.bf16.gmra.mrb[0].mxu0 %v1567
      %v1795 = vpop.f32.mrb[0].mxu0
      %v1796 = vadd.f32 0.0, %v1795
      %v1797 = vpop.f32.mrb[0].mxu0
      %v1798 = vadd.f32 0.0, %v1797
      %v1799 = vpop.f32.mrb[0].mxu0
      %v1800 = vadd.f32 0.0, %v1799
      %v1801 = vpop.f32.mrb[0].mxu0
      %v1802 = vadd.f32 0.0, %v1801
      %1803 = vdwg.mxu0
      %v1836 = vunpack.c.l.b16 %v1535
      %v1837 = vunpack.c.h.b16 %v1535
      %v1838 = vunpack.c.l.b16 %v1536
      %v1839 = vunpack.c.h.b16 %v1536
      %v1840 = vunpack.c.l.b16 %v1537
      %v1841 = vunpack.c.h.b16 %v1537
      %v1842 = vunpack.c.l.b16 %v1538
      %v1843 = vunpack.c.h.b16 %v1538
      %v1844 = vunpack.c.l.b16 %v1539
      %v1845 = vunpack.c.h.b16 %v1539
      %v1846 = vunpack.c.l.b16 %v1540
      %v1847 = vunpack.c.h.b16 %v1540
      %v1848 = vunpack.c.l.b16 %v1541
      %v1849 = vunpack.c.h.b16 %v1541
      %v1850 = vunpack.c.l.b16 %v1542
      %v1851 = vunpack.c.h.b16 %v1542
      %v1852 = vunpack.c.l.b16 %v1543
      %v1853 = vunpack.c.h.b16 %v1543
      %v1854 = vunpack.c.l.b16 %v1544
      %v1855 = vunpack.c.h.b16 %v1544
      %v1856 = vunpack.c.l.b16 %v1545
      %v1857 = vunpack.c.h.b16 %v1545
      %v1858 = vunpack.c.l.b16 %v1546
      %v1859 = vunpack.c.h.b16 %v1546
      %v1860 = vunpack.c.l.b16 %v1547
      %v1861 = vunpack.c.h.b16 %v1547
      %v1862 = vunpack.c.l.b16 %v1548
      %v1863 = vunpack.c.h.b16 %v1548
      %v1864 = vunpack.c.l.b16 %v1549
      %v1865 = vunpack.c.h.b16 %v1549
      %v1866 = vunpack.c.l.b16 %v1550
      %v1867 = vunpack.c.h.b16 %v1550
      %v1868 = vunpack.c.l.b16 %v1551
      %v1869 = vunpack.c.h.b16 %v1551
      %v1870 = vunpack.c.l.b16 %v1552
      %v1871 = vunpack.c.h.b16 %v1552
      %v1872 = vunpack.c.l.b16 %v1553
      %v1873 = vunpack.c.h.b16 %v1553
      %v1874 = vunpack.c.l.b16 %v1554
      %v1875 = vunpack.c.h.b16 %v1554
      %v1876 = vunpack.c.l.b16 %v1555
      %v1877 = vunpack.c.h.b16 %v1555
      %v1878 = vunpack.c.l.b16 %v1556
      %v1879 = vunpack.c.h.b16 %v1556
      %v1880 = vunpack.c.l.b16 %v1557
      %v1881 = vunpack.c.h.b16 %v1557
      %v1882 = vunpack.c.l.b16 %v1558
      %v1883 = vunpack.c.h.b16 %v1558
      %v1884 = vunpack.c.l.b16 %v1559
      %v1885 = vunpack.c.h.b16 %v1559
      %v1886 = vunpack.c.l.b16 %v1560
      %v1887 = vunpack.c.h.b16 %v1560
      %v1888 = vunpack.c.l.b16 %v1561
      %v1889 = vunpack.c.h.b16 %v1561
      %v1890 = vunpack.c.l.b16 %v1562
      %v1891 = vunpack.c.h.b16 %v1562
      %v1892 = vunpack.c.l.b16 %v1563
      %v1893 = vunpack.c.h.b16 %v1563
      %v1894 = vunpack.c.l.b16 %v1564
      %v1895 = vunpack.c.h.b16 %v1564
      %v1896 = vunpack.c.l.b16 %v1565
      %v1897 = vunpack.c.h.b16 %v1565
      %v1898 = vunpack.c.l.b16 %v1566
      %v1899 = vunpack.c.h.b16 %v1566
      %v1900 = vpack.c.b16 %v1838, %v1836
      %v1901 = vpack.c.b16 %v1839, %v1837
      %v1902 = vpack.c.b16 %v1842, %v1840
      %v1903 = vpack.c.b16 %v1843, %v1841
      %v1904 = vpack.c.b16 %v1846, %v1844
      %v1905 = vpack.c.b16 %v1847, %v1845
      %v1906 = vpack.c.b16 %v1850, %v1848
      %v1907 = vpack.c.b16 %v1851, %v1849
      %v1908 = vpack.c.b16 %v1854, %v1852
      %v1909 = vpack.c.b16 %v1855, %v1853
      %v1910 = vpack.c.b16 %v1858, %v1856
      %v1911 = vpack.c.b16 %v1859, %v1857
      %v1912 = vpack.c.b16 %v1862, %v1860
      %v1913 = vpack.c.b16 %v1863, %v1861
      %v1914 = vpack.c.b16 %v1866, %v1864
      %v1915 = vpack.c.b16 %v1867, %v1865
      %v1916 = vpack.c.b16 %v1870, %v1868
      %v1917 = vpack.c.b16 %v1871, %v1869
      %v1918 = vpack.c.b16 %v1874, %v1872
      %v1919 = vpack.c.b16 %v1875, %v1873
      %v1920 = vpack.c.b16 %v1878, %v1876
      %v1921 = vpack.c.b16 %v1879, %v1877
      %v1922 = vpack.c.b16 %v1882, %v1880
      %v1923 = vpack.c.b16 %v1883, %v1881
      %v1924 = vpack.c.b16 %v1886, %v1884
      %v1925 = vpack.c.b16 %v1887, %v1885
      %v1926 = vpack.c.b16 %v1890, %v1888
      %v1927 = vpack.c.b16 %v1891, %v1889
      %v1928 = vpack.c.b16 %v1894, %v1892
      %v1929 = vpack.c.b16 %v1895, %v1893
      %v1930 = vpack.c.b16 %v1898, %v1896
      %v1931 = vpack.c.b16 %v1899, %v1897
      %1964 = vmatprep.subr.bf16.mxu0 %v1901
      %1965 = vmatpush1.bf16.msra.mxu0 %v1900
      %1966 = vmatprep.subr.bf16.mxu0 %v1903
      %1967 = vmatpush1.bf16.msra.mxu0 %v1902
      %1968 = vmatprep.subr.bf16.mxu0 %v1905
      %1969 = vmatpush1.bf16.msra.mxu0 %v1904
      %1970 = vmatprep.subr.bf16.mxu0 %v1907
      %1971 = vmatpush1.bf16.msra.mxu0 %v1906
      %1972 = vmatprep.subr.bf16.mxu0 %v1909
      %1973 = vmatpush1.bf16.msra.mxu0 %v1908
      %1974 = vmatprep.subr.bf16.mxu0 %v1911
      %1975 = vmatpush1.bf16.msra.mxu0 %v1910
      %1976 = vmatprep.subr.bf16.mxu0 %v1913
      %1977 = vmatpush1.bf16.msra.mxu0 %v1912
      %1978 = vmatprep.subr.bf16.mxu0 %v1915
      %1979 = vmatpush1.bf16.msra.mxu0 %v1914
      %1980 = vmatprep.subr.bf16.mxu0 %v1917
      %1981 = vmatpush1.bf16.msra.mxu0 %v1916
      %1982 = vmatprep.subr.bf16.mxu0 %v1919
      %1983 = vmatpush1.bf16.msra.mxu0 %v1918
      %1984 = vmatprep.subr.bf16.mxu0 %v1921
      %1985 = vmatpush1.bf16.msra.mxu0 %v1920
      %1986 = vmatprep.subr.bf16.mxu0 %v1923
      %1987 = vmatpush1.bf16.msra.mxu0 %v1922
      %1988 = vmatprep.subr.bf16.mxu0 %v1925
      %1989 = vmatpush1.bf16.msra.mxu0 %v1924
      %1990 = vmatprep.subr.bf16.mxu0 %v1927
      %1991 = vmatpush1.bf16.msra.mxu0 %v1926
      %1992 = vmatprep.subr.bf16.mxu0 %v1929
      %1993 = vmatpush1.bf16.msra.mxu0 %v1928
      %1994 = vmatprep.subr.bf16.mxu0 %v1931
      %1995 = vmatpush1.bf16.msra.mxu0 %v1930
      %1996 = vmatprep.mubr.bf16.mxu0 %v1534
      %1997 = vmatmul.mubr.bf16.gmra.mrb[0].mxu0 %v1533
      %v1998 = vpop.f32.mrb[0].mxu0
      %v1999 = vadd.f32 %v1796, %v1998
      %v2000 = vpop.f32.mrb[0].mxu0
      %v2001 = vadd.f32 %v1798, %v2000
      %v2002 = vpop.f32.mrb[0].mxu0
      %v2003 = vadd.f32 %v1800, %v2002
      %v2004 = vpop.f32.mrb[0].mxu0
      %v2005 = vadd.f32 %v1802, %v2004
      %2006 = vdwg.mxu0
      %v2007 = vpack.c.bf16 %v1531, %v1529
      %v2008 = vpack.c.bf16 %v1532, %v1530
      %v2009 = vld [vmem:[%s11] sm:$0xff]
      %v2010 = vld [vmem:[%s11 + $0x8] sm:$0xff]
      %v2011 = vld [vmem:[%s11 + $0x10] sm:$0xff]
      %v2012 = vld [vmem:[%s11 + $0x18] sm:$0xff]
      %v2013 = vld [vmem:[%s11 + $0x20] sm:$0xff]
      %v2014 = vld [vmem:[%s11 + $0x28] sm:$0xff]
      %v2015 = vld [vmem:[%s11 + $0x30] sm:$0xff]
      %v2016 = vld [vmem:[%s11 + $0x38] sm:$0xff]
      %v2017 = vld [vmem:[%s11 + $0x40] sm:$0xff]
      %v2018 = vld [vmem:[%s11 + $0x48] sm:$0xff]
      %v2019 = vld [vmem:[%s11 + $0x50] sm:$0xff]
      %v2020 = vld [vmem:[%s11 + $0x58] sm:$0xff]
      %v2021 = vld [vmem:[%s11 + $0x60] sm:$0xff]
      %v2022 = vld [vmem:[%s11 + $0x68] sm:$0xff]
      %v2023 = vld [vmem:[%s11 + $0x70] sm:$0xff]
      %v2024 = vld [vmem:[%s11 + $0x78] sm:$0xff]
      %v2025 = vld [vmem:[%s11 + $0x80] sm:$0xff]
      %v2026 = vld [vmem:[%s11 + $0x88] sm:$0xff]
      %v2027 = vld [vmem:[%s11 + $0x90] sm:$0xff]
      %v2028 = vld [vmem:[%s11 + $0x98] sm:$0xff]
      %v2029 = vld [vmem:[%s11 + $0xa0] sm:$0xff]
      %v2030 = vld [vmem:[%s11 + $0xa8] sm:$0xff]
      %v2031 = vld [vmem:[%s11 + $0xb0] sm:$0xff]
      %v2032 = vld [vmem:[%s11 + $0xb8] sm:$0xff]
      %v2033 = vld [vmem:[%s11 + $0xc0] sm:$0xff]
      %v2034 = vld [vmem:[%s11 + $0xc8] sm:$0xff]
      %v2035 = vld [vmem:[%s11 + $0xd0] sm:$0xff]
      %v2036 = vld [vmem:[%s11 + $0xd8] sm:$0xff]
      %v2037 = vld [vmem:[%s11 + $0xe0] sm:$0xff]
      %v2038 = vld [vmem:[%s11 + $0xe8] sm:$0xff]
      %v2039 = vld [vmem:[%s11 + $0xf0] sm:$0xff]
      %v2040 = vld [vmem:[%s11 + $0xf8] sm:$0xff]
      %v2073 = vunpack.c.l.b16 %v2009
      %v2074 = vunpack.c.h.b16 %v2009
      %v2075 = vunpack.c.l.b16 %v2010
      %v2076 = vunpack.c.h.b16 %v2010
      %v2077 = vunpack.c.l.b16 %v2011
      %v2078 = vunpack.c.h.b16 %v2011
      %v2079 = vunpack.c.l.b16 %v2012
      %v2080 = vunpack.c.h.b16 %v2012
      %v2081 = vunpack.c.l.b16 %v2013
      %v2082 = vunpack.c.h.b16 %v2013
      %v2083 = vunpack.c.l.b16 %v2014
      %v2084 = vunpack.c.h.b16 %v2014
      %v2085 = vunpack.c.l.b16 %v2015
      %v2086 = vunpack.c.h.b16 %v2015
      %v2087 = vunpack.c.l.b16 %v2016
      %v2088 = vunpack.c.h.b16 %v2016
      %v2089 = vunpack.c.l.b16 %v2017
      %v2090 = vunpack.c.h.b16 %v2017
      %v2091 = vunpack.c.l.b16 %v2018
      %v2092 = vunpack.c.h.b16 %v2018
      %v2093 = vunpack.c.l.b16 %v2019
      %v2094 = vunpack.c.h.b16 %v2019
      %v2095 = vunpack.c.l.b16 %v2020
      %v2096 = vunpack.c.h.b16 %v2020
      %v2097 = vunpack.c.l.b16 %v2021
      %v2098 = vunpack.c.h.b16 %v2021
      %v2099 = vunpack.c.l.b16 %v2022
      %v2100 = vunpack.c.h.b16 %v2022
      %v2101 = vunpack.c.l.b16 %v2023
      %v2102 = vunpack.c.h.b16 %v2023
      %v2103 = vunpack.c.l.b16 %v2024
      %v2104 = vunpack.c.h.b16 %v2024
      %v2105 = vunpack.c.l.b16 %v2025
      %v2106 = vunpack.c.h.b16 %v2025
      %v2107 = vunpack.c.l.b16 %v2026
      %v2108 = vunpack.c.h.b16 %v2026
      %v2109 = vunpack.c.l.b16 %v2027
      %v2110 = vunpack.c.h.b16 %v2027
      %v2111 = vunpack.c.l.b16 %v2028
      %v2112 = vunpack.c.h.b16 %v2028
      %v2113 = vunpack.c.l.b16 %v2029
      %v2114 = vunpack.c.h.b16 %v2029
      %v2115 = vunpack.c.l.b16 %v2030
      %v2116 = vunpack.c.h.b16 %v2030
      %v2117 = vunpack.c.l.b16 %v2031
      %v2118 = vunpack.c.h.b16 %v2031
      %v2119 = vunpack.c.l.b16 %v2032
      %v2120 = vunpack.c.h.b16 %v2032
      %v2121 = vunpack.c.l.b16 %v2033
      %v2122 = vunpack.c.h.b16 %v2033
      %v2123 = vunpack.c.l.b16 %v2034
      %v2124 = vunpack.c.h.b16 %v2034
      %v2125 = vunpack.c.l.b16 %v2035
      %v2126 = vunpack.c.h.b16 %v2035
      %v2127 = vunpack.c.l.b16 %v2036
      %v2128 = vunpack.c.h.b16 %v2036
      %v2129 = vunpack.c.l.b16 %v2037
      %v2130 = vunpack.c.h.b16 %v2037
      %v2131 = vunpack.c.l.b16 %v2038
      %v2132 = vunpack.c.h.b16 %v2038
      %v2133 = vunpack.c.l.b16 %v2039
      %v2134 = vunpack.c.h.b16 %v2039
      %v2135 = vunpack.c.l.b16 %v2040
      %v2136 = vunpack.c.h.b16 %v2040
      %v2137 = vpack.c.b16 %v2075, %v2073
      %v2138 = vpack.c.b16 %v2076, %v2074
      %v2139 = vpack.c.b16 %v2079, %v2077
      %v2140 = vpack.c.b16 %v2080, %v2078
      %v2141 = vpack.c.b16 %v2083, %v2081
      %v2142 = vpack.c.b16 %v2084, %v2082
      %v2143 = vpack.c.b16 %v2087, %v2085
      %v2144 = vpack.c.b16 %v2088, %v2086
      %v2145 = vpack.c.b16 %v2091, %v2089
      %v2146 = vpack.c.b16 %v2092, %v2090
      %v2147 = vpack.c.b16 %v2095, %v2093
      %v2148 = vpack.c.b16 %v2096, %v2094
      %v2149 = vpack.c.b16 %v2099, %v2097
      %v2150 = vpack.c.b16 %v2100, %v2098
      %v2151 = vpack.c.b16 %v2103, %v2101
      %v2152 = vpack.c.b16 %v2104, %v2102
      %v2153 = vpack.c.b16 %v2107, %v2105
      %v2154 = vpack.c.b16 %v2108, %v2106
      %v2155 = vpack.c.b16 %v2111, %v2109
      %v2156 = vpack.c.b16 %v2112, %v2110
      %v2157 = vpack.c.b16 %v2115, %v2113
      %v2158 = vpack.c.b16 %v2116, %v2114
      %v2159 = vpack.c.b16 %v2119, %v2117
      %v2160 = vpack.c.b16 %v2120, %v2118
      %v2161 = vpack.c.b16 %v2123, %v2121
      %v2162 = vpack.c.b16 %v2124, %v2122
      %v2163 = vpack.c.b16 %v2127, %v2125
      %v2164 = vpack.c.b16 %v2128, %v2126
      %v2165 = vpack.c.b16 %v2131, %v2129
      %v2166 = vpack.c.b16 %v2132, %v2130
      %v2167 = vpack.c.b16 %v2135, %v2133
      %v2168 = vpack.c.b16 %v2136, %v2134
      %2201 = vmatprep.subr.bf16.mxu0 %v2138
      %2202 = vmatpush1.bf16.msra.mxu0 %v2137
      %2203 = vmatprep.subr.bf16.mxu0 %v2140
      %2204 = vmatpush1.bf16.msra.mxu0 %v2139
      %2205 = vmatprep.subr.bf16.mxu0 %v2142
      %2206 = vmatpush1.bf16.msra.mxu0 %v2141
      %2207 = vmatprep.subr.bf16.mxu0 %v2144
      %2208 = vmatpush1.bf16.msra.mxu0 %v2143
      %2209 = vmatprep.subr.bf16.mxu0 %v2146
      %2210 = vmatpush1.bf16.msra.mxu0 %v2145
      %2211 = vmatprep.subr.bf16.mxu0 %v2148
      %2212 = vmatpush1.bf16.msra.mxu0 %v2147
      %2213 = vmatprep.subr.bf16.mxu0 %v2150
      %2214 = vmatpush1.bf16.msra.mxu0 %v2149
      %2215 = vmatprep.subr.bf16.mxu0 %v2152
      %2216 = vmatpush1.bf16.msra.mxu0 %v2151
      %2217 = vmatprep.subr.bf16.mxu0 %v2154
      %2218 = vmatpush1.bf16.msra.mxu0 %v2153
      %2219 = vmatprep.subr.bf16.mxu0 %v2156
      %2220 = vmatpush1.bf16.msra.mxu0 %v2155
      %2221 = vmatprep.subr.bf16.mxu0 %v2158
      %2222 = vmatpush1.bf16.msra.mxu0 %v2157
      %2223 = vmatprep.subr.bf16.mxu0 %v2160
      %2224 = vmatpush1.bf16.msra.mxu0 %v2159
      %2225 = vmatprep.subr.bf16.mxu0 %v2162
      %2226 = vmatpush1.bf16.msra.mxu0 %v2161
      %2227 = vmatprep.subr.bf16.mxu0 %v2164
      %2228 = vmatpush1.bf16.msra.mxu0 %v2163
      %2229 = vmatprep.subr.bf16.mxu0 %v2166
      %2230 = vmatpush1.bf16.msra.mxu0 %v2165
      %2231 = vmatprep.subr.bf16.mxu0 %v2168
      %2232 = vmatpush1.bf16.msra.mxu0 %v2167
      %2233 = vmatprep.mubr.bf16.mxu0 %v2008
      %2234 = vmatmul.mubr.bf16.gmra.mrb[0].mxu0 %v2007
      %v2235 = vpop.f32.mrb[0].mxu0
      %v2236 = vadd.f32 0.0, %v2235
      %v2237 = vpop.f32.mrb[0].mxu0
      %v2238 = vadd.f32 0.0, %v2237
      %v2239 = vpop.f32.mrb[0].mxu0
      %v2240 = vadd.f32 0.0, %v2239
      %v2241 = vpop.f32.mrb[0].mxu0
      %v2242 = vadd.f32 0.0, %v2241
      %2243 = vdwg.mxu0
      %v2244 = vadd.f32 %v1999, %v2236
      %v2245 = vadd.f32 %v2001, %v2238
      %v2246 = vadd.f32 %v2003, %v2240
      %v2247 = vadd.f32 %v2005, %v2242
      %v2248 = vld [vmem:[%s12] sm:$0x3]
      %v2250 = vlaneseq
      %v2251 = vshrl.u32 %v2250, 7
      %v2252 = vsub.s32 0, %v2251
      %v2253 = vrot.slane %v2248, %v2252
      %v2254 = vlaneseq
      %v2255 = vshrl.u32 %v2254, 7
      %v2256 = vsub.s32 1, %v2255
      %v2257 = vrot.slane %v2248, %v2256
      %v2260 = vadd.f32 %v2244, %v2253
      %v2261 = vadd.f32 %v2245, %v2257
      %v2262 = vadd.f32 %v2246, %v2253
      %v2263 = vadd.f32 %v2247, %v2257
      %v2264 = vpack.c.bf16 %v2262, %v2260
      %v2265 = vpack.c.bf16 %v2263, %v2261
      %v2268 = vunpack.c.l.b16 %v2264
      %v2269 = vunpack.c.l.b16 %v2265
      %v2270 = vunpack.c.h.b16 %v2264
      %v2271 = vunpack.c.h.b16 %v2265
      %v2272 = vpack.c.b16 %v2269, %v2268
      %v2273 = vpack.c.b16 %v2271, %v2270
      %2276 = vst [vmem:[%s578] sm:$0xff] %v2272
      %2277 = vst [vmem:[%s578 + $0x8] sm:$0xff] %v2273
      %v2278 = vadd.f32 %v2260, %v2262
      %v2279 = vrot.slane %v2278, 4
      %v2280 = vadd.f32 %v2278, %v2279
      %v2281 = vrot.slane %v2280, 2
      %v2282 = vadd.f32 %v2280, %v2281
      %v2283 = vrot.slane %v2282, 1
      %v2284 = vadd.f32 %v2282, %v2283
      %v2285 = vadd.f32 %v2261, %v2263
      %v2286 = vrot.slane %v2285, 4
      %v2287 = vadd.f32 %v2285, %v2286
      %v2288 = vrot.slane %v2287, 2
      %v2289 = vadd.f32 %v2287, %v2288
      %v2290 = vrot.slane %v2289, 1
      %v2291 = vadd.f32 %v2289, %v2290
      %v2292 = vmul.f32 %v2260, %v2260
      %v2293 = vmul.f32 %v2261, %v2261
      %v2294 = vmul.f32 %v2262, %v2262
      %v2295 = vmul.f32 %v2263, %v2263
      %v2296 = vadd.f32 %v2292, %v2294
      %v2297 = vrot.slane %v2296, 4
      %v2298 = vadd.f32 %v2296, %v2297
      %v2299 = vrot.slane %v2298, 2
      %v2300 = vadd.f32 %v2298, %v2299
      %v2301 = vrot.slane %v2300, 1
      %v2302 = vadd.f32 %v2300, %v2301
      %v2303 = vadd.f32 %v2293, %v2295
      %v2304 = vrot.slane %v2303, 4
      %v2305 = vadd.f32 %v2303, %v2304
      %v2306 = vrot.slane %v2305, 2
      %v2307 = vadd.f32 %v2305, %v2306
      %v2308 = vrot.slane %v2307, 1
      %v2309 = vadd.f32 %v2307, %v2308
      %vm2310 = vcmask 1040384
      %v2311 = vsel %vm2310, %v2284, %v2302
      %v2312 = vsel %vm2310, %v2291, %v2309
      %v2315 = vcombine.low %v2311, %v2312
      %v2317 = vunpack.c.l.s4 1983009808
      %v2318 = vunpack.c.0.s8 %v2317
      %v2319 = vlaneseq
      %v2320 = vshrl.u32 %v2319, 7
      %v2321 = vsub.s32 %v2318, %v2320
      %v2322 = vrot.slane %v2315, %v2321
      %2324 = vst [vmem:[%s584] sm:$0xf] %v2322
      %s2325 = smul.u32 2, %s26
      %p2326 = scmp.lt.s32.totalorder %s2325, 7
      %s2327 = scalar_select %p2326, %s2325, 7
      %s2328 = smul.addr %s2327, 2
      %s2329 = smul.addr %s2328, 4
      %s2330 = scalar_lea.vmem %s13, %s2329
      %p2331 = scmp.lt.s32.totalorder %s26, 3
      %s2332 = scalar_select %p2331, %s26, 3
      %s2333 = smul.addr %s2332, 2
      %s2334 = smul.addr %s2333, 2
      %s2335 = scalar_lea.vmem %s14, %s2334
      // Predicated region
      $region73: #{upsampler_forward.3} parent=71 // pred_check
        %p2336 = pneg %p348
      $region74: #{upsampler_forward.3} parent=71 // pred_check_branch
        %2338 = sbr.rel (%p2336) target = $region76
      $region75: #{upsampler_forward.3} parent=71 // pred_region
        %s2339 = smul.u32 2, %s26
      $region76: #{upsampler_forward.3} parent=71 // pred_fallthru
        _
      // Predicated region
      $region77: #{upsampler_forward.3} parent=71 // pred_check
        %p2340 = pneg %p374
      $region78: #{upsampler_forward.3} parent=71 // pred_check_branch
        %2342 = sbr.rel (%p2340) target = $region80
      $region79: #{upsampler_forward.3} parent=71 // pred_region
        _
      $region80: #{upsampler_forward.3} parent=71 // pred_fallthru
        _
    $region72: #{upsampler_forward.3} parent=5 // pred_fallthru
      _
    %p2343 = scmp.le.s32.totalorder 2, %s21
    // Predicated region
    $region81: #{upsampler_forward.3} parent=5 // pred_check
      %p2344 = pneg %p2343
    $region82: #{upsampler_forward.3} parent=5 // pred_check_branch
      %2346 = sbr.rel (%p2344) target = $region84
    $region83: #{upsampler_forward.3} parent=5 // pred_region
      %s2347 = ssub.s32 %s21, 2
      // Predicated region
      $region85: #{upsampler_forward.3} parent=83 // pred_check
        %p2348 = pneg %p354
      $region86: #{upsampler_forward.3} parent=83 // pred_check_branch
        %2350 = sbr.rel (%p2348) target = $region88
      $region87: #{upsampler_forward.3} parent=83 // pred_region
        %s2351 = smul.u32 2, %s27
        %p2352 = scmp.lt.s32.totalorder %s2351, 7
        %s2353 = scalar_select %p2352, %s2351, 7
        %s2354 = smul.addr %s2353, 2
        %s2355 = smul.addr %s2354, 4
        %s2356 = scalar_lea.vmem %s13, %s2355
      $region88: #{upsampler_forward.3} parent=83 // pred_fallthru
        _
      // Predicated region
      $region89: #{upsampler_forward.3} parent=83 // pred_check
        %p2357 = pneg %p380
      $region90: #{upsampler_forward.3} parent=83 // pred_check_branch
        %2359 = sbr.rel (%p2357) target = $region92
      $region91: #{upsampler_forward.3} parent=83 // pred_region
        %p2360 = scmp.lt.s32.totalorder %s27, 3
        %s2361 = scalar_select %p2360, %s27, 3
        %s2362 = smul.addr %s2361, 2
        %s2363 = smul.addr %s2362, 2
        %s2364 = scalar_lea.vmem %s14, %s2363
      $region92: #{upsampler_forward.3} parent=83 // pred_fallthru
        _
    $region84: #{upsampler_forward.3} parent=5 // pred_fallthru
      _
  $region6: #{upsampler_forward.3} parent=0 // loop_footer
    %s25 = sadd.s32 1, %s21
  $region7: #{upsampler_forward.3} parent=0 // loop_footer_branch
    %20 = sbr.rel target = $region3
  $region8: #{upsampler_forward.3} parent=0 // loop_exit
    _

</llo_original>
